<compile_context>
chip_gen: v7x
topology: tpu7x:2x2x1
jax: 0.10.0
libtpu: 0.0.40
codegen_flags: <defaults>
</compile_context>

<pallas_src>
import jax
import jax.numpy as jnp
from jax.experimental import pallas as pl
from jax.experimental.pallas import tpu as pltpu


def _round_up(x, m):
    return (x + m - 1) // m * m


# ---------------------------------------------------------------------------
# Pallas kernels
# ---------------------------------------------------------------------------
def conv_relu_pool_kernel(p_ref, w_ref, b_ref, o_ref):
    """Fused conv-as-matmul + bias + ReLU + 2x2 average pool.

    p_ref: (4, TM, K) bf16 -- axis 0 is the 2x2 pool window, rows are pooled positions
    w_ref: (K, 128)  bf16  -- im2col weight, out-channels zero padded to 128 lanes
    b_ref: (1, 128)  f32
    o_ref: (TM, 128) bf16  -- pooled, ReLU'd conv output (lane-dense)
    """
    tm = o_ref.shape[0]
    p = p_ref[...]                                    # (4, TM, K) bf16
    p = p.reshape(4 * tm, p.shape[2])                 # merge pool window into rows (TM % 16 == 0)
    y = jnp.dot(p, w_ref[...], preferred_element_type=jnp.float32) + b_ref[...]
    y = jnp.maximum(y, 0.0)                           # ReLU before pooling
    pooled = (y[0 * tm:1 * tm] + y[1 * tm:2 * tm]
              + y[2 * tm:3 * tm] + y[3 * tm:4 * tm]) * 0.25
    o_ref[...] = pooled.astype(o_ref.dtype)


def mlp_kernel(x_ref, w1_ref, b1_ref, w2_ref, b2_ref, w3_ref, b3_ref, o_ref):
    """Fused fc1+ReLU -> (dropout identity) -> fc2+ReLU -> fc3.

    bf16 operands, f32 accumulation; intermediates stay in VMEM/vregs.
    """
    h = jnp.dot(x_ref[...], w1_ref[...], preferred_element_type=jnp.float32) + b1_ref[...]
    h = jnp.maximum(h, 0.0).astype(jnp.bfloat16)
    # TODO(synk): nn.Dropout(p=0.25) is identity at inference; training-mode forward
    # would need a stochastic mask (pltpu.prng_seed / prng_random_bits) + 1/0.75 scale.
    h = jnp.dot(h, w2_ref[...], preferred_element_type=jnp.float32) + b2_ref[...]
    h = jnp.maximum(h, 0.0).astype(jnp.bfloat16)
    o = jnp.dot(h, w3_ref[...], preferred_element_type=jnp.float32) + b3_ref[...]
    o_ref[...] = o.astype(o_ref.dtype)


# ---------------------------------------------------------------------------
# Wrappers around pallas_call (row-tiled, parallel grid, lane-dense outputs)
# ---------------------------------------------------------------------------
_COMPILER_PARAMS = pltpu.CompilerParams(
    dimension_semantics=("parallel",),
    # 32 MiB scoped VMEM is ample for these block sizes and safe on every
    # generation (v7x physical VMEM is only 64 MiB); re-derive before enlarging tiles.
    vmem_limit_bytes=32 * 1024 * 1024,
)


def _choose_tm(M, tm_max):
    """Row-tile size: multiple of 16 (bf16 sublane packing); prefer an exact divisor
    of M (no M-padding copy) with grid >= 2 so both v7x TensorCores get work."""
    best = 0
    t = 16
    limit = min(tm_max, M // 2)
    while t <= limit:
        if M % t == 0:
            best = t
        t += 16
    if best:
        return best
    return max(16, min(tm_max, _round_up(pl.cdiv(M, 2), 16)))


def conv_relu_pool(patches, w, b, tm_max=1024):
    """patches: (4, M, K) bf16 window-grouped im2col rows; w: (K, 128) bf16; b: (1, 128) f32."""
    _, M, K = patches.shape
    N = w.shape[1]
    TM = _choose_tm(M, tm_max)
    n_blocks = pl.cdiv(M, TM)
    Mpad = n_blocks * TM
    if Mpad > M:
        # Tail-only padding (< TM rows); zero whenever TM divides M (preferred by _choose_tm).
        patches = jnp.pad(patches, ((0, 0), (0, Mpad - M), (0, 0)))

    out = pl.pallas_call(
        conv_relu_pool_kernel,
        out_shape=jax.ShapeDtypeStruct((Mpad, N), jnp.bfloat16),
        grid=(n_blocks,),
        in_specs=[
            # K kept at its true size (75/150): block dim == full array dim is legal,
            # Mosaic lane-pads in VMEM for free (no XLA pad pass over the patches).
            pl.BlockSpec((4, TM, K), lambda i: (0, i, 0)),
            pl.BlockSpec((K, N), lambda i: (0, 0)),
            pl.BlockSpec((1, N), lambda i: (0, 0)),
        ],
        out_specs=pl.BlockSpec((TM, N), lambda i: (i, 0)),
        compiler_params=_COMPILER_PARAMS,
    )(patches, w, b)
    return out[:M]


def mlp(x, w1, b1, w2, b2, w3, b3, tm_max=512):
    """x: (M, 400) bf16; weights bf16 (lane-dense), biases f32."""
    M, K = x.shape
    N = w3.shape[1]
    TM = _choose_tm(M, tm_max)
    n_blocks = pl.cdiv(M, TM)
    Mpad = n_blocks * TM
    if Mpad > M:
        x = jnp.pad(x, ((0, Mpad - M), (0, 0)))

    out = pl.pallas_call(
        mlp_kernel,
        out_shape=jax.ShapeDtypeStruct((Mpad, N), jnp.float32),
        grid=(n_blocks,),
        in_specs=[
            pl.BlockSpec((TM, K), lambda i: (i, 0)),      # K=400 true size, no pad
            pl.BlockSpec(w1.shape, lambda i: (0, 0)),
            pl.BlockSpec(b1.shape, lambda i: (0, 0)),
            pl.BlockSpec(w2.shape, lambda i: (0, 0)),
            pl.BlockSpec(b2.shape, lambda i: (0, 0)),
            pl.BlockSpec(w3.shape, lambda i: (0, 0)),
            pl.BlockSpec(b3.shape, lambda i: (0, 0)),
        ],
        out_specs=pl.BlockSpec((TM, N), lambda i: (i, 0)),
        compiler_params=_COMPILER_PARAMS,
    )(x, w1, b1, w2, b2, w3, b3)
    return out[:M]


# ---------------------------------------------------------------------------
# XLA glue: pool-window-grouped im2col (patch extraction only, in bf16)
# ---------------------------------------------------------------------------
def im2col_pooled(x, k):
    """x: (B, H, W, C) NHWC -> (4, B*ph*pw, k*k*C).

    Rows are pooled output positions (b, py, px); leading axis of 4 is the 2x2
    pooling window (wy, wx); feature order per row is (dy, dx, c), matching the
    (kh, kw, in, out) weight reshape.
    """
    B, H, W, C = x.shape
    oh, ow = H - k + 1, W - k + 1
    ph, pw = oh // 2, ow // 2
    cols = [x[:, dy:dy + oh, dx:dx + ow, :] for dy in range(k) for dx in range(k)]
    p = jnp.stack(cols, axis=3)                       # (B, oh, ow, k*k, C)
    p = p.reshape(B, ph, 2, pw, 2, k * k * C)         # (b, py, wy, px, wx, K)
    p = jnp.transpose(p, (2, 4, 0, 1, 3, 5))          # (wy, wx, b, py, px, K)
    return p.reshape(4, B * ph * pw, k * k * C), ph, pw


# ---------------------------------------------------------------------------
# Parameter init (matches the module's explicit kaiming_uniform_ relu init) and
# one-time weight layout prep (reshape/transpose/pad/bf16 cast hoisted out of forward)
# ---------------------------------------------------------------------------
def kaiming_uniform(key, shape, fan_in):
    bound = (6.0 / fan_in) ** 0.5
    return jax.random.uniform(key, shape, jnp.float32, -bound, bound)


def uniform_bias(key, shape, fan_in):
    bound = 1.0 / (fan_in ** 0.5)
    return jax.random.uniform(key, shape, jnp.float32, -bound, bound)


def init_params(key):
    ks = jax.random.split(key, 10)
    p = {}
    p["conv1_w"] = kaiming_uniform(ks[0], (6, 3, 5, 5), 3 * 25)      # (out,in,kh,kw)
    p["conv1_b"] = uniform_bias(ks[1], (6,), 3 * 25)
    p["conv2_w"] = kaiming_uniform(ks[2], (16, 6, 5, 5), 6 * 25)
    p["conv2_b"] = uniform_bias(ks[3], (16,), 6 * 25)
    p["fc1_w"] = kaiming_uniform(ks[4], (120, 400), 400)             # (out,in)
    p["fc1_b"] = uniform_bias(ks[5], (120,), 400)
    p["fc2_w"] = kaiming_uniform(ks[6], (84, 120), 120)
    p["fc2_b"] = uniform_bias(ks[7], (84,), 120)
    p["fc3_w"] = kaiming_uniform(ks[8], (10, 84), 84)
    p["fc3_b"] = uniform_bias(ks[9], (10,), 84)
    return p


def prepare_params(p):
    """One-time layout prep: matmul layout, lane-pad to 128, weights -> bf16, biases f32."""
    def padw(a, rows, cols):
        r, c = a.shape
        return jnp.pad(a, ((0, rows - r), (0, cols - c))).astype(jnp.bfloat16)

    def padb(a, cols):
        return jnp.pad(a.reshape(1, -1), ((0, 0), (0, cols - a.shape[0])))   # stays f32

    prep = {}
    # conv weights (out,in,kh,kw) -> ((kh,kw,in), out): true K rows, 128 lanes.
    c1 = jnp.transpose(p["conv1_w"], (2, 3, 1, 0)).reshape(75, 6)
    prep["c1w"] = padw(c1, 75, 128)
    prep["c1b"] = padb(p["conv1_b"], 128)
    c2 = jnp.transpose(p["conv2_w"], (2, 3, 1, 0)).reshape(150, 16)
    prep["c2w"] = padw(c2, 150, 128)
    prep["c2b"] = padb(p["conv2_b"], 128)
    # fc1: fold the torch.flatten(NCHW) permutation into the row order so the
    # activation can stay in NHWC (py, px, c) flatten order.
    f1 = jnp.transpose(p["fc1_w"].reshape(120, 16, 5, 5), (2, 3, 1, 0)).reshape(400, 120)
    prep["f1w"] = padw(f1, 400, 128)
    prep["f1b"] = padb(p["fc1_b"], 128)
    prep["f2w"] = padw(p["fc2_w"].T, 128, 128)
    prep["f2b"] = padb(p["fc2_b"], 128)
    prep["f3w"] = padw(p["fc3_w"].T, 128, 128)
    prep["f3b"] = padb(p["fc3_b"], 128)
    return prep


# ---------------------------------------------------------------------------
# Forward pass (matches LeNet5Variant1.forward, eval mode)
# ---------------------------------------------------------------------------
def forward_nhwc(prep, x):
    """x: (B, 32, 32, 3) bf16 NHWC."""
    B = x.shape[0]

    # conv1 (3->6, k5) + ReLU + AvgPool2d(2,2): one fused Pallas call
    patches, ph, pw = im2col_pooled(x, 5)                            # (4, B*14*14, 75) bf16
    y = conv_relu_pool(patches, prep["c1w"], prep["c1b"])            # (B*14*14, 128) bf16
    y = y[:, :6].reshape(B, ph, pw, 6)

    # conv2 (6->16, k5) + ReLU + AvgPool2d(2,2): one fused Pallas call
    patches, ph, pw = im2col_pooled(y, 5)                            # (4, B*5*5, 150) bf16
    y = conv_relu_pool(patches, prep["c2w"], prep["c2b"])            # (B*5*5, 128) bf16
    y = y[:, :16].reshape(B, ph * pw * 16)                           # NHWC flatten (perm folded into fc1)

    # fc1+ReLU -> dropout(identity) -> fc2+ReLU -> fc3: one fused Pallas call
    logits = mlp(y, prep["f1w"], prep["f1b"], prep["f2w"], prep["f2b"],
                 prep["f3w"], prep["f3b"])                           # (B, 128) f32
    return logits[:, :10]


def forward(prep, x_nchw):
    # Single fused transpose+cast; callers that already hold NHWC/bf16 data can
    # use forward_nhwc directly and skip even this op.
    x = jnp.transpose(x_nchw, (0, 2, 3, 1)).astype(jnp.bfloat16)
    return forward_nhwc(prep, x)


if __name__ == "__main__":
    key = jax.random.PRNGKey(0)
    k_params, k_x = jax.random.split(key)
    params = init_params(k_params)
    prep = prepare_params(params)        # weight layout prep hoisted out of forward
    # CIFAR-10-shaped input (32x32 is required by the 16*5*5=400 flatten in the module).
    x = jax.random.normal(k_x, (2, 3, 32, 32), jnp.float32)

    out = jax.jit(forward)(prep, x)
    jax.block_until_ready(out)
    assert out.shape == (2, 10), out.shape
    assert bool(jnp.all(jnp.isfinite(out)))
    print("KERNEL_OK")
</pallas_src>

<mosaic_0001>
module attributes {stable_mosaic.version = 11 : i64} {
  func.func @conv_relu_pool_kernel(%arg0: i32, %arg1: memref<4x208x75xbf16, #tpu.memory_space<vmem>>, %arg2: memref<75x128xbf16, #tpu.memory_space<vmem>>, %arg3: memref<1x128xf32, #tpu.memory_space<vmem>>, %arg4: memref<208x128xbf16, #tpu.memory_space<vmem>>) attributes {dimension_semantics = [#tpu.dimension_semantics<parallel>], iteration_bounds = array<i64: 2>, scalar_prefetch = 0 : i64, scratch_operands = 0 : i64, tpu.core_type = #tpu.core_type<tc>, window_params = [{transform_indices = @transform_0, window_bounds = array<i64: 4, 208, 75>}, {pipeline_mode = #tpu.pipeline_mode<synchronous>, transform_indices = @transform_1, window_bounds = array<i64: 75, 128>}, {pipeline_mode = #tpu.pipeline_mode<synchronous>, transform_indices = @transform_2, window_bounds = array<i64: 1, 128>}, {transform_indices = @transform_3, window_bounds = array<i64: 208, 128>}]} {
    %c0 = arith.constant 0 : index
    %c0_0 = arith.constant 0 : index
    %c0_1 = arith.constant 0 : index
    %0 = vector.load %arg1[%c0, %c0_0, %c0_1] : memref<4x208x75xbf16, #tpu.memory_space<vmem>>, vector<4x208x75xbf16>
    %1 = vector.shape_cast %0 : vector<4x208x75xbf16> to vector<832x75xbf16>
    %c0_2 = arith.constant 0 : index
    %c0_3 = arith.constant 0 : index
    %2 = vector.load %arg2[%c0_2, %c0_3] : memref<75x128xbf16, #tpu.memory_space<vmem>>, vector<75x128xbf16>
    %cst = arith.constant dense<0.000000e+00> : vector<832x128xf32>
    %3 = tpu.matmul %1, %2, %cst {dimension_numbers = #tpu.dot_dimension_numbers<[1], [0], [0], [1], [0, 0, 1, 1], [], []>} : vector<832x75xbf16>, vector<75x128xbf16>, vector<832x128xf32> -> vector<832x128xf32>
    %c0_4 = arith.constant 0 : index
    %c0_5 = arith.constant 0 : index
    %4 = vector.load %arg3[%c0_4, %c0_5] : memref<1x128xf32, #tpu.memory_space<vmem>>, vector<1x128xf32>
    %5 = vector.broadcast %4 : vector<1x128xf32> to vector<832x128xf32>
    %6 = arith.addf %3, %5 : vector<832x128xf32>
    %cst_6 = arith.constant 0.000000e+00 : f32
    %7 = vector.broadcast %cst_6 : f32 to vector<832x128xf32>
    %8 = arith.maximumf %6, %7 : vector<832x128xf32>
    %9 = vector.extract_strided_slice %8 {offsets = [0, 0], sizes = [208, 128], strides = [1, 1]} : vector<832x128xf32> to vector<208x128xf32>
    %10 = vector.extract_strided_slice %8 {offsets = [208, 0], sizes = [208, 128], strides = [1, 1]} : vector<832x128xf32> to vector<208x128xf32>
    %11 = arith.addf %9, %10 : vector<208x128xf32>
    %12 = vector.extract_strided_slice %8 {offsets = [416, 0], sizes = [208, 128], strides = [1, 1]} : vector<832x128xf32> to vector<208x128xf32>
    %13 = arith.addf %11, %12 : vector<208x128xf32>
    %14 = vector.extract_strided_slice %8 {offsets = [624, 0], sizes = [208, 128], strides = [1, 1]} : vector<832x128xf32> to vector<208x128xf32>
    %15 = arith.addf %13, %14 : vector<208x128xf32>
    %cst_7 = arith.constant 2.500000e-01 : f32
    %16 = vector.broadcast %cst_7 : f32 to vector<208x128xf32>
    %17 = arith.mulf %15, %16 : vector<208x128xf32>
    %18 = arith.truncf %17 : vector<208x128xf32> to vector<208x128xbf16>
    %c0_8 = arith.constant 0 : index
    %c0_9 = arith.constant 0 : index
    %19 = vector.load %arg4[%c0_8, %c0_9] : memref<208x128xbf16, #tpu.memory_space<vmem>>, vector<208x128xbf16>
    tpu.vector_store %arg4[%c0_8, %c0_9], %18 {strides = array<i32>} : memref<208x128xbf16, #tpu.memory_space<vmem>>, vector<208x128xbf16>,
    return
  }
  func.func @transform_0(%arg0: i32) -> (i32, i32, i32) {
    %c0_i32 = arith.constant 0 : i32
    %c0_i32_0 = arith.constant 0 : i32
    %c0_i32_1 = arith.constant 0 : i32
    return %c0_i32, %arg0, %c0_i32_0 : i32, i32, i32
  }
  func.func @transform_1(%arg0: i32) -> (i32, i32) {
    %c0_i32 = arith.constant 0 : i32
    %c0_i32_0 = arith.constant 0 : i32
    %c0_i32_1 = arith.constant 0 : i32
    return %c0_i32, %c0_i32_0 : i32, i32
  }
  func.func @transform_2(%arg0: i32) -> (i32, i32) {
    %c0_i32 = arith.constant 0 : i32
    %c0_i32_0 = arith.constant 0 : i32
    %c0_i32_1 = arith.constant 0 : i32
    return %c0_i32, %c0_i32_0 : i32, i32
  }
  func.func @transform_3(%arg0: i32) -> (i32, i32) {
    %c0_i32 = arith.constant 0 : i32
    %c0_i32_0 = arith.constant 0 : i32
    return %arg0, %c0_i32 : i32, i32
  }
}

module attributes {stable_mosaic.version = 11 : i64} {
  func.func @conv_relu_pool_kernel(%arg0: i32, %arg1: memref<4x32x150xbf16, #tpu.memory_space<vmem>>, %arg2: memref<150x128xbf16, #tpu.memory_space<vmem>>, %arg3: memref<1x128xf32, #tpu.memory_space<vmem>>, %arg4: memref<32x128xbf16, #tpu.memory_space<vmem>>) attributes {dimension_semantics = [#tpu.dimension_semantics<parallel>], iteration_bounds = array<i64: 2>, scalar_prefetch = 0 : i64, scratch_operands = 0 : i64, tpu.core_type = #tpu.core_type<tc>, window_params = [{transform_indices = @transform_0, window_bounds = array<i64: 4, 32, 150>}, {pipeline_mode = #tpu.pipeline_mode<synchronous>, transform_indices = @transform_1, window_bounds = array<i64: 150, 128>}, {pipeline_mode = #tpu.pipeline_mode<synchronous>, transform_indices = @transform_2, window_bounds = array<i64: 1, 128>}, {transform_indices = @transform_3, window_bounds = array<i64: 32, 128>}]} {
    %c0 = arith.constant 0 : index
    %c0_0 = arith.constant 0 : index
    %c0_1 = arith.constant 0 : index
    %0 = vector.load %arg1[%c0, %c0_0, %c0_1] : memref<4x32x150xbf16, #tpu.memory_space<vmem>>, vector<4x32x150xbf16>
    %1 = vector.shape_cast %0 : vector<4x32x150xbf16> to vector<128x150xbf16>
    %c0_2 = arith.constant 0 : index
    %c0_3 = arith.constant 0 : index
    %2 = vector.load %arg2[%c0_2, %c0_3] : memref<150x128xbf16, #tpu.memory_space<vmem>>, vector<150x128xbf16>
    %cst = arith.constant dense<0.000000e+00> : vector<128x128xf32>
    %3 = tpu.matmul %1, %2, %cst {dimension_numbers = #tpu.dot_dimension_numbers<[1], [0], [0], [1], [0, 0, 1, 1], [], []>} : vector<128x150xbf16>, vector<150x128xbf16>, vector<128x128xf32> -> vector<128x128xf32>
    %c0_4 = arith.constant 0 : index
    %c0_5 = arith.constant 0 : index
    %4 = vector.load %arg3[%c0_4, %c0_5] : memref<1x128xf32, #tpu.memory_space<vmem>>, vector<1x128xf32>
    %5 = vector.broadcast %4 : vector<1x128xf32> to vector<128x128xf32>
    %6 = arith.addf %3, %5 : vector<128x128xf32>
    %cst_6 = arith.constant 0.000000e+00 : f32
    %7 = vector.broadcast %cst_6 : f32 to vector<128x128xf32>
    %8 = arith.maximumf %6, %7 : vector<128x128xf32>
    %9 = vector.extract_strided_slice %8 {offsets = [0, 0], sizes = [32, 128], strides = [1, 1]} : vector<128x128xf32> to vector<32x128xf32>
    %10 = vector.extract_strided_slice %8 {offsets = [32, 0], sizes = [32, 128], strides = [1, 1]} : vector<128x128xf32> to vector<32x128xf32>
    %11 = arith.addf %9, %10 : vector<32x128xf32>
    %12 = vector.extract_strided_slice %8 {offsets = [64, 0], sizes = [32, 128], strides = [1, 1]} : vector<128x128xf32> to vector<32x128xf32>
    %13 = arith.addf %11, %12 : vector<32x128xf32>
    %14 = vector.extract_strided_slice %8 {offsets = [96, 0], sizes = [32, 128], strides = [1, 1]} : vector<128x128xf32> to vector<32x128xf32>
    %15 = arith.addf %13, %14 : vector<32x128xf32>
    %cst_7 = arith.constant 2.500000e-01 : f32
    %16 = vector.broadcast %cst_7 : f32 to vector<32x128xf32>
    %17 = arith.mulf %15, %16 : vector<32x128xf32>
    %18 = arith.truncf %17 : vector<32x128xf32> to vector<32x128xbf16>
    %c0_8 = arith.constant 0 : index
    %c0_9 = arith.constant 0 : index
    %19 = vector.load %arg4[%c0_8, %c0_9] : memref<32x128xbf16, #tpu.memory_space<vmem>>, vector<32x128xbf16>
    tpu.vector_store %arg4[%c0_8, %c0_9], %18 {strides = array<i32>} : memref<32x128xbf16, #tpu.memory_space<vmem>>, vector<32x128xbf16>,
    return
  }
  func.func @transform_0(%arg0: i32) -> (i32, i32, i32) {
    %c0_i32 = arith.constant 0 : i32
    %c0_i32_0 = arith.constant 0 : i32
    %c0_i32_1 = arith.constant 0 : i32
    return %c0_i32, %arg0, %c0_i32_0 : i32, i32, i32
  }
  func.func @transform_1(%arg0: i32) -> (i32, i32) {
    %c0_i32 = arith.constant 0 : i32
    %c0_i32_0 = arith.constant 0 : i32
    %c0_i32_1 = arith.constant 0 : i32
    return %c0_i32, %c0_i32_0 : i32, i32
  }
  func.func @transform_2(%arg0: i32) -> (i32, i32) {
    %c0_i32 = arith.constant 0 : i32
    %c0_i32_0 = arith.constant 0 : i32
    %c0_i32_1 = arith.constant 0 : i32
    return %c0_i32, %c0_i32_0 : i32, i32
  }
  func.func @transform_3(%arg0: i32) -> (i32, i32) {
    %c0_i32 = arith.constant 0 : i32
    %c0_i32_0 = arith.constant 0 : i32
    return %arg0, %c0_i32 : i32, i32
  }
}

module attributes {stable_mosaic.version = 11 : i64} {
  func.func @mlp_kernel(%arg0: i32, %arg1: memref<16x400xbf16, #tpu.memory_space<vmem>>, %arg2: memref<400x128xbf16, #tpu.memory_space<vmem>>, %arg3: memref<1x128xf32, #tpu.memory_space<vmem>>, %arg4: memref<128x128xbf16, #tpu.memory_space<vmem>>, %arg5: memref<1x128xf32, #tpu.memory_space<vmem>>, %arg6: memref<128x128xbf16, #tpu.memory_space<vmem>>, %arg7: memref<1x128xf32, #tpu.memory_space<vmem>>, %arg8: memref<16x128xf32, #tpu.memory_space<vmem>>) attributes {dimension_semantics = [#tpu.dimension_semantics<parallel>], iteration_bounds = array<i64: 1>, scalar_prefetch = 0 : i64, scratch_operands = 0 : i64, tpu.core_type = #tpu.core_type<tc>, window_params = [{transform_indices = @transform_0, window_bounds = array<i64: 16, 400>}, {pipeline_mode = #tpu.pipeline_mode<synchronous>, transform_indices = @transform_1, window_bounds = array<i64: 400, 128>}, {pipeline_mode = #tpu.pipeline_mode<synchronous>, transform_indices = @transform_2, window_bounds = array<i64: 1, 128>}, {pipeline_mode = #tpu.pipeline_mode<synchronous>, transform_indices = @transform_3, window_bounds = array<i64: 128, 128>}, {pipeline_mode = #tpu.pipeline_mode<synchronous>, transform_indices = @transform_4, window_bounds = array<i64: 1, 128>}, {pipeline_mode = #tpu.pipeline_mode<synchronous>, transform_indices = @transform_5, window_bounds = array<i64: 128, 128>}, {pipeline_mode = #tpu.pipeline_mode<synchronous>, transform_indices = @transform_6, window_bounds = array<i64: 1, 128>}, {transform_indices = @transform_7, window_bounds = array<i64: 16, 128>}]} {
    %c0 = arith.constant 0 : index
    %c0_0 = arith.constant 0 : index
    %0 = vector.load %arg1[%c0, %c0_0] : memref<16x400xbf16, #tpu.memory_space<vmem>>, vector<16x400xbf16>
    %c0_1 = arith.constant 0 : index
    %c0_2 = arith.constant 0 : index
    %1 = vector.load %arg2[%c0_1, %c0_2] : memref<400x128xbf16, #tpu.memory_space<vmem>>, vector<400x128xbf16>
    %cst = arith.constant dense<0.000000e+00> : vector<16x128xf32>
    %2 = tpu.matmul %0, %1, %cst {dimension_numbers = #tpu.dot_dimension_numbers<[1], [0], [0], [1], [0, 0, 1, 1], [], []>} : vector<16x400xbf16>, vector<400x128xbf16>, vector<16x128xf32> -> vector<16x128xf32>
    %c0_3 = arith.constant 0 : index
    %c0_4 = arith.constant 0 : index
    %3 = vector.load %arg3[%c0_3, %c0_4] : memref<1x128xf32, #tpu.memory_space<vmem>>, vector<1x128xf32>
    %4 = vector.broadcast %3 : vector<1x128xf32> to vector<16x128xf32>
    %5 = arith.addf %2, %4 : vector<16x128xf32>
    %cst_5 = arith.constant 0.000000e+00 : f32
    %6 = vector.broadcast %cst_5 : f32 to vector<16x128xf32>
    %7 = arith.maximumf %5, %6 : vector<16x128xf32>
    %8 = arith.truncf %7 : vector<16x128xf32> to vector<16x128xbf16>
    %c0_6 = arith.constant 0 : index
    %c0_7 = arith.constant 0 : index
    %9 = vector.load %arg4[%c0_6, %c0_7] : memref<128x128xbf16, #tpu.memory_space<vmem>>, vector<128x128xbf16>
    %cst_8 = arith.constant dense<0.000000e+00> : vector<16x128xf32>
    %10 = tpu.matmul %8, %9, %cst_8 {dimension_numbers = #tpu.dot_dimension_numbers<[1], [0], [0], [1], [0, 0, 1, 1], [], []>} : vector<16x128xbf16>, vector<128x128xbf16>, vector<16x128xf32> -> vector<16x128xf32>
    %c0_9 = arith.constant 0 : index
    %c0_10 = arith.constant 0 : index
    %11 = vector.load %arg5[%c0_9, %c0_10] : memref<1x128xf32, #tpu.memory_space<vmem>>, vector<1x128xf32>
    %12 = vector.broadcast %11 : vector<1x128xf32> to vector<16x128xf32>
    %13 = arith.addf %10, %12 : vector<16x128xf32>
    %cst_11 = arith.constant 0.000000e+00 : f32
    %14 = vector.broadcast %cst_11 : f32 to vector<16x128xf32>
    %15 = arith.maximumf %13, %14 : vector<16x128xf32>
    %16 = arith.truncf %15 : vector<16x128xf32> to vector<16x128xbf16>
    %c0_12 = arith.constant 0 : index
    %c0_13 = arith.constant 0 : index
    %17 = vector.load %arg6[%c0_12, %c0_13] : memref<128x128xbf16, #tpu.memory_space<vmem>>, vector<128x128xbf16>
    %cst_14 = arith.constant dense<0.000000e+00> : vector<16x128xf32>
    %18 = tpu.matmul %16, %17, %cst_14 {dimension_numbers = #tpu.dot_dimension_numbers<[1], [0], [0], [1], [0, 0, 1, 1], [], []>} : vector<16x128xbf16>, vector<128x128xbf16>, vector<16x128xf32> -> vector<16x128xf32>
    %c0_15 = arith.constant 0 : index
    %c0_16 = arith.constant 0 : index
    %19 = vector.load %arg7[%c0_15, %c0_16] : memref<1x128xf32, #tpu.memory_space<vmem>>, vector<1x128xf32>
    %20 = vector.broadcast %19 : vector<1x128xf32> to vector<16x128xf32>
    %21 = arith.addf %18, %20 : vector<16x128xf32>
    %c0_17 = arith.constant 0 : index
    %c0_18 = arith.constant 0 : index
    %22 = vector.load %arg8[%c0_17, %c0_18] : memref<16x128xf32, #tpu.memory_space<vmem>>, vector<16x128xf32>
    tpu.vector_store %arg8[%c0_17, %c0_18], %21 {strides = array<i32>} : memref<16x128xf32, #tpu.memory_space<vmem>>, vector<16x128xf32>,
    return
  }
  func.func @transform_0(%arg0: i32) -> (i32, i32) {
    %c0_i32 = arith.constant 0 : i32
    %c0_i32_0 = arith.constant 0 : i32
    return %arg0, %c0_i32 : i32, i32
  }
  func.func @transform_1(%arg0: i32) -> (i32, i32) {
    %c0_i32 = arith.constant 0 : i32
    %c0_i32_0 = arith.constant 0 : i32
    %c0_i32_1 = arith.constant 0 : i32
    return %c0_i32, %c0_i32_0 : i32, i32
  }
  func.func @transform_2(%arg0: i32) -> (i32, i32) {
    %c0_i32 = arith.constant 0 : i32
    %c0_i32_0 = arith.constant 0 : i32
    %c0_i32_1 = arith.constant 0 : i32
    return %c0_i32, %c0_i32_0 : i32, i32
  }
  func.func @transform_3(%arg0: i32) -> (i32, i32) {
    %c0_i32 = arith.constant 0 : i32
    %c0_i32_0 = arith.constant 0 : i32
    %c0_i32_1 = arith.constant 0 : i32
    return %c0_i32, %c0_i32_0 : i32, i32
  }
  func.func @transform_4(%arg0: i32) -> (i32, i32) {
    %c0_i32 = arith.constant 0 : i32
    %c0_i32_0 = arith.constant 0 : i32
    %c0_i32_1 = arith.constant 0 : i32
    return %c0_i32, %c0_i32_0 : i32, i32
  }
  func.func @transform_5(%arg0: i32) -> (i32, i32) {
    %c0_i32 = arith.constant 0 : i32
    %c0_i32_0 = arith.constant 0 : i32
    %c0_i32_1 = arith.constant 0 : i32
    return %c0_i32, %c0_i32_0 : i32, i32
  }
  func.func @transform_6(%arg0: i32) -> (i32, i32) {
    %c0_i32 = arith.constant 0 : i32
    %c0_i32_0 = arith.constant 0 : i32
    %c0_i32_1 = arith.constant 0 : i32
    return %c0_i32, %c0_i32_0 : i32, i32
  }
  func.func @transform_7(%arg0: i32) -> (i32, i32) {
    %c0_i32 = arith.constant 0 : i32
    %c0_i32_0 = arith.constant 0 : i32
    return %arg0, %c0_i32 : i32, i32
  }
}

</mosaic_0001>

<llo_original>
// kernel: forward.3
$region0: #{forward.3}
  #allocation0 [shape = 'u32[]', space=smem, size = 0x4, offset = 0x4, fixed_abs, tag = 'smem constant byte address 0x4 - core index']
  #allocation1 [shape = 'u32[144,128]{1,0:T(1,128)}', space=vmem, size = 0x12000, scoped, tag = 'internal scratch']
  %s0 = inlined_call_operand.vmem [shape: bf16[4,416,75], index: 0, kind: input, shape index: {}]
  %s1 = inlined_call_operand.vmem [shape: bf16[75,128], index: 1, kind: input, shape index: {}]
  %s2 = inlined_call_operand.vmem [shape: f32[1,128], index: 2, kind: input, shape index: {}]
  %s3 = inlined_call_operand.vmem [shape: bf16[416,128], index: 3, kind: output, shape index: {}]
  %s4 = sld [smem:[#allocation0]]
  $region86: #{forward.3} parent=0
    _
  %s6 = ssub.s32 1, %s4
  %s7 = scalar_select 0, %s6, %s4
  $region1: #{forward.3} parent=0
    #allocation2 [shape = 'u8[425984]{0}', space=vmem, size = 0x68000, scoped, tag = 'input window, operand 0']
    loop: start=0, step=1, limit=4
    $region2: #{forward.3} parent=1 // loop_pre_header
      _
    $region3: #{forward.3} parent=1 // loop_header
      %s9 = sphi 0, %s13
      %p10 = scmp.ge.s32.totalorder %s9, 4
      %s19 = sphi 0, %s21
      %s22 = sphi 0, %s19
      %s23 = sphi 0, %s22
      %s39 = sphi 0, %s23
      %s43 = sphi 0, %s43
      %s45 = sphi 0, %s43
      %s46 = sphi 0, %s45
      %s60 = sphi 0, %s46
      %s64 = sphi 0, %s64
      %s66 = sphi 0, %s64
      %s67 = sphi 0, %s66
      %s81 = sphi 0, %s67
      %s87 = sphi 0, %s89
      %s90 = sphi 0, %s87
      %s91 = sphi 0, %s90
      %s107 = sphi 0, %s91
    $region4: #{forward.3} parent=1 // loop_header_branch
      %12 = sbr.rel (%p10) target = $region8
    $region5: #{forward.3} parent=1 // loop_body
      %s14 = ssub.s32 %s9, 1
      %s15 = ssub.s32 %s9, 2
      %s16 = sadd.s32 %s9, 1
      %s17 = ssub.s32 %s9, %s16
      %p18 = scmp.eq.s32.totalorder %s17, 0
      %s20 = sadd.s32 %s19, 1
      %s21 = scalar_select %p18, %s19, %s20
      %p24 = pneg %p18
      %p25 = scmp.eq.s32.totalorder %s9, 1
      %p26 = por %p24, %p25
      %p27 = scmp.ne.s32.totalorder %s19, %s22
      %p28 = scmp.eq.s32.totalorder %s9, 0
      %p29 = por %p27, %p28
      %p30 = scmp.ne.s32.totalorder %s19, %s22
      %p31 = scmp.eq.s32.totalorder %s14, 1
      %p32 = por %p30, %p31
      %p33 = scmp.ne.s32.totalorder %s22, %s23
      %p34 = scmp.eq.s32.totalorder %s14, 0
      %p35 = por %p33, %p34
      %p36 = scmp.ne.s32.totalorder %s22, %s23
      %p37 = scmp.eq.s32.totalorder %s15, 1
      %p38 = por %p36, %p37
      %p40 = scmp.ne.s32.totalorder %s23, %s39
      %p41 = scmp.eq.s32.totalorder %s15, 0
      %p42 = por %p40, %p41
      %s44 = sadd.s32 %s43, 1
      %p47 = scmp.eq.s32.totalorder %s9, 1
      %p48 = scmp.ne.s32.totalorder %s43, %s45
      %p49 = scmp.eq.s32.totalorder %s9, 0
      %p50 = por %p48, %p49
      %p51 = scmp.ne.s32.totalorder %s43, %s45
      %p52 = scmp.eq.s32.totalorder %s14, 1
      %p53 = por %p51, %p52
      %p54 = scmp.ne.s32.totalorder %s45, %s46
      %p55 = scmp.eq.s32.totalorder %s14, 0
      %p56 = por %p54, %p55
      %p57 = scmp.ne.s32.totalorder %s45, %s46
      %p58 = scmp.eq.s32.totalorder %s15, 1
      %p59 = por %p57, %p58
      %p61 = scmp.ne.s32.totalorder %s46, %s60
      %p62 = scmp.eq.s32.totalorder %s15, 0
      %p63 = por %p61, %p62
      %s65 = sadd.s32 %s64, 1
      %p68 = scmp.eq.s32.totalorder %s9, 1
      %p69 = scmp.ne.s32.totalorder %s64, %s66
      %p70 = scmp.eq.s32.totalorder %s9, 0
      %p71 = por %p69, %p70
      %p72 = scmp.ne.s32.totalorder %s64, %s66
      %p73 = scmp.eq.s32.totalorder %s14, 1
      %p74 = por %p72, %p73
      %p75 = scmp.ne.s32.totalorder %s66, %s67
      %p76 = scmp.eq.s32.totalorder %s14, 0
      %p77 = por %p75, %p76
      %p78 = scmp.ne.s32.totalorder %s66, %s67
      %p79 = scmp.eq.s32.totalorder %s15, 1
      %p80 = por %p78, %p79
      %p82 = scmp.ne.s32.totalorder %s67, %s81
      %p83 = scmp.eq.s32.totalorder %s15, 0
      %p84 = por %p82, %p83
      %s85 = ssub.s32 %s9, %s16
      %p86 = scmp.eq.s32.totalorder %s85, 0
      %s88 = sadd.s32 %s87, 1
      %s89 = scalar_select %p86, %s87, %s88
      %p92 = pneg %p86
      %p93 = scmp.eq.s32.totalorder %s9, 1
      %p94 = por %p92, %p93
      %p95 = scmp.ne.s32.totalorder %s87, %s90
      %p96 = scmp.eq.s32.totalorder %s9, 0
      %p97 = por %p95, %p96
      %p98 = scmp.ne.s32.totalorder %s87, %s90
      %p99 = scmp.eq.s32.totalorder %s14, 1
      %p100 = por %p98, %p99
      %p101 = scmp.ne.s32.totalorder %s90, %s91
      %p102 = scmp.eq.s32.totalorder %s14, 0
      %p103 = por %p101, %p102
      %p104 = scmp.ne.s32.totalorder %s90, %s91
      %p105 = scmp.eq.s32.totalorder %s15, 1
      %p106 = por %p104, %p105
      %p108 = scmp.ne.s32.totalorder %s91, %s107
      %p109 = scmp.eq.s32.totalorder %s15, 0
      %p110 = por %p108, %p109
      %p111 = scmp.le.s32.totalorder 1, %s9
      %p112 = scmp.lt.s32.totalorder %s9, 3
      %p113 = pnand %p111, %p112
      %p114 = pneg %p113
      // Predicated region
      $region9: #{forward.3} parent=5 // pred_check
        _
      $region10: #{forward.3} parent=5 // pred_check_branch
        %116 = sbr.rel (%p113) target = $region12
      $region11: #{forward.3} parent=5 // pred_region
        %s117 = ssub.s32 %s9, 1
        // Predicated region
        $region13: #{forward.3} parent=11 // pred_check
          %p118 = pneg %p56
        $region14: #{forward.3} parent=11 // pred_check_branch
          %120 = sbr.rel (%p118) target = $region16
        $region15: #{forward.3} parent=11 // pred_region
          _
        $region16: #{forward.3} parent=11 // pred_fallthru
          _
        // Predicated region
        $region17: #{forward.3} parent=11 // pred_check
          %p121 = pneg %p77
        $region18: #{forward.3} parent=11 // pred_check_branch
          %123 = sbr.rel (%p121) target = $region20
        $region19: #{forward.3} parent=11 // pred_region
          _
        $region20: #{forward.3} parent=11 // pred_fallthru
          _
      $region12: #{forward.3} parent=5 // pred_fallthru
        _
      %p124 = scmp.lt.s32.totalorder %s9, 2
      // Predicated region
      $region21: #{forward.3} parent=5 // pred_check
        %p125 = pneg %p124
      $region22: #{forward.3} parent=5 // pred_check_branch
        %127 = sbr.rel (%p125) target = $region24
      $region23: #{forward.3} parent=5 // pred_region
        // Predicated region
        $region25: #{forward.3} parent=23 // pred_check
          %p128 = pneg %p29
        $region26: #{forward.3} parent=23 // pred_check_branch
          %130 = sbr.rel (%p128) target = $region28
        $region27: #{forward.3} parent=23 // pred_region
          %s131 = sand.u32 %s19, 1
          %s132 = sand.u32 %s19, 1
          %s133 = smul.addr %s132, 416
          %s134 = scalar_lea.vmem [#allocation2], %s133
          %s135 = smul.u32 26, %s9
          %s136 = smul.addr %s135, 4
          %s137 = scalar_lea.vmem %s0, %s136
          // Predicated region
          $region29: #{forward.3} parent=27 // pred_check
            _
          $region30: #{forward.3} parent=27 // pred_check_branch
            %139 = sbr.rel (0) target = $region32
          $region31: #{forward.3} parent=27 // pred_region
            // Predicated region
            $region33: #{forward.3} parent=31 // pred_check
              _
            $region34: #{forward.3} parent=31 // pred_check_branch
              %141 = sbr.rel target = $region36
            $region35: #{forward.3} parent=31 // pred_region
              // Predicated region
              $region48: #{forward.3} parent=35 // pred_check
                _
              $region49: #{forward.3} parent=35 // pred_check_branch
                %362 = sbr.rel (0) target = $region51
              $region50: #{forward.3} parent=35 // pred_region
                loop: start=0, step=1, limit=1
                $region52: #{forward.3} parent=50 // loop_pre_header
                  _
                $region53: #{forward.3} parent=50 // loop_header
                  %s364 = sphi 0, %s368
                  %p365 = scmp.ge.s32.totalorder %s364, 1
                  %s369 = sphi %s137, %s137
                  %s370 = sphi %s134, %s134
                $region54: #{forward.3} parent=50 // loop_header_branch
                  %367 = sbr.rel (%p365) target = $region58
                $region55: #{forward.3} parent=50 // loop_body
                  _
                $region56: #{forward.3} parent=50 // loop_footer
                  %s368 = sadd.s32 1, %s364
                $region57: #{forward.3} parent=50 // loop_footer_branch
                  %363 = sbr.rel target = $region53
                $region58: #{forward.3} parent=50 // loop_exit
                  _
                loop: start=0, step=1, limit=1
                $region59: #{forward.3} parent=50 // loop_pre_header
                  _
                $region60: #{forward.3} parent=50 // loop_header
                  %s373 = sphi 0, %s377
                  %p374 = scmp.ge.s32.totalorder %s373, 1
                  %s378 = sphi %s137, %s137
                  %s379 = sphi %s134, %s134
                $region61: #{forward.3} parent=50 // loop_header_branch
                  %376 = sbr.rel (%p374) target = $region65
                $region62: #{forward.3} parent=50 // loop_body
                  %v380 = vld [vmem:[%s378] sm:$0xf]
                  %381 = vst [vmem:[%s379] sm:$0xf] %v380
                  %v382 = vld [vmem:[%s378 + $0x4] sm:$0xf]
                  %383 = vst [vmem:[%s379 + $0x4] sm:$0xf] %v382
                  %v384 = vld [vmem:[%s378 + $0x8] sm:$0xf]
                  %385 = vst [vmem:[%s379 + $0x8] sm:$0xf] %v384
                  %v386 = vld [vmem:[%s378 + $0xc] sm:$0xf]
                  %387 = vst [vmem:[%s379 + $0xc] sm:$0xf] %v386
                  %v388 = vld [vmem:[%s378 + $0x10] sm:$0xf]
                  %389 = vst [vmem:[%s379 + $0x10] sm:$0xf] %v388
                  %v390 = vld [vmem:[%s378 + $0x14] sm:$0xf]
                  %391 = vst [vmem:[%s379 + $0x14] sm:$0xf] %v390
                  %v392 = vld [vmem:[%s378 + $0x18] sm:$0xf]
                  %393 = vst [vmem:[%s379 + $0x18] sm:$0xf] %v392
                  %v394 = vld [vmem:[%s378 + $0x1c] sm:$0xf]
                  %395 = vst [vmem:[%s379 + $0x1c] sm:$0xf] %v394
                  %v396 = vld [vmem:[%s378 + $0x20] sm:$0xf]
                  %397 = vst [vmem:[%s379 + $0x20] sm:$0xf] %v396
                  %v398 = vld [vmem:[%s378 + $0x24] sm:$0xf]
                  %399 = vst [vmem:[%s379 + $0x24] sm:$0xf] %v398
                  %v400 = vld [vmem:[%s378 + $0x28] sm:$0xf]
                  %401 = vst [vmem:[%s379 + $0x28] sm:$0xf] %v400
                  %v402 = vld [vmem:[%s378 + $0x2c] sm:$0xf]
                  %403 = vst [vmem:[%s379 + $0x2c] sm:$0xf] %v402
                  %v404 = vld [vmem:[%s378 + $0x30] sm:$0xf]
                  %405 = vst [vmem:[%s379 + $0x30] sm:$0xf] %v404
                  %v406 = vld [vmem:[%s378 + $0x34] sm:$0xf]
                  %407 = vst [vmem:[%s379 + $0x34] sm:$0xf] %v406
                  %v408 = vld [vmem:[%s378 + $0x38] sm:$0xf]
                  %409 = vst [vmem:[%s379 + $0x38] sm:$0xf] %v408
                  %v410 = vld [vmem:[%s378 + $0x3c] sm:$0xf]
                  %411 = vst [vmem:[%s379 + $0x3c] sm:$0xf] %v410
                  %v412 = vld [vmem:[%s378 + $0x40] sm:$0xf]
                  %413 = vst [vmem:[%s379 + $0x40] sm:$0xf] %v412
                  %v414 = vld [vmem:[%s378 + $0x44] sm:$0xf]
                  %415 = vst [vmem:[%s379 + $0x44] sm:$0xf] %v414
                  %v416 = vld [vmem:[%s378 + $0x48] sm:$0xf]
                  %417 = vst [vmem:[%s379 + $0x48] sm:$0xf] %v416
                  %v418 = vld [vmem:[%s378 + $0x4c] sm:$0xf]
                  %419 = vst [vmem:[%s379 + $0x4c] sm:$0xf] %v418
                  %v420 = vld [vmem:[%s378 + $0x50] sm:$0xf]
                  %421 = vst [vmem:[%s379 + $0x50] sm:$0xf] %v420
                  %v422 = vld [vmem:[%s378 + $0x54] sm:$0xf]
                  %423 = vst [vmem:[%s379 + $0x54] sm:$0xf] %v422
                  %v424 = vld [vmem:[%s378 + $0x58] sm:$0xf]
                  %425 = vst [vmem:[%s379 + $0x58] sm:$0xf] %v424
                  %v426 = vld [vmem:[%s378 + $0x5c] sm:$0xf]
                  %427 = vst [vmem:[%s379 + $0x5c] sm:$0xf] %v426
                  %v428 = vld [vmem:[%s378 + $0x60] sm:$0xf]
                  %429 = vst [vmem:[%s379 + $0x60] sm:$0xf] %v428
                  %v430 = vld [vmem:[%s378 + $0x64] sm:$0xf]
                  %431 = vst [vmem:[%s379 + $0x64] sm:$0xf] %v430
                  %v432 = vld [vmem:[%s378 + $0xd0] sm:$0xf]
                  %433 = vst [vmem:[%s379 + $0x68] sm:$0xf] %v432
                  %v434 = vld [vmem:[%s378 + $0xd4] sm:$0xf]
                  %435 = vst [vmem:[%s379 + $0x6c] sm:$0xf] %v434
                  %v436 = vld [vmem:[%s378 + $0xd8] sm:$0xf]
                  %437 = vst [vmem:[%s379 + $0x70] sm:$0xf] %v436
                  %v438 = vld [vmem:[%s378 + $0xdc] sm:$0xf]
                  %439 = vst [vmem:[%s379 + $0x74] sm:$0xf] %v438
                  %v440 = vld [vmem:[%s378 + $0xe0] sm:$0xf]
                  %441 = vst [vmem:[%s379 + $0x78] sm:$0xf] %v440
                  %v442 = vld [vmem:[%s378 + $0xe4] sm:$0xf]
                  %443 = vst [vmem:[%s379 + $0x7c] sm:$0xf] %v442
                  %v444 = vld [vmem:[%s378 + $0xe8] sm:$0xf]
                  %445 = vst [vmem:[%s379 + $0x80] sm:$0xf] %v444
                  %v446 = vld [vmem:[%s378 + $0xec] sm:$0xf]
                  %447 = vst [vmem:[%s379 + $0x84] sm:$0xf] %v446
                  %v448 = vld [vmem:[%s378 + $0xf0] sm:$0xf]
                  %449 = vst [vmem:[%s379 + $0x88] sm:$0xf] %v448
                  %v450 = vld [vmem:[%s378 + $0xf4] sm:$0xf]
                  %451 = vst [vmem:[%s379 + $0x8c] sm:$0xf] %v450
                  %v452 = vld [vmem:[%s378 + $0xf8] sm:$0xf]
                  %453 = vst [vmem:[%s379 + $0x90] sm:$0xf] %v452
                  %v454 = vld [vmem:[%s378 + $0xfc] sm:$0xf]
                  %455 = vst [vmem:[%s379 + $0x94] sm:$0xf] %v454
                  %v456 = vld [vmem:[%s378 + $0x100] sm:$0xf]
                  %457 = vst [vmem:[%s379 + $0x98] sm:$0xf] %v456
                  %v458 = vld [vmem:[%s378 + $0x104] sm:$0xf]
                  %459 = vst [vmem:[%s379 + $0x9c] sm:$0xf] %v458
                  %v460 = vld [vmem:[%s378 + $0x108] sm:$0xf]
                  %461 = vst [vmem:[%s379 + $0xa0] sm:$0xf] %v460
                  %v462 = vld [vmem:[%s378 + $0x10c] sm:$0xf]
                  %463 = vst [vmem:[%s379 + $0xa4] sm:$0xf] %v462
                  %v464 = vld [vmem:[%s378 + $0x110] sm:$0xf]
                  %465 = vst [vmem:[%s379 + $0xa8] sm:$0xf] %v464
                  %v466 = vld [vmem:[%s378 + $0x114] sm:$0xf]
                  %467 = vst [vmem:[%s379 + $0xac] sm:$0xf] %v466
                  %v468 = vld [vmem:[%s378 + $0x118] sm:$0xf]
                  %469 = vst [vmem:[%s379 + $0xb0] sm:$0xf] %v468
                  %v470 = vld [vmem:[%s378 + $0x11c] sm:$0xf]
                  %471 = vst [vmem:[%s379 + $0xb4] sm:$0xf] %v470
                  %v472 = vld [vmem:[%s378 + $0x120] sm:$0xf]
                  %473 = vst [vmem:[%s379 + $0xb8] sm:$0xf] %v472
                  %v474 = vld [vmem:[%s378 + $0x124] sm:$0xf]
                  %475 = vst [vmem:[%s379 + $0xbc] sm:$0xf] %v474
                  %v476 = vld [vmem:[%s378 + $0x128] sm:$0xf]
                  %477 = vst [vmem:[%s379 + $0xc0] sm:$0xf] %v476
                  %v478 = vld [vmem:[%s378 + $0x12c] sm:$0xf]
                  %479 = vst [vmem:[%s379 + $0xc4] sm:$0xf] %v478
                  %v480 = vld [vmem:[%s378 + $0x130] sm:$0xf]
                  %481 = vst [vmem:[%s379 + $0xc8] sm:$0xf] %v480
                  %v482 = vld [vmem:[%s378 + $0x134] sm:$0xf]
                  %483 = vst [vmem:[%s379 + $0xcc] sm:$0xf] %v482
                  %v484 = vld [vmem:[%s378 + $0x1a0] sm:$0xf]
                  %485 = vst [vmem:[%s379 + $0xd0] sm:$0xf] %v484
                  %v486 = vld [vmem:[%s378 + $0x1a4] sm:$0xf]
                  %487 = vst [vmem:[%s379 + $0xd4] sm:$0xf] %v486
                  %v488 = vld [vmem:[%s378 + $0x1a8] sm:$0xf]
                  %489 = vst [vmem:[%s379 + $0xd8] sm:$0xf] %v488
                  %v490 = vld [vmem:[%s378 + $0x1ac] sm:$0xf]
                  %491 = vst [vmem:[%s379 + $0xdc] sm:$0xf] %v490
                  %v492 = vld [vmem:[%s378 + $0x1b0] sm:$0xf]
                  %493 = vst [vmem:[%s379 + $0xe0] sm:$0xf] %v492
                  %v494 = vld [vmem:[%s378 + $0x1b4] sm:$0xf]
                  %495 = vst [vmem:[%s379 + $0xe4] sm:$0xf] %v494
                  %v496 = vld [vmem:[%s378 + $0x1b8] sm:$0xf]
                  %497 = vst [vmem:[%s379 + $0xe8] sm:$0xf] %v496
                  %v498 = vld [vmem:[%s378 + $0x1bc] sm:$0xf]
                  %499 = vst [vmem:[%s379 + $0xec] sm:$0xf] %v498
                  %v500 = vld [vmem:[%s378 + $0x1c0] sm:$0xf]
                  %501 = vst [vmem:[%s379 + $0xf0] sm:$0xf] %v500
                  %v502 = vld [vmem:[%s378 + $0x1c4] sm:$0xf]
                  %503 = vst [vmem:[%s379 + $0xf4] sm:$0xf] %v502
                  %v504 = vld [vmem:[%s378 + $0x1c8] sm:$0xf]
                  %505 = vst [vmem:[%s379 + $0xf8] sm:$0xf] %v504
                  %v506 = vld [vmem:[%s378 + $0x1cc] sm:$0xf]
                  %507 = vst [vmem:[%s379 + $0xfc] sm:$0xf] %v506
                  %v508 = vld [vmem:[%s378 + $0x1d0] sm:$0xf]
                  %509 = vst [vmem:[%s379 + $0x100] sm:$0xf] %v508
                  %v510 = vld [vmem:[%s378 + $0x1d4] sm:$0xf]
                  %511 = vst [vmem:[%s379 + $0x104] sm:$0xf] %v510
                  %v512 = vld [vmem:[%s378 + $0x1d8] sm:$0xf]
                  %513 = vst [vmem:[%s379 + $0x108] sm:$0xf] %v512
                  %v514 = vld [vmem:[%s378 + $0x1dc] sm:$0xf]
                  %515 = vst [vmem:[%s379 + $0x10c] sm:$0xf] %v514
                  %v516 = vld [vmem:[%s378 + $0x1e0] sm:$0xf]
                  %517 = vst [vmem:[%s379 + $0x110] sm:$0xf] %v516
                  %v518 = vld [vmem:[%s378 + $0x1e4] sm:$0xf]
                  %519 = vst [vmem:[%s379 + $0x114] sm:$0xf] %v518
                  %v520 = vld [vmem:[%s378 + $0x1e8] sm:$0xf]
                  %521 = vst [vmem:[%s379 + $0x118] sm:$0xf] %v520
                  %v522 = vld [vmem:[%s378 + $0x1ec] sm:$0xf]
                  %523 = vst [vmem:[%s379 + $0x11c] sm:$0xf] %v522
                  %v524 = vld [vmem:[%s378 + $0x1f0] sm:$0xf]
                  %525 = vst [vmem:[%s379 + $0x120] sm:$0xf] %v524
                  %v526 = vld [vmem:[%s378 + $0x1f4] sm:$0xf]
                  %527 = vst [vmem:[%s379 + $0x124] sm:$0xf] %v526
                  %v528 = vld [vmem:[%s378 + $0x1f8] sm:$0xf]
                  %529 = vst [vmem:[%s379 + $0x128] sm:$0xf] %v528
                  %v530 = vld [vmem:[%s378 + $0x1fc] sm:$0xf]
                  %531 = vst [vmem:[%s379 + $0x12c] sm:$0xf] %v530
                  %v532 = vld [vmem:[%s378 + $0x200] sm:$0xf]
                  %533 = vst [vmem:[%s379 + $0x130] sm:$0xf] %v532
                  %v534 = vld [vmem:[%s378 + $0x204] sm:$0xf]
                  %535 = vst [vmem:[%s379 + $0x134] sm:$0xf] %v534
                  %v536 = vld [vmem:[%s378 + $0x270] sm:$0xf]
                  %537 = vst [vmem:[%s379 + $0x138] sm:$0xf] %v536
                  %v538 = vld [vmem:[%s378 + $0x274] sm:$0xf]
                  %539 = vst [vmem:[%s379 + $0x13c] sm:$0xf] %v538
                  %v540 = vld [vmem:[%s378 + $0x278] sm:$0xf]
                  %541 = vst [vmem:[%s379 + $0x140] sm:$0xf] %v540
                  %v542 = vld [vmem:[%s378 + $0x27c] sm:$0xf]
                  %543 = vst [vmem:[%s379 + $0x144] sm:$0xf] %v542
                  %v544 = vld [vmem:[%s378 + $0x280] sm:$0xf]
                  %545 = vst [vmem:[%s379 + $0x148] sm:$0xf] %v544
                  %v546 = vld [vmem:[%s378 + $0x284] sm:$0xf]
                  %547 = vst [vmem:[%s379 + $0x14c] sm:$0xf] %v546
                  %v548 = vld [vmem:[%s378 + $0x288] sm:$0xf]
                  %549 = vst [vmem:[%s379 + $0x150] sm:$0xf] %v548
                  %v550 = vld [vmem:[%s378 + $0x28c] sm:$0xf]
                  %551 = vst [vmem:[%s379 + $0x154] sm:$0xf] %v550
                  %v552 = vld [vmem:[%s378 + $0x290] sm:$0xf]
                  %553 = vst [vmem:[%s379 + $0x158] sm:$0xf] %v552
                  %v554 = vld [vmem:[%s378 + $0x294] sm:$0xf]
                  %555 = vst [vmem:[%s379 + $0x15c] sm:$0xf] %v554
                  %v556 = vld [vmem:[%s378 + $0x298] sm:$0xf]
                  %557 = vst [vmem:[%s379 + $0x160] sm:$0xf] %v556
                  %v558 = vld [vmem:[%s378 + $0x29c] sm:$0xf]
                  %559 = vst [vmem:[%s379 + $0x164] sm:$0xf] %v558
                  %v560 = vld [vmem:[%s378 + $0x2a0] sm:$0xf]
                  %561 = vst [vmem:[%s379 + $0x168] sm:$0xf] %v560
                  %v562 = vld [vmem:[%s378 + $0x2a4] sm:$0xf]
                  %563 = vst [vmem:[%s379 + $0x16c] sm:$0xf] %v562
                  %v564 = vld [vmem:[%s378 + $0x2a8] sm:$0xf]
                  %565 = vst [vmem:[%s379 + $0x170] sm:$0xf] %v564
                  %v566 = vld [vmem:[%s378 + $0x2ac] sm:$0xf]
                  %567 = vst [vmem:[%s379 + $0x174] sm:$0xf] %v566
                  %v568 = vld [vmem:[%s378 + $0x2b0] sm:$0xf]
                  %569 = vst [vmem:[%s379 + $0x178] sm:$0xf] %v568
                  %v570 = vld [vmem:[%s378 + $0x2b4] sm:$0xf]
                  %571 = vst [vmem:[%s379 + $0x17c] sm:$0xf] %v570
                  %v572 = vld [vmem:[%s378 + $0x2b8] sm:$0xf]
                  %573 = vst [vmem:[%s379 + $0x180] sm:$0xf] %v572
                  %v574 = vld [vmem:[%s378 + $0x2bc] sm:$0xf]
                  %575 = vst [vmem:[%s379 + $0x184] sm:$0xf] %v574
                  %v576 = vld [vmem:[%s378 + $0x2c0] sm:$0xf]
                  %577 = vst [vmem:[%s379 + $0x188] sm:$0xf] %v576
                  %v578 = vld [vmem:[%s378 + $0x2c4] sm:$0xf]
                  %579 = vst [vmem:[%s379 + $0x18c] sm:$0xf] %v578
                  %v580 = vld [vmem:[%s378 + $0x2c8] sm:$0xf]
                  %581 = vst [vmem:[%s379 + $0x190] sm:$0xf] %v580
                  %v582 = vld [vmem:[%s378 + $0x2cc] sm:$0xf]
                  %583 = vst [vmem:[%s379 + $0x194] sm:$0xf] %v582
                  %v584 = vld [vmem:[%s378 + $0x2d0] sm:$0xf]
                  %585 = vst [vmem:[%s379 + $0x198] sm:$0xf] %v584
                  %v586 = vld [vmem:[%s378 + $0x2d4] sm:$0xf]
                  %587 = vst [vmem:[%s379 + $0x19c] sm:$0xf] %v586
                $region63: #{forward.3} parent=50 // loop_footer
                  %s377 = sadd.s32 1, %s373
                $region64: #{forward.3} parent=50 // loop_footer_branch
                  %372 = sbr.rel target = $region60
                $region65: #{forward.3} parent=50 // loop_exit
                  _
              $region51: #{forward.3} parent=35 // pred_fallthru
                _
            $region36: #{forward.3} parent=31 // pred_fallthru
              _
            // Predicated region
            $region37: #{forward.3} parent=31 // pred_check
              _
            $region38: #{forward.3} parent=31 // pred_check_branch
              %143 = sbr.rel (0) target = $region40
            $region39: #{forward.3} parent=31 // pred_region
              loop: start=0, step=1, limit=1
              $region41: #{forward.3} parent=39 // loop_pre_header
                _
              $region42: #{forward.3} parent=39 // loop_header
                %s146 = sphi 0, %s150
                %p147 = scmp.ge.s32.totalorder %s146, 1
                %s151 = sphi %s137, %s137
                %s152 = sphi %s134, %s134
              $region43: #{forward.3} parent=39 // loop_header_branch
                %149 = sbr.rel (%p147) target = $region47
              $region44: #{forward.3} parent=39 // loop_body
                %v153 = vld [vmem:[%s151] sm:$0xf]
                %154 = vst [vmem:[%s152] sm:$0xf] %v153
                %v155 = vld [vmem:[%s151 + $0x4] sm:$0xf]
                %156 = vst [vmem:[%s152 + $0x4] sm:$0xf] %v155
                %v157 = vld [vmem:[%s151 + $0x8] sm:$0xf]
                %158 = vst [vmem:[%s152 + $0x8] sm:$0xf] %v157
                %v159 = vld [vmem:[%s151 + $0xc] sm:$0xf]
                %160 = vst [vmem:[%s152 + $0xc] sm:$0xf] %v159
                %v161 = vld [vmem:[%s151 + $0x10] sm:$0xf]
                %162 = vst [vmem:[%s152 + $0x10] sm:$0xf] %v161
                %v163 = vld [vmem:[%s151 + $0x14] sm:$0xf]
                %164 = vst [vmem:[%s152 + $0x14] sm:$0xf] %v163
                %v165 = vld [vmem:[%s151 + $0x18] sm:$0xf]
                %166 = vst [vmem:[%s152 + $0x18] sm:$0xf] %v165
                %v167 = vld [vmem:[%s151 + $0x1c] sm:$0xf]
                %168 = vst [vmem:[%s152 + $0x1c] sm:$0xf] %v167
                %v169 = vld [vmem:[%s151 + $0x20] sm:$0xf]
                %170 = vst [vmem:[%s152 + $0x20] sm:$0xf] %v169
                %v171 = vld [vmem:[%s151 + $0x24] sm:$0xf]
                %172 = vst [vmem:[%s152 + $0x24] sm:$0xf] %v171
                %v173 = vld [vmem:[%s151 + $0x28] sm:$0xf]
                %174 = vst [vmem:[%s152 + $0x28] sm:$0xf] %v173
                %v175 = vld [vmem:[%s151 + $0x2c] sm:$0xf]
                %176 = vst [vmem:[%s152 + $0x2c] sm:$0xf] %v175
                %v177 = vld [vmem:[%s151 + $0x30] sm:$0xf]
                %178 = vst [vmem:[%s152 + $0x30] sm:$0xf] %v177
                %v179 = vld [vmem:[%s151 + $0x34] sm:$0xf]
                %180 = vst [vmem:[%s152 + $0x34] sm:$0xf] %v179
                %v181 = vld [vmem:[%s151 + $0x38] sm:$0xf]
                %182 = vst [vmem:[%s152 + $0x38] sm:$0xf] %v181
                %v183 = vld [vmem:[%s151 + $0x3c] sm:$0xf]
                %184 = vst [vmem:[%s152 + $0x3c] sm:$0xf] %v183
                %v185 = vld [vmem:[%s151 + $0x40] sm:$0xf]
                %186 = vst [vmem:[%s152 + $0x40] sm:$0xf] %v185
                %v187 = vld [vmem:[%s151 + $0x44] sm:$0xf]
                %188 = vst [vmem:[%s152 + $0x44] sm:$0xf] %v187
                %v189 = vld [vmem:[%s151 + $0x48] sm:$0xf]
                %190 = vst [vmem:[%s152 + $0x48] sm:$0xf] %v189
                %v191 = vld [vmem:[%s151 + $0x4c] sm:$0xf]
                %192 = vst [vmem:[%s152 + $0x4c] sm:$0xf] %v191
                %v193 = vld [vmem:[%s151 + $0x50] sm:$0xf]
                %194 = vst [vmem:[%s152 + $0x50] sm:$0xf] %v193
                %v195 = vld [vmem:[%s151 + $0x54] sm:$0xf]
                %196 = vst [vmem:[%s152 + $0x54] sm:$0xf] %v195
                %v197 = vld [vmem:[%s151 + $0x58] sm:$0xf]
                %198 = vst [vmem:[%s152 + $0x58] sm:$0xf] %v197
                %v199 = vld [vmem:[%s151 + $0x5c] sm:$0xf]
                %200 = vst [vmem:[%s152 + $0x5c] sm:$0xf] %v199
                %v201 = vld [vmem:[%s151 + $0x60] sm:$0xf]
                %202 = vst [vmem:[%s152 + $0x60] sm:$0xf] %v201
                %v203 = vld [vmem:[%s151 + $0x64] sm:$0xf]
                %204 = vst [vmem:[%s152 + $0x64] sm:$0xf] %v203
                %v205 = vld [vmem:[%s151 + $0xd0] sm:$0xf]
                %206 = vst [vmem:[%s152 + $0x68] sm:$0xf] %v205
                %v207 = vld [vmem:[%s151 + $0xd4] sm:$0xf]
                %208 = vst [vmem:[%s152 + $0x6c] sm:$0xf] %v207
                %v209 = vld [vmem:[%s151 + $0xd8] sm:$0xf]
                %210 = vst [vmem:[%s152 + $0x70] sm:$0xf] %v209
                %v211 = vld [vmem:[%s151 + $0xdc] sm:$0xf]
                %212 = vst [vmem:[%s152 + $0x74] sm:$0xf] %v211
                %v213 = vld [vmem:[%s151 + $0xe0] sm:$0xf]
                %214 = vst [vmem:[%s152 + $0x78] sm:$0xf] %v213
                %v215 = vld [vmem:[%s151 + $0xe4] sm:$0xf]
                %216 = vst [vmem:[%s152 + $0x7c] sm:$0xf] %v215
                %v217 = vld [vmem:[%s151 + $0xe8] sm:$0xf]
                %218 = vst [vmem:[%s152 + $0x80] sm:$0xf] %v217
                %v219 = vld [vmem:[%s151 + $0xec] sm:$0xf]
                %220 = vst [vmem:[%s152 + $0x84] sm:$0xf] %v219
                %v221 = vld [vmem:[%s151 + $0xf0] sm:$0xf]
                %222 = vst [vmem:[%s152 + $0x88] sm:$0xf] %v221
                %v223 = vld [vmem:[%s151 + $0xf4] sm:$0xf]
                %224 = vst [vmem:[%s152 + $0x8c] sm:$0xf] %v223
                %v225 = vld [vmem:[%s151 + $0xf8] sm:$0xf]
                %226 = vst [vmem:[%s152 + $0x90] sm:$0xf] %v225
                %v227 = vld [vmem:[%s151 + $0xfc] sm:$0xf]
                %228 = vst [vmem:[%s152 + $0x94] sm:$0xf] %v227
                %v229 = vld [vmem:[%s151 + $0x100] sm:$0xf]
                %230 = vst [vmem:[%s152 + $0x98] sm:$0xf] %v229
                %v231 = vld [vmem:[%s151 + $0x104] sm:$0xf]
                %232 = vst [vmem:[%s152 + $0x9c] sm:$0xf] %v231
                %v233 = vld [vmem:[%s151 + $0x108] sm:$0xf]
                %234 = vst [vmem:[%s152 + $0xa0] sm:$0xf] %v233
                %v235 = vld [vmem:[%s151 + $0x10c] sm:$0xf]
                %236 = vst [vmem:[%s152 + $0xa4] sm:$0xf] %v235
                %v237 = vld [vmem:[%s151 + $0x110] sm:$0xf]
                %238 = vst [vmem:[%s152 + $0xa8] sm:$0xf] %v237
                %v239 = vld [vmem:[%s151 + $0x114] sm:$0xf]
                %240 = vst [vmem:[%s152 + $0xac] sm:$0xf] %v239
                %v241 = vld [vmem:[%s151 + $0x118] sm:$0xf]
                %242 = vst [vmem:[%s152 + $0xb0] sm:$0xf] %v241
                %v243 = vld [vmem:[%s151 + $0x11c] sm:$0xf]
                %244 = vst [vmem:[%s152 + $0xb4] sm:$0xf] %v243
                %v245 = vld [vmem:[%s151 + $0x120] sm:$0xf]
                %246 = vst [vmem:[%s152 + $0xb8] sm:$0xf] %v245
                %v247 = vld [vmem:[%s151 + $0x124] sm:$0xf]
                %248 = vst [vmem:[%s152 + $0xbc] sm:$0xf] %v247
                %v249 = vld [vmem:[%s151 + $0x128] sm:$0xf]
                %250 = vst [vmem:[%s152 + $0xc0] sm:$0xf] %v249
                %v251 = vld [vmem:[%s151 + $0x12c] sm:$0xf]
                %252 = vst [vmem:[%s152 + $0xc4] sm:$0xf] %v251
                %v253 = vld [vmem:[%s151 + $0x130] sm:$0xf]
                %254 = vst [vmem:[%s152 + $0xc8] sm:$0xf] %v253
                %v255 = vld [vmem:[%s151 + $0x134] sm:$0xf]
                %256 = vst [vmem:[%s152 + $0xcc] sm:$0xf] %v255
                %v257 = vld [vmem:[%s151 + $0x1a0] sm:$0xf]
                %258 = vst [vmem:[%s152 + $0xd0] sm:$0xf] %v257
                %v259 = vld [vmem:[%s151 + $0x1a4] sm:$0xf]
                %260 = vst [vmem:[%s152 + $0xd4] sm:$0xf] %v259
                %v261 = vld [vmem:[%s151 + $0x1a8] sm:$0xf]
                %262 = vst [vmem:[%s152 + $0xd8] sm:$0xf] %v261
                %v263 = vld [vmem:[%s151 + $0x1ac] sm:$0xf]
                %264 = vst [vmem:[%s152 + $0xdc] sm:$0xf] %v263
                %v265 = vld [vmem:[%s151 + $0x1b0] sm:$0xf]
                %266 = vst [vmem:[%s152 + $0xe0] sm:$0xf] %v265
                %v267 = vld [vmem:[%s151 + $0x1b4] sm:$0xf]
                %268 = vst [vmem:[%s152 + $0xe4] sm:$0xf] %v267
                %v269 = vld [vmem:[%s151 + $0x1b8] sm:$0xf]
                %270 = vst [vmem:[%s152 + $0xe8] sm:$0xf] %v269
                %v271 = vld [vmem:[%s151 + $0x1bc] sm:$0xf]
                %272 = vst [vmem:[%s152 + $0xec] sm:$0xf] %v271
                %v273 = vld [vmem:[%s151 + $0x1c0] sm:$0xf]
                %274 = vst [vmem:[%s152 + $0xf0] sm:$0xf] %v273
                %v275 = vld [vmem:[%s151 + $0x1c4] sm:$0xf]
                %276 = vst [vmem:[%s152 + $0xf4] sm:$0xf] %v275
                %v277 = vld [vmem:[%s151 + $0x1c8] sm:$0xf]
                %278 = vst [vmem:[%s152 + $0xf8] sm:$0xf] %v277
                %v279 = vld [vmem:[%s151 + $0x1cc] sm:$0xf]
                %280 = vst [vmem:[%s152 + $0xfc] sm:$0xf] %v279
                %v281 = vld [vmem:[%s151 + $0x1d0] sm:$0xf]
                %282 = vst [vmem:[%s152 + $0x100] sm:$0xf] %v281
                %v283 = vld [vmem:[%s151 + $0x1d4] sm:$0xf]
                %284 = vst [vmem:[%s152 + $0x104] sm:$0xf] %v283
                %v285 = vld [vmem:[%s151 + $0x1d8] sm:$0xf]
                %286 = vst [vmem:[%s152 + $0x108] sm:$0xf] %v285
                %v287 = vld [vmem:[%s151 + $0x1dc] sm:$0xf]
                %288 = vst [vmem:[%s152 + $0x10c] sm:$0xf] %v287
                %v289 = vld [vmem:[%s151 + $0x1e0] sm:$0xf]
                %290 = vst [vmem:[%s152 + $0x110] sm:$0xf] %v289
                %v291 = vld [vmem:[%s151 + $0x1e4] sm:$0xf]
                %292 = vst [vmem:[%s152 + $0x114] sm:$0xf] %v291
                %v293 = vld [vmem:[%s151 + $0x1e8] sm:$0xf]
                %294 = vst [vmem:[%s152 + $0x118] sm:$0xf] %v293
                %v295 = vld [vmem:[%s151 + $0x1ec] sm:$0xf]
                %296 = vst [vmem:[%s152 + $0x11c] sm:$0xf] %v295
                %v297 = vld [vmem:[%s151 + $0x1f0] sm:$0xf]
                %298 = vst [vmem:[%s152 + $0x120] sm:$0xf] %v297
                %v299 = vld [vmem:[%s151 + $0x1f4] sm:$0xf]
                %300 = vst [vmem:[%s152 + $0x124] sm:$0xf] %v299
                %v301 = vld [vmem:[%s151 + $0x1f8] sm:$0xf]
                %302 = vst [vmem:[%s152 + $0x128] sm:$0xf] %v301
                %v303 = vld [vmem:[%s151 + $0x1fc] sm:$0xf]
                %304 = vst [vmem:[%s152 + $0x12c] sm:$0xf] %v303
                %v305 = vld [vmem:[%s151 + $0x200] sm:$0xf]
                %306 = vst [vmem:[%s152 + $0x130] sm:$0xf] %v305
                %v307 = vld [vmem:[%s151 + $0x204] sm:$0xf]
                %308 = vst [vmem:[%s152 + $0x134] sm:$0xf] %v307
                %v309 = vld [vmem:[%s151 + $0x270] sm:$0xf]
                %310 = vst [vmem:[%s152 + $0x138] sm:$0xf] %v309
                %v311 = vld [vmem:[%s151 + $0x274] sm:$0xf]
                %312 = vst [vmem:[%s152 + $0x13c] sm:$0xf] %v311
                %v313 = vld [vmem:[%s151 + $0x278] sm:$0xf]
                %314 = vst [vmem:[%s152 + $0x140] sm:$0xf] %v313
                %v315 = vld [vmem:[%s151 + $0x27c] sm:$0xf]
                %316 = vst [vmem:[%s152 + $0x144] sm:$0xf] %v315
                %v317 = vld [vmem:[%s151 + $0x280] sm:$0xf]
                %318 = vst [vmem:[%s152 + $0x148] sm:$0xf] %v317
                %v319 = vld [vmem:[%s151 + $0x284] sm:$0xf]
                %320 = vst [vmem:[%s152 + $0x14c] sm:$0xf] %v319
                %v321 = vld [vmem:[%s151 + $0x288] sm:$0xf]
                %322 = vst [vmem:[%s152 + $0x150] sm:$0xf] %v321
                %v323 = vld [vmem:[%s151 + $0x28c] sm:$0xf]
                %324 = vst [vmem:[%s152 + $0x154] sm:$0xf] %v323
                %v325 = vld [vmem:[%s151 + $0x290] sm:$0xf]
                %326 = vst [vmem:[%s152 + $0x158] sm:$0xf] %v325
                %v327 = vld [vmem:[%s151 + $0x294] sm:$0xf]
                %328 = vst [vmem:[%s152 + $0x15c] sm:$0xf] %v327
                %v329 = vld [vmem:[%s151 + $0x298] sm:$0xf]
                %330 = vst [vmem:[%s152 + $0x160] sm:$0xf] %v329
                %v331 = vld [vmem:[%s151 + $0x29c] sm:$0xf]
                %332 = vst [vmem:[%s152 + $0x164] sm:$0xf] %v331
                %v333 = vld [vmem:[%s151 + $0x2a0] sm:$0xf]
                %334 = vst [vmem:[%s152 + $0x168] sm:$0xf] %v333
                %v335 = vld [vmem:[%s151 + $0x2a4] sm:$0xf]
                %336 = vst [vmem:[%s152 + $0x16c] sm:$0xf] %v335
                %v337 = vld [vmem:[%s151 + $0x2a8] sm:$0xf]
                %338 = vst [vmem:[%s152 + $0x170] sm:$0xf] %v337
                %v339 = vld [vmem:[%s151 + $0x2ac] sm:$0xf]
                %340 = vst [vmem:[%s152 + $0x174] sm:$0xf] %v339
                %v341 = vld [vmem:[%s151 + $0x2b0] sm:$0xf]
                %342 = vst [vmem:[%s152 + $0x178] sm:$0xf] %v341
                %v343 = vld [vmem:[%s151 + $0x2b4] sm:$0xf]
                %344 = vst [vmem:[%s152 + $0x17c] sm:$0xf] %v343
                %v345 = vld [vmem:[%s151 + $0x2b8] sm:$0xf]
                %346 = vst [vmem:[%s152 + $0x180] sm:$0xf] %v345
                %v347 = vld [vmem:[%s151 + $0x2bc] sm:$0xf]
                %348 = vst [vmem:[%s152 + $0x184] sm:$0xf] %v347
                %v349 = vld [vmem:[%s151 + $0x2c0] sm:$0xf]
                %350 = vst [vmem:[%s152 + $0x188] sm:$0xf] %v349
                %v351 = vld [vmem:[%s151 + $0x2c4] sm:$0xf]
                %352 = vst [vmem:[%s152 + $0x18c] sm:$0xf] %v351
                %v353 = vld [vmem:[%s151 + $0x2c8] sm:$0xf]
                %354 = vst [vmem:[%s152 + $0x190] sm:$0xf] %v353
                %v355 = vld [vmem:[%s151 + $0x2cc] sm:$0xf]
                %356 = vst [vmem:[%s152 + $0x194] sm:$0xf] %v355
                %v357 = vld [vmem:[%s151 + $0x2d0] sm:$0xf]
                %358 = vst [vmem:[%s152 + $0x198] sm:$0xf] %v357
                %v359 = vld [vmem:[%s151 + $0x2d4] sm:$0xf]
                %360 = vst [vmem:[%s152 + $0x19c] sm:$0xf] %v359
              $region45: #{forward.3} parent=39 // loop_footer
                %s150 = sadd.s32 1, %s146
              $region46: #{forward.3} parent=39 // loop_footer_branch
                %145 = sbr.rel target = $region42
              $region47: #{forward.3} parent=39 // loop_exit
                _
            $region40: #{forward.3} parent=31 // pred_fallthru
              _
          $region32: #{forward.3} parent=27 // pred_fallthru
            _
          %588 = vnop
        $region28: #{forward.3} parent=23 // pred_fallthru
          _
      $region24: #{forward.3} parent=5 // pred_fallthru
        _
      %p589 = scmp.le.s32.totalorder 1, %s9
      %p590 = scmp.lt.s32.totalorder %s9, 3
      %p591 = pnand %p589, %p590
      %p592 = pneg %p591
      // Predicated region
      $region66: #{forward.3} parent=5 // pred_check
        _
      $region67: #{forward.3} parent=5 // pred_check_branch
        %594 = sbr.rel (%p591) target = $region69
      $region68: #{forward.3} parent=5 // pred_region
        %s595 = ssub.s32 %s9, 1
        %s596 = sand.u32 %s22, 1
        %s597 = sand.u32 %s22, 1
        %s598 = smul.addr %s597, 416
        %s599 = scalar_lea.vmem [#allocation2], %s598
        // Predicated region
        $region70: #{forward.3} parent=68 // pred_check
          %p600 = pneg %p35
        $region71: #{forward.3} parent=68 // pred_check_branch
          %602 = sbr.rel (%p600) target = $region73
        $region72: #{forward.3} parent=68 // pred_region
          _
        $region73: #{forward.3} parent=68 // pred_fallthru
          _
        %s603 = sand.u32 %s22, 1
        %s604 = sand.u32 %s22, 1
        %s605 = smul.addr %s604, 416
        %s606 = scalar_lea.vmem [#allocation2], %s605
        %p607 = pneg %p35
        %p608 = pneg %p32
        %p609 = pneg %p56
        %p610 = pneg %p53
        %p611 = pneg %p77
        %p612 = pneg %p74
        %p613 = pneg %p103
        %p614 = pneg %p100
        %s615 = smul.u32 26, %s14
        %p616 = scmp.lt.s32.totalorder %s615, 51
        %s617 = scalar_select %p616, %s615, 51
        %s618 = smul.addr %s617, 4
        %s619 = scalar_lea.vmem %s3, %s618
        %s620 = smul.u32 26, %s14
        %s621 = smul.u32 26, %s14
        %p622 = scmp.lt.s32.totalorder %s621, 51
        %s623 = scalar_select %p622, %s621, 51
        %s624 = smul.addr %s623, 4
        %s625 = scalar_lea.vmem %s3, %s624
        %s626 = smul.u32 26, %s14
        %v628 = vld [vmem:[%s599] sm:$0xf]
        %v629 = vld [vmem:[%s599 + $0x4] sm:$0xf]
        %v630 = vld [vmem:[%s599 + $0x8] sm:$0xf]
        %v631 = vld [vmem:[%s599 + $0xc] sm:$0xf]
        %v632 = vld [vmem:[%s599 + $0x10] sm:$0xf]
        %v633 = vld [vmem:[%s599 + $0x14] sm:$0xf]
        %v634 = vld [vmem:[%s599 + $0x18] sm:$0xf]
        %v635 = vld [vmem:[%s599 + $0x1c] sm:$0xf]
        %v636 = vld [vmem:[%s599 + $0x20] sm:$0xf]
        %v637 = vld [vmem:[%s599 + $0x24] sm:$0xf]
        %v638 = vld [vmem:[%s599 + $0x28] sm:$0xf]
        %v639 = vld [vmem:[%s599 + $0x2c] sm:$0xf]
        %v640 = vld [vmem:[%s599 + $0x30] sm:$0xf]
        %v641 = vld [vmem:[%s599 + $0x34] sm:$0xf]
        %v642 = vld [vmem:[%s599 + $0x38] sm:$0xf]
        %v643 = vld [vmem:[%s599 + $0x3c] sm:$0xf]
        %v644 = vld [vmem:[%s599 + $0x40] sm:$0xf]
        %v645 = vld [vmem:[%s599 + $0x44] sm:$0xf]
        %v646 = vld [vmem:[%s599 + $0x48] sm:$0xf]
        %v647 = vld [vmem:[%s599 + $0x4c] sm:$0xf]
        %v648 = vld [vmem:[%s599 + $0x50] sm:$0xf]
        %v649 = vld [vmem:[%s599 + $0x54] sm:$0xf]
        %v650 = vld [vmem:[%s599 + $0x58] sm:$0xf]
        %v651 = vld [vmem:[%s599 + $0x5c] sm:$0xf]
        %v652 = vld [vmem:[%s599 + $0x60] sm:$0xf]
        %v653 = vld [vmem:[%s599 + $0x64] sm:$0xf]
        %v654 = vld [vmem:[%s599 + $0x68] sm:$0xf]
        %v655 = vld [vmem:[%s599 + $0x6c] sm:$0xf]
        %v656 = vld [vmem:[%s599 + $0x70] sm:$0xf]
        %v657 = vld [vmem:[%s599 + $0x74] sm:$0xf]
        %v658 = vld [vmem:[%s599 + $0x78] sm:$0xf]
        %v659 = vld [vmem:[%s599 + $0x7c] sm:$0xf]
        %v660 = vld [vmem:[%s599 + $0x80] sm:$0xf]
        %v661 = vld [vmem:[%s599 + $0x84] sm:$0xf]
        %v662 = vld [vmem:[%s599 + $0x88] sm:$0xf]
        %v663 = vld [vmem:[%s599 + $0x8c] sm:$0xf]
        %v664 = vld [vmem:[%s599 + $0x90] sm:$0xf]
        %v665 = vld [vmem:[%s599 + $0x94] sm:$0xf]
        %v666 = vld [vmem:[%s599 + $0x98] sm:$0xf]
        %v667 = vld [vmem:[%s599 + $0x9c] sm:$0xf]
        %v668 = vld [vmem:[%s599 + $0xa0] sm:$0xf]
        %v669 = vld [vmem:[%s599 + $0xa4] sm:$0xf]
        %v670 = vld [vmem:[%s599 + $0xa8] sm:$0xf]
        %v671 = vld [vmem:[%s599 + $0xac] sm:$0xf]
        %v672 = vld [vmem:[%s599 + $0xb0] sm:$0xf]
        %v673 = vld [vmem:[%s599 + $0xb4] sm:$0xf]
        %v674 = vld [vmem:[%s599 + $0xb8] sm:$0xf]
        %v675 = vld [vmem:[%s599 + $0xbc] sm:$0xf]
        %v676 = vld [vmem:[%s599 + $0xc0] sm:$0xf]
        %v677 = vld [vmem:[%s599 + $0xc4] sm:$0xf]
        %v678 = vld [vmem:[%s599 + $0xc8] sm:$0xf]
        %v679 = vld [vmem:[%s599 + $0xcc] sm:$0xf]
        %v680 = vld [vmem:[%s599 + $0xd0] sm:$0xf]
        %v681 = vld [vmem:[%s599 + $0xd4] sm:$0xf]
        %v682 = vld [vmem:[%s599 + $0xd8] sm:$0xf]
        %v683 = vld [vmem:[%s599 + $0xdc] sm:$0xf]
        %v684 = vld [vmem:[%s599 + $0xe0] sm:$0xf]
        %v685 = vld [vmem:[%s599 + $0xe4] sm:$0xf]
        %v686 = vld [vmem:[%s599 + $0xe8] sm:$0xf]
        %v687 = vld [vmem:[%s599 + $0xec] sm:$0xf]
        %v688 = vld [vmem:[%s599 + $0xf0] sm:$0xf]
        %v689 = vld [vmem:[%s599 + $0xf4] sm:$0xf]
        %v690 = vld [vmem:[%s599 + $0xf8] sm:$0xf]
        %v691 = vld [vmem:[%s599 + $0xfc] sm:$0xf]
        %v692 = vld [vmem:[%s599 + $0x100] sm:$0xf]
        %v693 = vld [vmem:[%s599 + $0x104] sm:$0xf]
        %v694 = vld [vmem:[%s599 + $0x108] sm:$0xf]
        %v695 = vld [vmem:[%s599 + $0x10c] sm:$0xf]
        %v696 = vld [vmem:[%s599 + $0x110] sm:$0xf]
        %v697 = vld [vmem:[%s599 + $0x114] sm:$0xf]
        %v698 = vld [vmem:[%s599 + $0x118] sm:$0xf]
        %v699 = vld [vmem:[%s599 + $0x11c] sm:$0xf]
        %v700 = vld [vmem:[%s599 + $0x120] sm:$0xf]
        %v701 = vld [vmem:[%s599 + $0x124] sm:$0xf]
        %v702 = vld [vmem:[%s599 + $0x128] sm:$0xf]
        %v703 = vld [vmem:[%s599 + $0x12c] sm:$0xf]
        %v704 = vld [vmem:[%s599 + $0x130] sm:$0xf]
        %v705 = vld [vmem:[%s599 + $0x134] sm:$0xf]
        %v706 = vld [vmem:[%s599 + $0x138] sm:$0xf]
        %v707 = vld [vmem:[%s599 + $0x13c] sm:$0xf]
        %v708 = vld [vmem:[%s599 + $0x140] sm:$0xf]
        %v709 = vld [vmem:[%s599 + $0x144] sm:$0xf]
        %v710 = vld [vmem:[%s599 + $0x148] sm:$0xf]
        %v711 = vld [vmem:[%s599 + $0x14c] sm:$0xf]
        %v712 = vld [vmem:[%s599 + $0x150] sm:$0xf]
        %v713 = vld [vmem:[%s599 + $0x154] sm:$0xf]
        %v714 = vld [vmem:[%s599 + $0x158] sm:$0xf]
        %v715 = vld [vmem:[%s599 + $0x15c] sm:$0xf]
        %v716 = vld [vmem:[%s599 + $0x160] sm:$0xf]
        %v717 = vld [vmem:[%s599 + $0x164] sm:$0xf]
        %v718 = vld [vmem:[%s599 + $0x168] sm:$0xf]
        %v719 = vld [vmem:[%s599 + $0x16c] sm:$0xf]
        %v720 = vld [vmem:[%s599 + $0x170] sm:$0xf]
        %v721 = vld [vmem:[%s599 + $0x174] sm:$0xf]
        %v722 = vld [vmem:[%s599 + $0x178] sm:$0xf]
        %v723 = vld [vmem:[%s599 + $0x17c] sm:$0xf]
        %v724 = vld [vmem:[%s599 + $0x180] sm:$0xf]
        %v725 = vld [vmem:[%s599 + $0x184] sm:$0xf]
        %v726 = vld [vmem:[%s599 + $0x188] sm:$0xf]
        %v727 = vld [vmem:[%s599 + $0x18c] sm:$0xf]
        %v728 = vld [vmem:[%s599 + $0x190] sm:$0xf]
        %v729 = vld [vmem:[%s599 + $0x194] sm:$0xf]
        %v730 = vld [vmem:[%s599 + $0x198] sm:$0xf]
        %v731 = vld [vmem:[%s599 + $0x19c] sm:$0xf]
        %v732 = vld [vmem:[%s1] sm:$0xf]
        %v733 = vld [vmem:[%s1 + $0x4] sm:$0xf]
        %v734 = vld [vmem:[%s1 + $0x8] sm:$0xf]
        %v735 = vld [vmem:[%s1 + $0xc] sm:$0xf]
        %v736 = vld [vmem:[%s1 + $0x10] sm:$0xf]
        %v737 = vld [vmem:[%s1 + $0x14] sm:$0xf]
        %v738 = vld [vmem:[%s1 + $0x18] sm:$0xf]
        %v739 = vld [vmem:[%s1 + $0x1c] sm:$0xf]
        %v740 = vld [vmem:[%s1 + $0x20] sm:$0xf]
        %v741 = vld [vmem:[%s1 + $0x24] sm:$0x3]
        %v742 = vld [vmem:[%s2] sm:$0x1]
        %v744 = vlaneseq
        %v745 = vshrl.u32 %v744, 7
        %v746 = vsub.s32 0, %v745
        %v747 = vrot.slane %v742, %v746
        %v853 = vunpack.c.l.b16 %v628
        %v854 = vunpack.c.l.b16 %v629
        %v855 = vunpack.c.l.b16 %v630
        %v856 = vunpack.c.l.b16 %v631
        %v857 = vunpack.c.l.b16 %v632
        %v858 = vunpack.c.l.b16 %v633
        %v859 = vunpack.c.l.b16 %v634
        %v860 = vunpack.c.l.b16 %v635
        %v861 = vunpack.c.l.b16 %v636
        %v862 = vunpack.c.l.b16 %v637
        %v863 = vunpack.c.l.b16 %v638
        %v864 = vunpack.c.l.b16 %v639
        %v865 = vunpack.c.l.b16 %v640
        %v866 = vunpack.c.l.b16 %v641
        %v867 = vunpack.c.l.b16 %v642
        %v868 = vunpack.c.l.b16 %v643
        %v869 = vunpack.c.l.b16 %v644
        %v870 = vunpack.c.l.b16 %v645
        %v871 = vunpack.c.l.b16 %v646
        %v872 = vunpack.c.l.b16 %v647
        %v873 = vunpack.c.l.b16 %v648
        %v874 = vunpack.c.l.b16 %v649
        %v875 = vunpack.c.l.b16 %v650
        %v876 = vunpack.c.l.b16 %v651
        %v877 = vunpack.c.l.b16 %v652
        %v878 = vunpack.c.l.b16 %v653
        %v879 = vunpack.c.l.b16 %v654
        %v880 = vunpack.c.l.b16 %v655
        %v881 = vunpack.c.l.b16 %v656
        %v882 = vunpack.c.l.b16 %v657
        %v883 = vunpack.c.l.b16 %v658
        %v884 = vunpack.c.l.b16 %v659
        %v885 = vunpack.c.l.b16 %v660
        %v886 = vunpack.c.l.b16 %v661
        %v887 = vunpack.c.l.b16 %v662
        %v888 = vunpack.c.l.b16 %v663
        %v889 = vunpack.c.l.b16 %v664
        %v890 = vunpack.c.l.b16 %v665
        %v891 = vunpack.c.l.b16 %v666
        %v892 = vunpack.c.l.b16 %v667
        %v893 = vunpack.c.l.b16 %v668
        %v894 = vunpack.c.l.b16 %v669
        %v895 = vunpack.c.l.b16 %v670
        %v896 = vunpack.c.l.b16 %v671
        %v897 = vunpack.c.l.b16 %v672
        %v898 = vunpack.c.l.b16 %v673
        %v899 = vunpack.c.l.b16 %v674
        %v900 = vunpack.c.l.b16 %v675
        %v901 = vunpack.c.l.b16 %v676
        %v902 = vunpack.c.l.b16 %v677
        %v903 = vunpack.c.l.b16 %v678
        %v904 = vunpack.c.l.b16 %v679
        %v905 = vunpack.c.l.b16 %v680
        %v906 = vunpack.c.l.b16 %v681
        %v907 = vunpack.c.l.b16 %v682
        %v908 = vunpack.c.l.b16 %v683
        %v909 = vunpack.c.l.b16 %v684
        %v910 = vunpack.c.l.b16 %v685
        %v911 = vunpack.c.l.b16 %v686
        %v912 = vunpack.c.l.b16 %v687
        %v913 = vunpack.c.l.b16 %v688
        %v914 = vunpack.c.l.b16 %v689
        %v915 = vunpack.c.l.b16 %v690
        %v916 = vunpack.c.l.b16 %v691
        %v917 = vunpack.c.l.b16 %v692
        %v918 = vunpack.c.l.b16 %v693
        %v919 = vunpack.c.l.b16 %v694
        %v920 = vunpack.c.l.b16 %v695
        %v921 = vunpack.c.l.b16 %v696
        %v922 = vunpack.c.l.b16 %v697
        %v923 = vunpack.c.l.b16 %v698
        %v924 = vunpack.c.l.b16 %v699
        %v925 = vunpack.c.l.b16 %v700
        %v926 = vunpack.c.l.b16 %v701
        %v927 = vunpack.c.l.b16 %v702
        %v928 = vunpack.c.l.b16 %v703
        %v929 = vunpack.c.l.b16 %v704
        %v930 = vunpack.c.l.b16 %v705
        %v931 = vunpack.c.l.b16 %v706
        %v932 = vunpack.c.l.b16 %v707
        %v933 = vunpack.c.l.b16 %v708
        %v934 = vunpack.c.l.b16 %v709
        %v935 = vunpack.c.l.b16 %v710
        %v936 = vunpack.c.l.b16 %v711
        %v937 = vunpack.c.l.b16 %v712
        %v938 = vunpack.c.l.b16 %v713
        %v939 = vunpack.c.l.b16 %v714
        %v940 = vunpack.c.l.b16 %v715
        %v941 = vunpack.c.l.b16 %v716
        %v942 = vunpack.c.l.b16 %v717
        %v943 = vunpack.c.l.b16 %v718
        %v944 = vunpack.c.l.b16 %v719
        %v945 = vunpack.c.l.b16 %v720
        %v946 = vunpack.c.l.b16 %v721
        %v947 = vunpack.c.l.b16 %v722
        %v948 = vunpack.c.l.b16 %v723
        %v949 = vunpack.c.l.b16 %v724
        %v950 = vunpack.c.l.b16 %v725
        %v951 = vunpack.c.l.b16 %v726
        %v952 = vunpack.c.l.b16 %v727
        %v953 = vunpack.c.l.b16 %v728
        %v954 = vunpack.c.l.b16 %v729
        %v955 = vunpack.c.l.b16 %v730
        %v956 = vunpack.c.l.b16 %v731
        %v957 = vpack.c.b16 %v854, %v853
        %v958 = vpack.c.b16 %v856, %v855
        %v959 = vpack.c.b16 %v858, %v857
        %v960 = vpack.c.b16 %v860, %v859
        %v961 = vpack.c.b16 %v862, %v861
        %v962 = vpack.c.b16 %v864, %v863
        %v963 = vpack.c.b16 %v866, %v865
        %v964 = vpack.c.b16 %v868, %v867
        %v965 = vpack.c.b16 %v870, %v869
        %v966 = vpack.c.b16 %v872, %v871
        %v967 = vpack.c.b16 %v874, %v873
        %v968 = vpack.c.b16 %v876, %v875
        %v969 = vpack.c.b16 %v878, %v877
        %v970 = vpack.c.b16 %v880, %v879
        %v971 = vpack.c.b16 %v882, %v881
        %v972 = vpack.c.b16 %v884, %v883
        %v973 = vpack.c.b16 %v886, %v885
        %v974 = vpack.c.b16 %v888, %v887
        %v975 = vpack.c.b16 %v890, %v889
        %v976 = vpack.c.b16 %v892, %v891
        %v977 = vpack.c.b16 %v894, %v893
        %v978 = vpack.c.b16 %v896, %v895
        %v979 = vpack.c.b16 %v898, %v897
        %v980 = vpack.c.b16 %v900, %v899
        %v981 = vpack.c.b16 %v902, %v901
        %v982 = vpack.c.b16 %v904, %v903
        %v983 = vpack.c.b16 %v906, %v905
        %v984 = vpack.c.b16 %v908, %v907
        %v985 = vpack.c.b16 %v910, %v909
        %v986 = vpack.c.b16 %v912, %v911
        %v987 = vpack.c.b16 %v914, %v913
        %v988 = vpack.c.b16 %v916, %v915
        %v989 = vpack.c.b16 %v918, %v917
        %v990 = vpack.c.b16 %v920, %v919
        %v991 = vpack.c.b16 %v922, %v921
        %v992 = vpack.c.b16 %v924, %v923
        %v993 = vpack.c.b16 %v926, %v925
        %v994 = vpack.c.b16 %v928, %v927
        %v995 = vpack.c.b16 %v930, %v929
        %v996 = vpack.c.b16 %v932, %v931
        %v997 = vpack.c.b16 %v934, %v933
        %v998 = vpack.c.b16 %v936, %v935
        %v999 = vpack.c.b16 %v938, %v937
        %v1000 = vpack.c.b16 %v940, %v939
        %v1001 = vpack.c.b16 %v942, %v941
        %v1002 = vpack.c.b16 %v944, %v943
        %v1003 = vpack.c.b16 %v946, %v945
        %v1004 = vpack.c.b16 %v948, %v947
        %v1005 = vpack.c.b16 %v950, %v949
        %v1006 = vpack.c.b16 %v952, %v951
        %v1007 = vpack.c.b16 %v954, %v953
        %v1008 = vpack.c.b16 %v956, %v955
        %v1019 = vunpack.c.l.b16 %v732
        %v1020 = vunpack.c.l.b16 %v733
        %v1021 = vunpack.c.l.b16 %v734
        %v1022 = vunpack.c.l.b16 %v735
        %v1023 = vunpack.c.l.b16 %v736
        %v1024 = vunpack.c.l.b16 %v737
        %v1025 = vunpack.c.l.b16 %v738
        %v1026 = vunpack.c.l.b16 %v739
        %v1027 = vunpack.c.l.b16 %v740
        %v1028 = vunpack.c.l.b16 %v741
        %v1029 = vpack.c.b16 %v1020, %v1019
        %v1030 = vpack.c.b16 %v1022, %v1021
        %v1031 = vpack.c.b16 %v1024, %v1023
        %v1032 = vpack.c.b16 %v1026, %v1025
        %v1033 = vpack.c.b16 %v1028, %v1027
        %vm1038 = vcmask 613376
        %v1040 = vsel %vm1038, %v957, 0
        %v1043 = vsel %vm1038, %v958, 0
        %v1046 = vsel %vm1038, %v959, 0
        %v1049 = vsel %vm1038, %v960, 0
        %v1052 = vsel %vm1038, %v961, 0
        %v1055 = vsel %vm1038, %v962, 0
        %v1058 = vsel %vm1038, %v963, 0
        %v1061 = vsel %vm1038, %v964, 0
        %v1064 = vsel %vm1038, %v965, 0
        %v1067 = vsel %vm1038, %v966, 0
        %v1070 = vsel %vm1038, %v967, 0
        %v1073 = vsel %vm1038, %v968, 0
        %v1076 = vsel %vm1038, %v969, 0
        %v1079 = vsel %vm1038, %v970, 0
        %v1082 = vsel %vm1038, %v971, 0
        %v1085 = vsel %vm1038, %v972, 0
        %v1088 = vsel %vm1038, %v973, 0
        %v1091 = vsel %vm1038, %v974, 0
        %v1094 = vsel %vm1038, %v975, 0
        %v1097 = vsel %vm1038, %v976, 0
        %v1100 = vsel %vm1038, %v977, 0
        %v1103 = vsel %vm1038, %v978, 0
        %v1106 = vsel %vm1038, %v979, 0
        %v1109 = vsel %vm1038, %v980, 0
        %v1112 = vsel %vm1038, %v981, 0
        %v1115 = vsel %vm1038, %v982, 0
        %v1118 = vsel %vm1038, %v983, 0
        %v1121 = vsel %vm1038, %v984, 0
        %v1124 = vsel %vm1038, %v985, 0
        %v1127 = vsel %vm1038, %v986, 0
        %v1130 = vsel %vm1038, %v987, 0
        %v1133 = vsel %vm1038, %v988, 0
        %v1136 = vsel %vm1038, %v989, 0
        %v1139 = vsel %vm1038, %v990, 0
        %v1142 = vsel %vm1038, %v991, 0
        %v1145 = vsel %vm1038, %v992, 0
        %v1148 = vsel %vm1038, %v993, 0
        %v1151 = vsel %vm1038, %v994, 0
        %v1154 = vsel %vm1038, %v995, 0
        %v1157 = vsel %vm1038, %v996, 0
        %v1160 = vsel %vm1038, %v997, 0
        %v1163 = vsel %vm1038, %v998, 0
        %v1166 = vsel %vm1038, %v999, 0
        %v1169 = vsel %vm1038, %v1000, 0
        %v1172 = vsel %vm1038, %v1001, 0
        %v1175 = vsel %vm1038, %v1002, 0
        %v1178 = vsel %vm1038, %v1003, 0
        %v1181 = vsel %vm1038, %v1004, 0
        %v1184 = vsel %vm1038, %v1005, 0
        %v1187 = vsel %vm1038, %v1006, 0
        %v1190 = vsel %vm1038, %v1007, 0
        %v1193 = vsel %vm1038, %v1008, 0
        %vm1195 = vcmask 1044480
        %vm1196 = vcmask 1045504
        %v1197 = vsel %vm1195, 4294967295, 65535
        %v1198 = vsel %vm1196, %v1197, 0
        %v1200 = vand.u32 %v1033, %v1198
        %1202 = vmatprep.subr.bf16.mxu0 0
        %1203 = vmatpush1.bf16.msra.mxu0 %v1029
        %1204 = vmatprep.subr.bf16.mxu0 0
        %1205 = vmatpush1.bf16.msra.mxu0 %v1030
        %1206 = vmatprep.subr.bf16.mxu0 0
        %1207 = vmatpush1.bf16.msra.mxu0 %v1031
        %1208 = vmatprep.subr.bf16.mxu0 0
        %1209 = vmatpush1.bf16.msra.mxu0 %v1032
        %1210 = vmatprep.subr.bf16.mxu0 0
        %1211 = vmatpush1.bf16.msra.mxu0 %v1200
        %1212 = vmatprep.subr.bf16.mxu0 0
        %1213 = vmatpush1.bf16.msra.mxu0 0
        %1214 = vmatprep.subr.bf16.mxu0 0
        %1215 = vmatpush1.bf16.msra.mxu0 0
        %1216 = vmatprep.subr.bf16.mxu0 0
        %1217 = vmatpush1.bf16.msra.mxu0 0
        %1218 = vmatprep.subr.bf16.mxu0 0
        %1219 = vmatpush1.bf16.msra.mxu0 0
        %1220 = vmatprep.subr.bf16.mxu0 0
        %1221 = vmatpush1.bf16.msra.mxu0 0
        %1222 = vmatprep.subr.bf16.mxu0 0
        %1223 = vmatpush1.bf16.msra.mxu0 0
        %1224 = vmatprep.subr.bf16.mxu0 0
        %1225 = vmatpush1.bf16.msra.mxu0 0
        %1226 = vmatprep.subr.bf16.mxu0 0
        %1227 = vmatpush1.bf16.msra.mxu0 0
        %1228 = vmatprep.subr.bf16.mxu0 0
        %1229 = vmatpush1.bf16.msra.mxu0 0
        %1230 = vmatprep.subr.bf16.mxu0 0
        %1231 = vmatpush1.bf16.msra.mxu0 0
        %1232 = vmatprep.subr.bf16.mxu0 0
        %1233 = vmatpush1.bf16.msra.mxu0 0
        %1234 = vmatprep.mubr.bf16.mxu0 0
        %1235 = vmatmul.mubr.bf16.gmra.mrb[0].mxu0 %v1040
        %v1236 = vpop.f32.mrb[0].mxu0
        %v1237 = vadd.f32 %v747, %v1236
        %v1238 = vpop.f32.mrb[0].mxu0
        %v1239 = vpop.f32.mrb[0].mxu0
        %v1240 = vadd.f32 %v747, %v1239
        %v1241 = vpop.f32.mrb[0].mxu0
        %1242 = vmatprep.mubr.bf16.mxu0 0
        %1243 = vmatmul.mubr.bf16.gmra.mrb[0].mxu0 %v1043
        %v1244 = vpop.f32.mrb[0].mxu0
        %v1245 = vadd.f32 %v747, %v1244
        %v1246 = vpop.f32.mrb[0].mxu0
        %v1247 = vpop.f32.mrb[0].mxu0
        %v1248 = vadd.f32 %v747, %v1247
        %v1249 = vpop.f32.mrb[0].mxu0
        %1250 = vmatprep.mubr.bf16.mxu0 0
        %1251 = vmatmul.mubr.bf16.gmra.mrb[0].mxu0 %v1046
        %v1252 = vpop.f32.mrb[0].mxu0
        %v1253 = vadd.f32 %v747, %v1252
        %v1254 = vpop.f32.mrb[0].mxu0
        %v1255 = vpop.f32.mrb[0].mxu0
        %v1256 = vadd.f32 %v747, %v1255
        %v1257 = vpop.f32.mrb[0].mxu0
        %1258 = vmatprep.mubr.bf16.mxu0 0
        %1259 = vmatmul.mubr.bf16.gmra.mrb[0].mxu0 %v1049
        %v1260 = vpop.f32.mrb[0].mxu0
        %v1261 = vadd.f32 %v747, %v1260
        %v1262 = vpop.f32.mrb[0].mxu0
        %v1263 = vpop.f32.mrb[0].mxu0
        %v1264 = vadd.f32 %v747, %v1263
        %v1265 = vpop.f32.mrb[0].mxu0
        %1266 = vmatprep.mubr.bf16.mxu0 0
        %1267 = vmatmul.mubr.bf16.gmra.mrb[0].mxu0 %v1052
        %v1268 = vpop.f32.mrb[0].mxu0
        %v1269 = vadd.f32 %v747, %v1268
        %v1270 = vpop.f32.mrb[0].mxu0
        %v1271 = vpop.f32.mrb[0].mxu0
        %v1272 = vadd.f32 %v747, %v1271
        %v1273 = vpop.f32.mrb[0].mxu0
        %1274 = vmatprep.mubr.bf16.mxu0 0
        %1275 = vmatmul.mubr.bf16.gmra.mrb[0].mxu0 %v1055
        %v1276 = vpop.f32.mrb[0].mxu0
        %v1277 = vadd.f32 %v747, %v1276
        %v1278 = vpop.f32.mrb[0].mxu0
        %v1279 = vpop.f32.mrb[0].mxu0
        %v1280 = vadd.f32 %v747, %v1279
        %v1281 = vpop.f32.mrb[0].mxu0
        %1282 = vmatprep.mubr.bf16.mxu0 0
        %1283 = vmatmul.mubr.bf16.gmra.mrb[0].mxu0 %v1058
        %v1284 = vpop.f32.mrb[0].mxu0
        %v1285 = vadd.f32 %v747, %v1284
        %v1286 = vpop.f32.mrb[0].mxu0
        %v1287 = vpop.f32.mrb[0].mxu0
        %v1288 = vadd.f32 %v747, %v1287
        %v1289 = vpop.f32.mrb[0].mxu0
        %1290 = vmatprep.mubr.bf16.mxu0 0
        %1291 = vmatmul.mubr.bf16.gmra.mrb[0].mxu0 %v1061
        %v1292 = vpop.f32.mrb[0].mxu0
        %v1293 = vadd.f32 %v747, %v1292
        %v1294 = vpop.f32.mrb[0].mxu0
        %v1295 = vpop.f32.mrb[0].mxu0
        %v1296 = vadd.f32 %v747, %v1295
        %v1297 = vpop.f32.mrb[0].mxu0
        %1298 = vmatprep.mubr.bf16.mxu0 0
        %1299 = vmatmul.mubr.bf16.gmra.mrb[0].mxu0 %v1064
        %v1300 = vpop.f32.mrb[0].mxu0
        %v1301 = vadd.f32 %v747, %v1300
        %v1302 = vpop.f32.mrb[0].mxu0
        %v1303 = vpop.f32.mrb[0].mxu0
        %v1304 = vadd.f32 %v747, %v1303
        %v1305 = vpop.f32.mrb[0].mxu0
        %1306 = vmatprep.mubr.bf16.mxu0 0
        %1307 = vmatmul.mubr.bf16.gmra.mrb[0].mxu0 %v1067
        %v1308 = vpop.f32.mrb[0].mxu0
        %v1309 = vadd.f32 %v747, %v1308
        %v1310 = vpop.f32.mrb[0].mxu0
        %v1311 = vpop.f32.mrb[0].mxu0
        %v1312 = vadd.f32 %v747, %v1311
        %v1313 = vpop.f32.mrb[0].mxu0
        %1314 = vmatprep.mubr.bf16.mxu0 0
        %1315 = vmatmul.mubr.bf16.gmra.mrb[0].mxu0 %v1070
        %v1316 = vpop.f32.mrb[0].mxu0
        %v1317 = vadd.f32 %v747, %v1316
        %v1318 = vpop.f32.mrb[0].mxu0
        %v1319 = vpop.f32.mrb[0].mxu0
        %v1320 = vadd.f32 %v747, %v1319
        %v1321 = vpop.f32.mrb[0].mxu0
        %1322 = vmatprep.mubr.bf16.mxu0 0
        %1323 = vmatmul.mubr.bf16.gmra.mrb[0].mxu0 %v1073
        %v1324 = vpop.f32.mrb[0].mxu0
        %v1325 = vadd.f32 %v747, %v1324
        %v1326 = vpop.f32.mrb[0].mxu0
        %v1327 = vpop.f32.mrb[0].mxu0
        %v1328 = vadd.f32 %v747, %v1327
        %v1329 = vpop.f32.mrb[0].mxu0
        %1330 = vmatprep.mubr.bf16.mxu0 0
        %1331 = vmatmul.mubr.bf16.gmra.mrb[0].mxu0 %v1076
        %v1332 = vpop.f32.mrb[0].mxu0
        %v1333 = vadd.f32 %v747, %v1332
        %v1334 = vpop.f32.mrb[0].mxu0
        %v1335 = vpop.f32.mrb[0].mxu0
        %v1336 = vadd.f32 %v747, %v1335
        %v1337 = vpop.f32.mrb[0].mxu0
        %1338 = vmatprep.mubr.bf16.mxu0 0
        %1339 = vmatmul.mubr.bf16.gmra.mrb[0].mxu0 %v1079
        %v1340 = vpop.f32.mrb[0].mxu0
        %v1341 = vadd.f32 %v747, %v1340
        %v1342 = vpop.f32.mrb[0].mxu0
        %v1343 = vpop.f32.mrb[0].mxu0
        %v1344 = vadd.f32 %v747, %v1343
        %v1345 = vpop.f32.mrb[0].mxu0
        %1346 = vmatprep.mubr.bf16.mxu0 0
        %1347 = vmatmul.mubr.bf16.gmra.mrb[0].mxu0 %v1082
        %v1348 = vpop.f32.mrb[0].mxu0
        %v1349 = vadd.f32 %v747, %v1348
        %v1350 = vpop.f32.mrb[0].mxu0
        %v1351 = vpop.f32.mrb[0].mxu0
        %v1352 = vadd.f32 %v747, %v1351
        %v1353 = vpop.f32.mrb[0].mxu0
        %1354 = vmatprep.mubr.bf16.mxu0 0
        %1355 = vmatmul.mubr.bf16.gmra.mrb[0].mxu0 %v1085
        %v1356 = vpop.f32.mrb[0].mxu0
        %v1357 = vadd.f32 %v747, %v1356
        %v1358 = vpop.f32.mrb[0].mxu0
        %v1359 = vpop.f32.mrb[0].mxu0
        %v1360 = vadd.f32 %v747, %v1359
        %v1361 = vpop.f32.mrb[0].mxu0
        %1362 = vmatprep.mubr.bf16.mxu0 0
        %1363 = vmatmul.mubr.bf16.gmra.mrb[0].mxu0 %v1088
        %v1364 = vpop.f32.mrb[0].mxu0
        %v1365 = vadd.f32 %v747, %v1364
        %v1366 = vpop.f32.mrb[0].mxu0
        %v1367 = vpop.f32.mrb[0].mxu0
        %v1368 = vadd.f32 %v747, %v1367
        %v1369 = vpop.f32.mrb[0].mxu0
        %1370 = vmatprep.mubr.bf16.mxu0 0
        %1371 = vmatmul.mubr.bf16.gmra.mrb[0].mxu0 %v1091
        %v1372 = vpop.f32.mrb[0].mxu0
        %v1373 = vadd.f32 %v747, %v1372
        %v1374 = vpop.f32.mrb[0].mxu0
        %v1375 = vpop.f32.mrb[0].mxu0
        %v1376 = vadd.f32 %v747, %v1375
        %v1377 = vpop.f32.mrb[0].mxu0
        %1378 = vmatprep.mubr.bf16.mxu0 0
        %1379 = vmatmul.mubr.bf16.gmra.mrb[0].mxu0 %v1094
        %v1380 = vpop.f32.mrb[0].mxu0
        %v1381 = vadd.f32 %v747, %v1380
        %v1382 = vpop.f32.mrb[0].mxu0
        %v1383 = vpop.f32.mrb[0].mxu0
        %v1384 = vadd.f32 %v747, %v1383
        %v1385 = vpop.f32.mrb[0].mxu0
        %1386 = vmatprep.mubr.bf16.mxu0 0
        %1387 = vmatmul.mubr.bf16.gmra.mrb[0].mxu0 %v1097
        %v1388 = vpop.f32.mrb[0].mxu0
        %v1389 = vadd.f32 %v747, %v1388
        %v1390 = vpop.f32.mrb[0].mxu0
        %v1391 = vpop.f32.mrb[0].mxu0
        %v1392 = vadd.f32 %v747, %v1391
        %v1393 = vpop.f32.mrb[0].mxu0
        %1394 = vmatprep.mubr.bf16.mxu0 0
        %1395 = vmatmul.mubr.bf16.gmra.mrb[0].mxu0 %v1100
        %v1396 = vpop.f32.mrb[0].mxu0
        %v1397 = vadd.f32 %v747, %v1396
        %v1398 = vpop.f32.mrb[0].mxu0
        %v1399 = vpop.f32.mrb[0].mxu0
        %v1400 = vadd.f32 %v747, %v1399
        %v1401 = vpop.f32.mrb[0].mxu0
        %1402 = vmatprep.mubr.bf16.mxu0 0
        %1403 = vmatmul.mubr.bf16.gmra.mrb[0].mxu0 %v1103
        %v1404 = vpop.f32.mrb[0].mxu0
        %v1405 = vadd.f32 %v747, %v1404
        %v1406 = vpop.f32.mrb[0].mxu0
        %v1407 = vpop.f32.mrb[0].mxu0
        %v1408 = vadd.f32 %v747, %v1407
        %v1409 = vpop.f32.mrb[0].mxu0
        %1410 = vmatprep.mubr.bf16.mxu0 0
        %1411 = vmatmul.mubr.bf16.gmra.mrb[0].mxu0 %v1106
        %v1412 = vpop.f32.mrb[0].mxu0
        %v1413 = vadd.f32 %v747, %v1412
        %v1414 = vpop.f32.mrb[0].mxu0
        %v1415 = vpop.f32.mrb[0].mxu0
        %v1416 = vadd.f32 %v747, %v1415
        %v1417 = vpop.f32.mrb[0].mxu0
        %1418 = vmatprep.mubr.bf16.mxu0 0
        %1419 = vmatmul.mubr.bf16.gmra.mrb[0].mxu0 %v1109
        %v1420 = vpop.f32.mrb[0].mxu0
        %v1421 = vadd.f32 %v747, %v1420
        %v1422 = vpop.f32.mrb[0].mxu0
        %v1423 = vpop.f32.mrb[0].mxu0
        %v1424 = vadd.f32 %v747, %v1423
        %v1425 = vpop.f32.mrb[0].mxu0
        %1426 = vmatprep.mubr.bf16.mxu0 0
        %1427 = vmatmul.mubr.bf16.gmra.mrb[0].mxu0 %v1112
        %v1428 = vpop.f32.mrb[0].mxu0
        %v1429 = vadd.f32 %v747, %v1428
        %v1430 = vpop.f32.mrb[0].mxu0
        %v1431 = vpop.f32.mrb[0].mxu0
        %v1432 = vadd.f32 %v747, %v1431
        %v1433 = vpop.f32.mrb[0].mxu0
        %1434 = vmatprep.mubr.bf16.mxu0 0
        %1435 = vmatmul.mubr.bf16.gmra.mrb[0].mxu0 %v1115
        %v1436 = vpop.f32.mrb[0].mxu0
        %v1437 = vadd.f32 %v747, %v1436
        %v1438 = vpop.f32.mrb[0].mxu0
        %v1439 = vpop.f32.mrb[0].mxu0
        %v1440 = vadd.f32 %v747, %v1439
        %v1441 = vpop.f32.mrb[0].mxu0
        %1442 = vmatprep.mubr.bf16.mxu0 0
        %1443 = vmatmul.mubr.bf16.gmra.mrb[0].mxu0 %v1118
        %v1444 = vpop.f32.mrb[0].mxu0
        %v1445 = vadd.f32 %v747, %v1444
        %v1446 = vpop.f32.mrb[0].mxu0
        %v1447 = vpop.f32.mrb[0].mxu0
        %v1448 = vadd.f32 %v747, %v1447
        %v1449 = vpop.f32.mrb[0].mxu0
        %1450 = vmatprep.mubr.bf16.mxu0 0
        %1451 = vmatmul.mubr.bf16.gmra.mrb[0].mxu0 %v1121
        %v1452 = vpop.f32.mrb[0].mxu0
        %v1453 = vadd.f32 %v747, %v1452
        %v1454 = vpop.f32.mrb[0].mxu0
        %v1455 = vpop.f32.mrb[0].mxu0
        %v1456 = vadd.f32 %v747, %v1455
        %v1457 = vpop.f32.mrb[0].mxu0
        %1458 = vmatprep.mubr.bf16.mxu0 0
        %1459 = vmatmul.mubr.bf16.gmra.mrb[0].mxu0 %v1124
        %v1460 = vpop.f32.mrb[0].mxu0
        %v1461 = vadd.f32 %v747, %v1460
        %v1462 = vpop.f32.mrb[0].mxu0
        %v1463 = vpop.f32.mrb[0].mxu0
        %v1464 = vadd.f32 %v747, %v1463
        %v1465 = vpop.f32.mrb[0].mxu0
        %1466 = vmatprep.mubr.bf16.mxu0 0
        %1467 = vmatmul.mubr.bf16.gmra.mrb[0].mxu0 %v1127
        %v1468 = vpop.f32.mrb[0].mxu0
        %v1469 = vadd.f32 %v747, %v1468
        %v1470 = vpop.f32.mrb[0].mxu0
        %v1471 = vpop.f32.mrb[0].mxu0
        %v1472 = vadd.f32 %v747, %v1471
        %v1473 = vpop.f32.mrb[0].mxu0
        %1474 = vmatprep.mubr.bf16.mxu0 0
        %1475 = vmatmul.mubr.bf16.gmra.mrb[0].mxu0 %v1130
        %v1476 = vpop.f32.mrb[0].mxu0
        %v1477 = vadd.f32 %v747, %v1476
        %v1478 = vpop.f32.mrb[0].mxu0
        %v1479 = vpop.f32.mrb[0].mxu0
        %v1480 = vadd.f32 %v747, %v1479
        %v1481 = vpop.f32.mrb[0].mxu0
        %1482 = vmatprep.mubr.bf16.mxu0 0
        %1483 = vmatmul.mubr.bf16.gmra.mrb[0].mxu0 %v1133
        %v1484 = vpop.f32.mrb[0].mxu0
        %v1485 = vadd.f32 %v747, %v1484
        %v1486 = vpop.f32.mrb[0].mxu0
        %v1487 = vpop.f32.mrb[0].mxu0
        %v1488 = vadd.f32 %v747, %v1487
        %v1489 = vpop.f32.mrb[0].mxu0
        %1490 = vmatprep.mubr.bf16.mxu0 0
        %1491 = vmatmul.mubr.bf16.gmra.mrb[0].mxu0 %v1136
        %v1492 = vpop.f32.mrb[0].mxu0
        %v1493 = vadd.f32 %v747, %v1492
        %v1494 = vpop.f32.mrb[0].mxu0
        %v1495 = vpop.f32.mrb[0].mxu0
        %v1496 = vadd.f32 %v747, %v1495
        %v1497 = vpop.f32.mrb[0].mxu0
        %1498 = vmatprep.mubr.bf16.mxu0 0
        %1499 = vmatmul.mubr.bf16.gmra.mrb[0].mxu0 %v1139
        %v1500 = vpop.f32.mrb[0].mxu0
        %v1501 = vadd.f32 %v747, %v1500
        %v1502 = vpop.f32.mrb[0].mxu0
        %v1503 = vpop.f32.mrb[0].mxu0
        %v1504 = vadd.f32 %v747, %v1503
        %v1505 = vpop.f32.mrb[0].mxu0
        %1506 = vmatprep.mubr.bf16.mxu0 0
        %1507 = vmatmul.mubr.bf16.gmra.mrb[0].mxu0 %v1142
        %v1508 = vpop.f32.mrb[0].mxu0
        %v1509 = vadd.f32 %v747, %v1508
        %v1510 = vpop.f32.mrb[0].mxu0
        %v1511 = vpop.f32.mrb[0].mxu0
        %v1512 = vadd.f32 %v747, %v1511
        %v1513 = vpop.f32.mrb[0].mxu0
        %1514 = vmatprep.mubr.bf16.mxu0 0
        %1515 = vmatmul.mubr.bf16.gmra.mrb[0].mxu0 %v1145
        %v1516 = vpop.f32.mrb[0].mxu0
        %v1517 = vadd.f32 %v747, %v1516
        %v1518 = vpop.f32.mrb[0].mxu0
        %v1519 = vpop.f32.mrb[0].mxu0
        %v1520 = vadd.f32 %v747, %v1519
        %v1521 = vpop.f32.mrb[0].mxu0
        %1522 = vmatprep.mubr.bf16.mxu0 0
        %1523 = vmatmul.mubr.bf16.gmra.mrb[0].mxu0 %v1148
        %v1524 = vpop.f32.mrb[0].mxu0
        %v1525 = vadd.f32 %v747, %v1524
        %v1526 = vpop.f32.mrb[0].mxu0
        %v1527 = vpop.f32.mrb[0].mxu0
        %v1528 = vadd.f32 %v747, %v1527
        %v1529 = vpop.f32.mrb[0].mxu0
        %1530 = vmatprep.mubr.bf16.mxu0 0
        %1531 = vmatmul.mubr.bf16.gmra.mrb[0].mxu0 %v1151
        %v1532 = vpop.f32.mrb[0].mxu0
        %v1533 = vadd.f32 %v747, %v1532
        %v1534 = vpop.f32.mrb[0].mxu0
        %v1535 = vpop.f32.mrb[0].mxu0
        %v1536 = vadd.f32 %v747, %v1535
        %v1537 = vpop.f32.mrb[0].mxu0
        %1538 = vmatprep.mubr.bf16.mxu0 0
        %1539 = vmatmul.mubr.bf16.gmra.mrb[0].mxu0 %v1154
        %v1540 = vpop.f32.mrb[0].mxu0
        %v1541 = vadd.f32 %v747, %v1540
        %v1542 = vpop.f32.mrb[0].mxu0
        %v1543 = vpop.f32.mrb[0].mxu0
        %v1544 = vadd.f32 %v747, %v1543
        %v1545 = vpop.f32.mrb[0].mxu0
        %1546 = vmatprep.mubr.bf16.mxu0 0
        %1547 = vmatmul.mubr.bf16.gmra.mrb[0].mxu0 %v1157
        %v1548 = vpop.f32.mrb[0].mxu0
        %v1549 = vadd.f32 %v747, %v1548
        %v1550 = vpop.f32.mrb[0].mxu0
        %v1551 = vpop.f32.mrb[0].mxu0
        %v1552 = vadd.f32 %v747, %v1551
        %v1553 = vpop.f32.mrb[0].mxu0
        %1554 = vmatprep.mubr.bf16.mxu0 0
        %1555 = vmatmul.mubr.bf16.gmra.mrb[0].mxu0 %v1160
        %v1556 = vpop.f32.mrb[0].mxu0
        %v1557 = vadd.f32 %v747, %v1556
        %v1558 = vpop.f32.mrb[0].mxu0
        %v1559 = vpop.f32.mrb[0].mxu0
        %v1560 = vadd.f32 %v747, %v1559
        %v1561 = vpop.f32.mrb[0].mxu0
        %1562 = vmatprep.mubr.bf16.mxu0 0
        %1563 = vmatmul.mubr.bf16.gmra.mrb[0].mxu0 %v1163
        %v1564 = vpop.f32.mrb[0].mxu0
        %v1565 = vadd.f32 %v747, %v1564
        %v1566 = vpop.f32.mrb[0].mxu0
        %v1567 = vpop.f32.mrb[0].mxu0
        %v1568 = vadd.f32 %v747, %v1567
        %v1569 = vpop.f32.mrb[0].mxu0
        %1570 = vmatprep.mubr.bf16.mxu0 0
        %1571 = vmatmul.mubr.bf16.gmra.mrb[0].mxu0 %v1166
        %v1572 = vpop.f32.mrb[0].mxu0
        %v1573 = vadd.f32 %v747, %v1572
        %v1574 = vpop.f32.mrb[0].mxu0
        %v1575 = vpop.f32.mrb[0].mxu0
        %v1576 = vadd.f32 %v747, %v1575
        %v1577 = vpop.f32.mrb[0].mxu0
        %1578 = vmatprep.mubr.bf16.mxu0 0
        %1579 = vmatmul.mubr.bf16.gmra.mrb[0].mxu0 %v1169
        %v1580 = vpop.f32.mrb[0].mxu0
        %v1581 = vadd.f32 %v747, %v1580
        %v1582 = vpop.f32.mrb[0].mxu0
        %v1583 = vpop.f32.mrb[0].mxu0
        %v1584 = vadd.f32 %v747, %v1583
        %v1585 = vpop.f32.mrb[0].mxu0
        %1586 = vmatprep.mubr.bf16.mxu0 0
        %1587 = vmatmul.mubr.bf16.gmra.mrb[0].mxu0 %v1172
        %v1588 = vpop.f32.mrb[0].mxu0
        %v1589 = vadd.f32 %v747, %v1588
        %v1590 = vpop.f32.mrb[0].mxu0
        %v1591 = vpop.f32.mrb[0].mxu0
        %v1592 = vadd.f32 %v747, %v1591
        %v1593 = vpop.f32.mrb[0].mxu0
        %1594 = vmatprep.mubr.bf16.mxu0 0
        %1595 = vmatmul.mubr.bf16.gmra.mrb[0].mxu0 %v1175
        %v1596 = vpop.f32.mrb[0].mxu0
        %v1597 = vadd.f32 %v747, %v1596
        %v1598 = vpop.f32.mrb[0].mxu0
        %v1599 = vpop.f32.mrb[0].mxu0
        %v1600 = vadd.f32 %v747, %v1599
        %v1601 = vpop.f32.mrb[0].mxu0
        %1602 = vmatprep.mubr.bf16.mxu0 0
        %1603 = vmatmul.mubr.bf16.gmra.mrb[0].mxu0 %v1178
        %v1604 = vpop.f32.mrb[0].mxu0
        %v1605 = vadd.f32 %v747, %v1604
        %v1606 = vpop.f32.mrb[0].mxu0
        %v1607 = vpop.f32.mrb[0].mxu0
        %v1608 = vadd.f32 %v747, %v1607
        %v1609 = vpop.f32.mrb[0].mxu0
        %1610 = vmatprep.mubr.bf16.mxu0 0
        %1611 = vmatmul.mubr.bf16.gmra.mrb[0].mxu0 %v1181
        %v1612 = vpop.f32.mrb[0].mxu0
        %v1613 = vadd.f32 %v747, %v1612
        %v1614 = vpop.f32.mrb[0].mxu0
        %v1615 = vpop.f32.mrb[0].mxu0
        %v1616 = vadd.f32 %v747, %v1615
        %v1617 = vpop.f32.mrb[0].mxu0
        %1618 = vmatprep.mubr.bf16.mxu0 0
        %1619 = vmatmul.mubr.bf16.gmra.mrb[0].mxu0 %v1184
        %v1620 = vpop.f32.mrb[0].mxu0
        %v1621 = vadd.f32 %v747, %v1620
        %v1622 = vpop.f32.mrb[0].mxu0
        %v1623 = vpop.f32.mrb[0].mxu0
        %v1624 = vadd.f32 %v747, %v1623
        %v1625 = vpop.f32.mrb[0].mxu0
        %1626 = vmatprep.mubr.bf16.mxu0 0
        %1627 = vmatmul.mubr.bf16.gmra.mrb[0].mxu0 %v1187
        %v1628 = vpop.f32.mrb[0].mxu0
        %v1629 = vadd.f32 %v747, %v1628
        %v1630 = vpop.f32.mrb[0].mxu0
        %v1631 = vpop.f32.mrb[0].mxu0
        %v1632 = vadd.f32 %v747, %v1631
        %v1633 = vpop.f32.mrb[0].mxu0
        %1634 = vmatprep.mubr.bf16.mxu0 0
        %1635 = vmatmul.mubr.bf16.gmra.mrb[0].mxu0 %v1190
        %v1636 = vpop.f32.mrb[0].mxu0
        %v1637 = vadd.f32 %v747, %v1636
        %v1638 = vpop.f32.mrb[0].mxu0
        %v1639 = vpop.f32.mrb[0].mxu0
        %v1640 = vadd.f32 %v747, %v1639
        %v1641 = vpop.f32.mrb[0].mxu0
        %1642 = vmatprep.mubr.bf16.mxu0 0
        %1643 = vmatmul.mubr.bf16.gmra.mrb[0].mxu0 %v1193
        %v1644 = vpop.f32.mrb[0].mxu0
        %v1645 = vadd.f32 %v747, %v1644
        %v1646 = vpop.f32.mrb[0].mxu0
        %v1647 = vpop.f32.mrb[0].mxu0
        %v1648 = vadd.f32 %v747, %v1647
        %v1649 = vpop.f32.mrb[0].mxu0
        %1650 = vdwg.mxu0
        %v1651 = vmax.f32 %v1237, 0.0
        %v1652 = vmax.f32 %v1240, 0.0
        %v1653 = vmax.f32 %v1245, 0.0
        %v1654 = vmax.f32 %v1248, 0.0
        %v1655 = vmax.f32 %v1253, 0.0
        %v1656 = vmax.f32 %v1256, 0.0
        %v1657 = vmax.f32 %v1261, 0.0
        %v1658 = vmax.f32 %v1264, 0.0
        %v1659 = vmax.f32 %v1269, 0.0
        %v1660 = vmax.f32 %v1272, 0.0
        %v1661 = vmax.f32 %v1277, 0.0
        %v1662 = vmax.f32 %v1280, 0.0
        %v1663 = vmax.f32 %v1285, 0.0
        %v1664 = vmax.f32 %v1288, 0.0
        %v1665 = vmax.f32 %v1293, 0.0
        %v1666 = vmax.f32 %v1296, 0.0
        %v1667 = vmax.f32 %v1301, 0.0
        %v1668 = vmax.f32 %v1304, 0.0
        %v1669 = vmax.f32 %v1309, 0.0
        %v1670 = vmax.f32 %v1312, 0.0
        %v1671 = vmax.f32 %v1317, 0.0
        %v1672 = vmax.f32 %v1320, 0.0
        %v1673 = vmax.f32 %v1325, 0.0
        %v1674 = vmax.f32 %v1328, 0.0
        %v1675 = vmax.f32 %v1333, 0.0
        %v1676 = vmax.f32 %v1336, 0.0
        %v1677 = vmax.f32 %v1341, 0.0
        %v1678 = vmax.f32 %v1344, 0.0
        %v1679 = vmax.f32 %v1349, 0.0
        %v1680 = vmax.f32 %v1352, 0.0
        %v1681 = vmax.f32 %v1357, 0.0
        %v1682 = vmax.f32 %v1360, 0.0
        %v1683 = vmax.f32 %v1365, 0.0
        %v1684 = vmax.f32 %v1368, 0.0
        %v1685 = vmax.f32 %v1373, 0.0
        %v1686 = vmax.f32 %v1376, 0.0
        %v1687 = vmax.f32 %v1381, 0.0
        %v1688 = vmax.f32 %v1384, 0.0
        %v1689 = vmax.f32 %v1389, 0.0
        %v1690 = vmax.f32 %v1392, 0.0
        %v1691 = vmax.f32 %v1397, 0.0
        %v1692 = vmax.f32 %v1400, 0.0
        %v1693 = vmax.f32 %v1405, 0.0
        %v1694 = vmax.f32 %v1408, 0.0
        %v1695 = vmax.f32 %v1413, 0.0
        %v1696 = vmax.f32 %v1416, 0.0
        %v1697 = vmax.f32 %v1421, 0.0
        %v1698 = vmax.f32 %v1424, 0.0
        %v1699 = vmax.f32 %v1429, 0.0
        %v1700 = vmax.f32 %v1432, 0.0
        %v1701 = vmax.f32 %v1437, 0.0
        %v1702 = vmax.f32 %v1440, 0.0
        %v1703 = vmax.f32 %v1445, 0.0
        %v1704 = vmax.f32 %v1448, 0.0
        %v1705 = vmax.f32 %v1453, 0.0
        %v1706 = vmax.f32 %v1456, 0.0
        %v1707 = vmax.f32 %v1461, 0.0
        %v1708 = vmax.f32 %v1464, 0.0
        %v1709 = vmax.f32 %v1469, 0.0
        %v1710 = vmax.f32 %v1472, 0.0
        %v1711 = vmax.f32 %v1477, 0.0
        %v1712 = vmax.f32 %v1480, 0.0
        %v1713 = vmax.f32 %v1485, 0.0
        %v1714 = vmax.f32 %v1488, 0.0
        %v1715 = vmax.f32 %v1493, 0.0
        %v1716 = vmax.f32 %v1496, 0.0
        %v1717 = vmax.f32 %v1501, 0.0
        %v1718 = vmax.f32 %v1504, 0.0
        %v1719 = vmax.f32 %v1509, 0.0
        %v1720 = vmax.f32 %v1512, 0.0
        %v1721 = vmax.f32 %v1517, 0.0
        %v1722 = vmax.f32 %v1520, 0.0
        %v1723 = vmax.f32 %v1525, 0.0
        %v1724 = vmax.f32 %v1528, 0.0
        %v1725 = vmax.f32 %v1533, 0.0
        %v1726 = vmax.f32 %v1536, 0.0
        %v1727 = vmax.f32 %v1541, 0.0
        %v1728 = vmax.f32 %v1544, 0.0
        %v1729 = vmax.f32 %v1549, 0.0
        %v1730 = vmax.f32 %v1552, 0.0
        %v1731 = vmax.f32 %v1557, 0.0
        %v1732 = vmax.f32 %v1560, 0.0
        %v1733 = vmax.f32 %v1565, 0.0
        %v1734 = vmax.f32 %v1568, 0.0
        %v1735 = vmax.f32 %v1573, 0.0
        %v1736 = vmax.f32 %v1576, 0.0
        %v1737 = vmax.f32 %v1581, 0.0
        %v1738 = vmax.f32 %v1584, 0.0
        %v1739 = vmax.f32 %v1589, 0.0
        %v1740 = vmax.f32 %v1592, 0.0
        %v1741 = vmax.f32 %v1597, 0.0
        %v1742 = vmax.f32 %v1600, 0.0
        %v1743 = vmax.f32 %v1605, 0.0
        %v1744 = vmax.f32 %v1608, 0.0
        %v1745 = vmax.f32 %v1613, 0.0
        %v1746 = vmax.f32 %v1616, 0.0
        %v1747 = vmax.f32 %v1621, 0.0
        %v1748 = vmax.f32 %v1624, 0.0
        %v1749 = vmax.f32 %v1629, 0.0
        %v1750 = vmax.f32 %v1632, 0.0
        %v1751 = vmax.f32 %v1637, 0.0
        %v1752 = vmax.f32 %v1640, 0.0
        %v1753 = vmax.f32 %v1645, 0.0
        %v1754 = vmax.f32 %v1648, 0.0
        %v1755 = vadd.f32 %v1651, %v1677
        %v1756 = vadd.f32 %v1652, %v1678
        %v1757 = vadd.f32 %v1653, %v1679
        %v1758 = vadd.f32 %v1654, %v1680
        %v1759 = vadd.f32 %v1655, %v1681
        %v1760 = vadd.f32 %v1656, %v1682
        %v1761 = vadd.f32 %v1657, %v1683
        %v1762 = vadd.f32 %v1658, %v1684
        %v1763 = vadd.f32 %v1659, %v1685
        %v1764 = vadd.f32 %v1660, %v1686
        %v1765 = vadd.f32 %v1661, %v1687
        %v1766 = vadd.f32 %v1662, %v1688
        %v1767 = vadd.f32 %v1663, %v1689
        %v1768 = vadd.f32 %v1664, %v1690
        %v1769 = vadd.f32 %v1665, %v1691
        %v1770 = vadd.f32 %v1666, %v1692
        %v1771 = vadd.f32 %v1667, %v1693
        %v1772 = vadd.f32 %v1668, %v1694
        %v1773 = vadd.f32 %v1669, %v1695
        %v1774 = vadd.f32 %v1670, %v1696
        %v1775 = vadd.f32 %v1671, %v1697
        %v1776 = vadd.f32 %v1672, %v1698
        %v1777 = vadd.f32 %v1673, %v1699
        %v1778 = vadd.f32 %v1674, %v1700
        %v1779 = vadd.f32 %v1675, %v1701
        %v1780 = vadd.f32 %v1676, %v1702
        %v1781 = vadd.f32 %v1755, %v1703
        %v1782 = vadd.f32 %v1756, %v1704
        %v1783 = vadd.f32 %v1757, %v1705
        %v1784 = vadd.f32 %v1758, %v1706
        %v1785 = vadd.f32 %v1759, %v1707
        %v1786 = vadd.f32 %v1760, %v1708
        %v1787 = vadd.f32 %v1761, %v1709
        %v1788 = vadd.f32 %v1762, %v1710
        %v1789 = vadd.f32 %v1763, %v1711
        %v1790 = vadd.f32 %v1764, %v1712
        %v1791 = vadd.f32 %v1765, %v1713
        %v1792 = vadd.f32 %v1766, %v1714
        %v1793 = vadd.f32 %v1767, %v1715
        %v1794 = vadd.f32 %v1768, %v1716
        %v1795 = vadd.f32 %v1769, %v1717
        %v1796 = vadd.f32 %v1770, %v1718
        %v1797 = vadd.f32 %v1771, %v1719
        %v1798 = vadd.f32 %v1772, %v1720
        %v1799 = vadd.f32 %v1773, %v1721
        %v1800 = vadd.f32 %v1774, %v1722
        %v1801 = vadd.f32 %v1775, %v1723
        %v1802 = vadd.f32 %v1776, %v1724
        %v1803 = vadd.f32 %v1777, %v1725
        %v1804 = vadd.f32 %v1778, %v1726
        %v1805 = vadd.f32 %v1779, %v1727
        %v1806 = vadd.f32 %v1780, %v1728
        %v1807 = vadd.f32 %v1781, %v1729
        %v1808 = vadd.f32 %v1782, %v1730
        %v1809 = vadd.f32 %v1783, %v1731
        %v1810 = vadd.f32 %v1784, %v1732
        %v1811 = vadd.f32 %v1785, %v1733
        %v1812 = vadd.f32 %v1786, %v1734
        %v1813 = vadd.f32 %v1787, %v1735
        %v1814 = vadd.f32 %v1788, %v1736
        %v1815 = vadd.f32 %v1789, %v1737
        %v1816 = vadd.f32 %v1790, %v1738
        %v1817 = vadd.f32 %v1791, %v1739
        %v1818 = vadd.f32 %v1792, %v1740
        %v1819 = vadd.f32 %v1793, %v1741
        %v1820 = vadd.f32 %v1794, %v1742
        %v1821 = vadd.f32 %v1795, %v1743
        %v1822 = vadd.f32 %v1796, %v1744
        %v1823 = vadd.f32 %v1797, %v1745
        %v1824 = vadd.f32 %v1798, %v1746
        %v1825 = vadd.f32 %v1799, %v1747
        %v1826 = vadd.f32 %v1800, %v1748
        %v1827 = vadd.f32 %v1801, %v1749
        %v1828 = vadd.f32 %v1802, %v1750
        %v1829 = vadd.f32 %v1803, %v1751
        %v1830 = vadd.f32 %v1804, %v1752
        %v1831 = vadd.f32 %v1805, %v1753
        %v1832 = vadd.f32 %v1806, %v1754
        %v1833 = vmul.f32 %v1807, 0.25
        %v1834 = vmul.f32 %v1808, 0.25
        %v1835 = vmul.f32 %v1809, 0.25
        %v1836 = vmul.f32 %v1810, 0.25
        %v1837 = vmul.f32 %v1811, 0.25
        %v1838 = vmul.f32 %v1812, 0.25
        %v1839 = vmul.f32 %v1813, 0.25
        %v1840 = vmul.f32 %v1814, 0.25
        %v1841 = vmul.f32 %v1815, 0.25
        %v1842 = vmul.f32 %v1816, 0.25
        %v1843 = vmul.f32 %v1817, 0.25
        %v1844 = vmul.f32 %v1818, 0.25
        %v1845 = vmul.f32 %v1819, 0.25
        %v1846 = vmul.f32 %v1820, 0.25
        %v1847 = vmul.f32 %v1821, 0.25
        %v1848 = vmul.f32 %v1822, 0.25
        %v1849 = vmul.f32 %v1823, 0.25
        %v1850 = vmul.f32 %v1824, 0.25
        %v1851 = vmul.f32 %v1825, 0.25
        %v1852 = vmul.f32 %v1826, 0.25
        %v1853 = vmul.f32 %v1827, 0.25
        %v1854 = vmul.f32 %v1828, 0.25
        %v1855 = vmul.f32 %v1829, 0.25
        %v1856 = vmul.f32 %v1830, 0.25
        %v1857 = vmul.f32 %v1831, 0.25
        %v1858 = vmul.f32 %v1832, 0.25
        %v1859 = vpack.c.bf16 %v1834, %v1833
        %v1860 = vpack.c.bf16 %v1836, %v1835
        %v1861 = vpack.c.bf16 %v1838, %v1837
        %v1862 = vpack.c.bf16 %v1840, %v1839
        %v1863 = vpack.c.bf16 %v1842, %v1841
        %v1864 = vpack.c.bf16 %v1844, %v1843
        %v1865 = vpack.c.bf16 %v1846, %v1845
        %v1866 = vpack.c.bf16 %v1848, %v1847
        %v1867 = vpack.c.bf16 %v1850, %v1849
        %v1868 = vpack.c.bf16 %v1852, %v1851
        %v1869 = vpack.c.bf16 %v1854, %v1853
        %v1870 = vpack.c.bf16 %v1856, %v1855
        %v1871 = vpack.c.bf16 %v1858, %v1857
        %v1885 = vunpack.c.l.b16 %v1859
        %v1886 = vunpack.c.h.b16 %v1859
        %v1887 = vunpack.c.l.b16 %v1860
        %v1888 = vunpack.c.h.b16 %v1860
        %v1889 = vunpack.c.l.b16 %v1861
        %v1890 = vunpack.c.h.b16 %v1861
        %v1891 = vunpack.c.l.b16 %v1862
        %v1892 = vunpack.c.h.b16 %v1862
        %v1893 = vunpack.c.l.b16 %v1863
        %v1894 = vunpack.c.h.b16 %v1863
        %v1895 = vunpack.c.l.b16 %v1864
        %v1896 = vunpack.c.h.b16 %v1864
        %v1897 = vunpack.c.l.b16 %v1865
        %v1898 = vunpack.c.h.b16 %v1865
        %v1899 = vunpack.c.l.b16 %v1866
        %v1900 = vunpack.c.h.b16 %v1866
        %v1901 = vunpack.c.l.b16 %v1867
        %v1902 = vunpack.c.h.b16 %v1867
        %v1903 = vunpack.c.l.b16 %v1868
        %v1904 = vunpack.c.h.b16 %v1868
        %v1905 = vunpack.c.l.b16 %v1869
        %v1906 = vunpack.c.h.b16 %v1869
        %v1907 = vunpack.c.l.b16 %v1870
        %v1908 = vunpack.c.h.b16 %v1870
        %v1909 = vunpack.c.l.b16 %v1871
        %v1910 = vunpack.c.h.b16 %v1871
        %v1911 = vpack.c.b16 %v1885, %v1885
        %v1912 = vpack.c.b16 %v1886, %v1886
        %v1913 = vpack.c.b16 %v1887, %v1887
        %v1914 = vpack.c.b16 %v1888, %v1888
        %v1915 = vpack.c.b16 %v1889, %v1889
        %v1916 = vpack.c.b16 %v1890, %v1890
        %v1917 = vpack.c.b16 %v1891, %v1891
        %v1918 = vpack.c.b16 %v1892, %v1892
        %v1919 = vpack.c.b16 %v1893, %v1893
        %v1920 = vpack.c.b16 %v1894, %v1894
        %v1921 = vpack.c.b16 %v1895, %v1895
        %v1922 = vpack.c.b16 %v1896, %v1896
        %v1923 = vpack.c.b16 %v1897, %v1897
        %v1924 = vpack.c.b16 %v1898, %v1898
        %v1925 = vpack.c.b16 %v1899, %v1899
        %v1926 = vpack.c.b16 %v1900, %v1900
        %v1927 = vpack.c.b16 %v1901, %v1901
        %v1928 = vpack.c.b16 %v1902, %v1902
        %v1929 = vpack.c.b16 %v1903, %v1903
        %v1930 = vpack.c.b16 %v1904, %v1904
        %v1931 = vpack.c.b16 %v1905, %v1905
        %v1932 = vpack.c.b16 %v1906, %v1906
        %v1933 = vpack.c.b16 %v1907, %v1907
        %v1934 = vpack.c.b16 %v1908, %v1908
        %v1935 = vpack.c.b16 %v1909, %v1909
        %v1936 = vpack.c.b16 %v1910, %v1910
        %1963 = vst [vmem:[%s625] sm:$0xf] %v1911
        %1964 = vst [vmem:[%s625 + $0x4] sm:$0xf] %v1912
        %1965 = vst [vmem:[%s625 + $0x8] sm:$0xf] %v1913
        %1966 = vst [vmem:[%s625 + $0xc] sm:$0xf] %v1914
        %1967 = vst [vmem:[%s625 + $0x10] sm:$0xf] %v1915
        %1968 = vst [vmem:[%s625 + $0x14] sm:$0xf] %v1916
        %1969 = vst [vmem:[%s625 + $0x18] sm:$0xf] %v1917
        %1970 = vst [vmem:[%s625 + $0x1c] sm:$0xf] %v1918
        %1971 = vst [vmem:[%s625 + $0x20] sm:$0xf] %v1919
        %1972 = vst [vmem:[%s625 + $0x24] sm:$0xf] %v1920
        %1973 = vst [vmem:[%s625 + $0x28] sm:$0xf] %v1921
        %1974 = vst [vmem:[%s625 + $0x2c] sm:$0xf] %v1922
        %1975 = vst [vmem:[%s625 + $0x30] sm:$0xf] %v1923
        %1976 = vst [vmem:[%s625 + $0x34] sm:$0xf] %v1924
        %1977 = vst [vmem:[%s625 + $0x38] sm:$0xf] %v1925
        %1978 = vst [vmem:[%s625 + $0x3c] sm:$0xf] %v1926
        %1979 = vst [vmem:[%s625 + $0x40] sm:$0xf] %v1927
        %1980 = vst [vmem:[%s625 + $0x44] sm:$0xf] %v1928
        %1981 = vst [vmem:[%s625 + $0x48] sm:$0xf] %v1929
        %1982 = vst [vmem:[%s625 + $0x4c] sm:$0xf] %v1930
        %1983 = vst [vmem:[%s625 + $0x50] sm:$0xf] %v1931
        %1984 = vst [vmem:[%s625 + $0x54] sm:$0xf] %v1932
        %1985 = vst [vmem:[%s625 + $0x58] sm:$0xf] %v1933
        %1986 = vst [vmem:[%s625 + $0x5c] sm:$0xf] %v1934
        %1987 = vst [vmem:[%s625 + $0x60] sm:$0xf] %v1935
        %1988 = vst [vmem:[%s625 + $0x64] sm:$0xf] %v1936
        %s1989 = smul.u32 26, %s14
        %p1990 = scmp.lt.s32.totalorder %s1989, 51
        %s1991 = scalar_select %p1990, %s1989, 51
        %s1992 = smul.addr %s1991, 4
        %s1993 = scalar_lea.vmem %s3, %s1992
        // Predicated region
        $region74: #{forward.3} parent=68 // pred_check
          %p1994 = pneg %p100
        $region75: #{forward.3} parent=68 // pred_check_branch
          %1996 = sbr.rel (%p1994) target = $region77
        $region76: #{forward.3} parent=68 // pred_region
          %s1997 = smul.u32 26, %s14
        $region77: #{forward.3} parent=68 // pred_fallthru
          _
      $region69: #{forward.3} parent=5 // pred_fallthru
        _
      %p1998 = scmp.le.s32.totalorder 2, %s9
      // Predicated region
      $region78: #{forward.3} parent=5 // pred_check
        %p1999 = pneg %p1998
      $region79: #{forward.3} parent=5 // pred_check_branch
        %2001 = sbr.rel (%p1999) target = $region81
      $region80: #{forward.3} parent=5 // pred_region
        %s2002 = ssub.s32 %s9, 2
        // Predicated region
        $region82: #{forward.3} parent=80 // pred_check
          %p2003 = pneg %p106
        $region83: #{forward.3} parent=80 // pred_check_branch
          %2005 = sbr.rel (%p2003) target = $region85
        $region84: #{forward.3} parent=80 // pred_region
          %s2006 = smul.u32 26, %s15
          %p2007 = scmp.lt.s32.totalorder %s2006, 51
          %s2008 = scalar_select %p2007, %s2006, 51
          %s2009 = smul.addr %s2008, 4
          %s2010 = scalar_lea.vmem %s3, %s2009
        $region85: #{forward.3} parent=80 // pred_fallthru
          _
      $region81: #{forward.3} parent=5 // pred_fallthru
        _
    $region6: #{forward.3} parent=1 // loop_footer
      %s13 = sadd.s32 1, %s9
    $region7: #{forward.3} parent=1 // loop_footer_branch
      %8 = sbr.rel target = $region3
    $region8: #{forward.3} parent=1 // loop_exit
      _

// kernel: forward.4
$region0: #{forward.4}
  #allocation0 [shape = 'u32[]', space=smem, size = 0x4, offset = 0x4, fixed_abs, tag = 'smem constant byte address 0x4 - core index']
  #allocation1 [shape = 'u32[144,128]{1,0:T(1,128)}', space=vmem, size = 0x12000, scoped, tag = 'internal scratch']
  %s0 = inlined_call_operand.vmem [shape: bf16[4,64,150], index: 0, kind: input, shape index: {}]
  %s1 = inlined_call_operand.vmem [shape: bf16[150,128], index: 1, kind: input, shape index: {}]
  %s2 = inlined_call_operand.vmem [shape: f32[1,128], index: 2, kind: input, shape index: {}]
  %s3 = inlined_call_operand.vmem [shape: bf16[64,128], index: 3, kind: output, shape index: {}]
  %s4 = sld [smem:[#allocation0]]
  $region83: #{forward.4} parent=0
    _
  %s6 = ssub.s32 1, %s4
  %s7 = scalar_select 0, %s6, %s4
  $region1: #{forward.4} parent=0
    #allocation2 [shape = 'u8[131072]{0}', space=vmem, size = 0x20000, scoped, tag = 'input window, operand 0']
    loop: start=0, step=1, limit=4
    $region2: #{forward.4} parent=1 // loop_pre_header
      _
    $region3: #{forward.4} parent=1 // loop_header
      %s9 = sphi 0, %s13
      %p10 = scmp.ge.s32.totalorder %s9, 4
      %s19 = sphi 0, %s21
      %s22 = sphi 0, %s19
      %s23 = sphi 0, %s22
      %s39 = sphi 0, %s23
      %s43 = sphi 0, %s43
      %s45 = sphi 0, %s43
      %s46 = sphi 0, %s45
      %s60 = sphi 0, %s46
      %s64 = sphi 0, %s64
      %s66 = sphi 0, %s64
      %s67 = sphi 0, %s66
      %s81 = sphi 0, %s67
      %s87 = sphi 0, %s89
      %s90 = sphi 0, %s87
      %s91 = sphi 0, %s90
      %s107 = sphi 0, %s91
    $region4: #{forward.4} parent=1 // loop_header_branch
      %12 = sbr.rel (%p10) target = $region8
    $region5: #{forward.4} parent=1 // loop_body
      %s14 = ssub.s32 %s9, 1
      %s15 = ssub.s32 %s9, 2
      %s16 = sadd.s32 %s9, 1
      %s17 = ssub.s32 %s9, %s16
      %p18 = scmp.eq.s32.totalorder %s17, 0
      %s20 = sadd.s32 %s19, 1
      %s21 = scalar_select %p18, %s19, %s20
      %p24 = pneg %p18
      %p25 = scmp.eq.s32.totalorder %s9, 1
      %p26 = por %p24, %p25
      %p27 = scmp.ne.s32.totalorder %s19, %s22
      %p28 = scmp.eq.s32.totalorder %s9, 0
      %p29 = por %p27, %p28
      %p30 = scmp.ne.s32.totalorder %s19, %s22
      %p31 = scmp.eq.s32.totalorder %s14, 1
      %p32 = por %p30, %p31
      %p33 = scmp.ne.s32.totalorder %s22, %s23
      %p34 = scmp.eq.s32.totalorder %s14, 0
      %p35 = por %p33, %p34
      %p36 = scmp.ne.s32.totalorder %s22, %s23
      %p37 = scmp.eq.s32.totalorder %s15, 1
      %p38 = por %p36, %p37
      %p40 = scmp.ne.s32.totalorder %s23, %s39
      %p41 = scmp.eq.s32.totalorder %s15, 0
      %p42 = por %p40, %p41
      %s44 = sadd.s32 %s43, 1
      %p47 = scmp.eq.s32.totalorder %s9, 1
      %p48 = scmp.ne.s32.totalorder %s43, %s45
      %p49 = scmp.eq.s32.totalorder %s9, 0
      %p50 = por %p48, %p49
      %p51 = scmp.ne.s32.totalorder %s43, %s45
      %p52 = scmp.eq.s32.totalorder %s14, 1
      %p53 = por %p51, %p52
      %p54 = scmp.ne.s32.totalorder %s45, %s46
      %p55 = scmp.eq.s32.totalorder %s14, 0
      %p56 = por %p54, %p55
      %p57 = scmp.ne.s32.totalorder %s45, %s46
      %p58 = scmp.eq.s32.totalorder %s15, 1
      %p59 = por %p57, %p58
      %p61 = scmp.ne.s32.totalorder %s46, %s60
      %p62 = scmp.eq.s32.totalorder %s15, 0
      %p63 = por %p61, %p62
      %s65 = sadd.s32 %s64, 1
      %p68 = scmp.eq.s32.totalorder %s9, 1
      %p69 = scmp.ne.s32.totalorder %s64, %s66
      %p70 = scmp.eq.s32.totalorder %s9, 0
      %p71 = por %p69, %p70
      %p72 = scmp.ne.s32.totalorder %s64, %s66
      %p73 = scmp.eq.s32.totalorder %s14, 1
      %p74 = por %p72, %p73
      %p75 = scmp.ne.s32.totalorder %s66, %s67
      %p76 = scmp.eq.s32.totalorder %s14, 0
      %p77 = por %p75, %p76
      %p78 = scmp.ne.s32.totalorder %s66, %s67
      %p79 = scmp.eq.s32.totalorder %s15, 1
      %p80 = por %p78, %p79
      %p82 = scmp.ne.s32.totalorder %s67, %s81
      %p83 = scmp.eq.s32.totalorder %s15, 0
      %p84 = por %p82, %p83
      %s85 = ssub.s32 %s9, %s16
      %p86 = scmp.eq.s32.totalorder %s85, 0
      %s88 = sadd.s32 %s87, 1
      %s89 = scalar_select %p86, %s87, %s88
      %p92 = pneg %p86
      %p93 = scmp.eq.s32.totalorder %s9, 1
      %p94 = por %p92, %p93
      %p95 = scmp.ne.s32.totalorder %s87, %s90
      %p96 = scmp.eq.s32.totalorder %s9, 0
      %p97 = por %p95, %p96
      %p98 = scmp.ne.s32.totalorder %s87, %s90
      %p99 = scmp.eq.s32.totalorder %s14, 1
      %p100 = por %p98, %p99
      %p101 = scmp.ne.s32.totalorder %s90, %s91
      %p102 = scmp.eq.s32.totalorder %s14, 0
      %p103 = por %p101, %p102
      %p104 = scmp.ne.s32.totalorder %s90, %s91
      %p105 = scmp.eq.s32.totalorder %s15, 1
      %p106 = por %p104, %p105
      %p108 = scmp.ne.s32.totalorder %s91, %s107
      %p109 = scmp.eq.s32.totalorder %s15, 0
      %p110 = por %p108, %p109
      %p111 = scmp.le.s32.totalorder 1, %s9
      %p112 = scmp.lt.s32.totalorder %s9, 3
      %p113 = pnand %p111, %p112
      %p114 = pneg %p113
      // Predicated region
      $region9: #{forward.4} parent=5 // pred_check
        _
      $region10: #{forward.4} parent=5 // pred_check_branch
        %116 = sbr.rel (%p113) target = $region12
      $region11: #{forward.4} parent=5 // pred_region
        %s117 = ssub.s32 %s9, 1
        // Predicated region
        $region13: #{forward.4} parent=11 // pred_check
          %p118 = pneg %p56
        $region14: #{forward.4} parent=11 // pred_check_branch
          %120 = sbr.rel (%p118) target = $region16
        $region15: #{forward.4} parent=11 // pred_region
          _
        $region16: #{forward.4} parent=11 // pred_fallthru
          _
        // Predicated region
        $region17: #{forward.4} parent=11 // pred_check
          %p121 = pneg %p77
        $region18: #{forward.4} parent=11 // pred_check_branch
          %123 = sbr.rel (%p121) target = $region20
        $region19: #{forward.4} parent=11 // pred_region
          _
        $region20: #{forward.4} parent=11 // pred_fallthru
          _
      $region12: #{forward.4} parent=5 // pred_fallthru
        _
      %p124 = scmp.lt.s32.totalorder %s9, 2
      // Predicated region
      $region21: #{forward.4} parent=5 // pred_check
        %p125 = pneg %p124
      $region22: #{forward.4} parent=5 // pred_check_branch
        %127 = sbr.rel (%p125) target = $region24
      $region23: #{forward.4} parent=5 // pred_region
        // Predicated region
        $region25: #{forward.4} parent=23 // pred_check
          %p128 = pneg %p29
        $region26: #{forward.4} parent=23 // pred_check_branch
          %130 = sbr.rel (%p128) target = $region28
        $region27: #{forward.4} parent=23 // pred_region
          %s131 = sand.u32 %s19, 1
          %s132 = sand.u32 %s19, 1
          %s133 = smul.addr %s132, 128
          %s134 = scalar_lea.vmem [#allocation2], %s133
          %s135 = smul.u32 4, %s9
          %s136 = smul.addr %s135, 2
          %s137 = smul.addr %s136, 4
          %s138 = scalar_lea.vmem %s0, %s137
          // Predicated region
          $region29: #{forward.4} parent=27 // pred_check
            _
          $region30: #{forward.4} parent=27 // pred_check_branch
            %140 = sbr.rel (0) target = $region32
          $region31: #{forward.4} parent=27 // pred_region
            // Predicated region
            $region33: #{forward.4} parent=31 // pred_check
              _
            $region34: #{forward.4} parent=31 // pred_check_branch
              %142 = sbr.rel (0) target = $region36
            $region35: #{forward.4} parent=31 // pred_region
              // Predicated region
              $region48: #{forward.4} parent=35 // pred_check
                _
              $region49: #{forward.4} parent=35 // pred_check_branch
                %187 = sbr.rel (0) target = $region51
              $region50: #{forward.4} parent=35 // pred_region
                loop: start=0, step=1, limit=1
                $region52: #{forward.4} parent=50 // loop_pre_header
                  _
                $region53: #{forward.4} parent=50 // loop_header
                  %s189 = sphi 0, %s193
                  %p190 = scmp.ge.s32.totalorder %s189, 1
                  %s194 = sphi %s138, %s138
                  %s195 = sphi %s134, %s134
                $region54: #{forward.4} parent=50 // loop_header_branch
                  %192 = sbr.rel (%p190) target = $region58
                $region55: #{forward.4} parent=50 // loop_body
                  %v196 = vld [vmem:[%s194] sm:$0xff]
                  %197 = vst [vmem:[%s195] sm:$0xff] %v196
                  %v198 = vld [vmem:[%s194 + $0x8] sm:$0xff]
                  %199 = vst [vmem:[%s195 + $0x8] sm:$0xff] %v198
                  %v200 = vld [vmem:[%s194 + $0x10] sm:$0xff]
                  %201 = vst [vmem:[%s195 + $0x10] sm:$0xff] %v200
                  %v202 = vld [vmem:[%s194 + $0x18] sm:$0xff]
                  %203 = vst [vmem:[%s195 + $0x18] sm:$0xff] %v202
                  %v204 = vld [vmem:[%s194 + $0x40] sm:$0xff]
                  %205 = vst [vmem:[%s195 + $0x20] sm:$0xff] %v204
                  %v206 = vld [vmem:[%s194 + $0x48] sm:$0xff]
                  %207 = vst [vmem:[%s195 + $0x28] sm:$0xff] %v206
                  %v208 = vld [vmem:[%s194 + $0x50] sm:$0xff]
                  %209 = vst [vmem:[%s195 + $0x30] sm:$0xff] %v208
                  %v210 = vld [vmem:[%s194 + $0x58] sm:$0xff]
                  %211 = vst [vmem:[%s195 + $0x38] sm:$0xff] %v210
                  %v212 = vld [vmem:[%s194 + $0x80] sm:$0xff]
                  %213 = vst [vmem:[%s195 + $0x40] sm:$0xff] %v212
                  %v214 = vld [vmem:[%s194 + $0x88] sm:$0xff]
                  %215 = vst [vmem:[%s195 + $0x48] sm:$0xff] %v214
                  %v216 = vld [vmem:[%s194 + $0x90] sm:$0xff]
                  %217 = vst [vmem:[%s195 + $0x50] sm:$0xff] %v216
                  %v218 = vld [vmem:[%s194 + $0x98] sm:$0xff]
                  %219 = vst [vmem:[%s195 + $0x58] sm:$0xff] %v218
                  %v220 = vld [vmem:[%s194 + $0xc0] sm:$0xff]
                  %221 = vst [vmem:[%s195 + $0x60] sm:$0xff] %v220
                  %v222 = vld [vmem:[%s194 + $0xc8] sm:$0xff]
                  %223 = vst [vmem:[%s195 + $0x68] sm:$0xff] %v222
                  %v224 = vld [vmem:[%s194 + $0xd0] sm:$0xff]
                  %225 = vst [vmem:[%s195 + $0x70] sm:$0xff] %v224
                  %v226 = vld [vmem:[%s194 + $0xd8] sm:$0xff]
                  %227 = vst [vmem:[%s195 + $0x78] sm:$0xff] %v226
                $region56: #{forward.4} parent=50 // loop_footer
                  %s193 = sadd.s32 1, %s189
                $region57: #{forward.4} parent=50 // loop_footer_branch
                  %188 = sbr.rel target = $region53
                $region58: #{forward.4} parent=50 // loop_exit
                  _
              $region51: #{forward.4} parent=35 // pred_fallthru
                _
              // Predicated region
              $region59: #{forward.4} parent=35 // pred_check
                _
              $region60: #{forward.4} parent=35 // pred_check_branch
                %229 = sbr.rel target = $region62
              $region61: #{forward.4} parent=35 // pred_region
                _
              $region62: #{forward.4} parent=35 // pred_fallthru
                _
            $region36: #{forward.4} parent=31 // pred_fallthru
              _
            // Predicated region
            $region37: #{forward.4} parent=31 // pred_check
              _
            $region38: #{forward.4} parent=31 // pred_check_branch
              %144 = sbr.rel target = $region40
            $region39: #{forward.4} parent=31 // pred_region
              loop: start=0, step=1, limit=1
              $region41: #{forward.4} parent=39 // loop_pre_header
                _
              $region42: #{forward.4} parent=39 // loop_header
                %s147 = sphi 0, %s151
                %p148 = scmp.ge.s32.totalorder %s147, 1
                %s152 = sphi %s138, %s138
                %s153 = sphi %s134, %s134
              $region43: #{forward.4} parent=39 // loop_header_branch
                %150 = sbr.rel (%p148) target = $region47
              $region44: #{forward.4} parent=39 // loop_body
                %v154 = vld [vmem:[%s152] sm:$0xff]
                %155 = vst [vmem:[%s153] sm:$0xff] %v154
                %v156 = vld [vmem:[%s152 + $0x8] sm:$0xff]
                %157 = vst [vmem:[%s153 + $0x8] sm:$0xff] %v156
                %v158 = vld [vmem:[%s152 + $0x10] sm:$0xff]
                %159 = vst [vmem:[%s153 + $0x10] sm:$0xff] %v158
                %v160 = vld [vmem:[%s152 + $0x18] sm:$0xff]
                %161 = vst [vmem:[%s153 + $0x18] sm:$0xff] %v160
                %v162 = vld [vmem:[%s152 + $0x40] sm:$0xff]
                %163 = vst [vmem:[%s153 + $0x20] sm:$0xff] %v162
                %v164 = vld [vmem:[%s152 + $0x48] sm:$0xff]
                %165 = vst [vmem:[%s153 + $0x28] sm:$0xff] %v164
                %v166 = vld [vmem:[%s152 + $0x50] sm:$0xff]
                %167 = vst [vmem:[%s153 + $0x30] sm:$0xff] %v166
                %v168 = vld [vmem:[%s152 + $0x58] sm:$0xff]
                %169 = vst [vmem:[%s153 + $0x38] sm:$0xff] %v168
                %v170 = vld [vmem:[%s152 + $0x80] sm:$0xff]
                %171 = vst [vmem:[%s153 + $0x40] sm:$0xff] %v170
                %v172 = vld [vmem:[%s152 + $0x88] sm:$0xff]
                %173 = vst [vmem:[%s153 + $0x48] sm:$0xff] %v172
                %v174 = vld [vmem:[%s152 + $0x90] sm:$0xff]
                %175 = vst [vmem:[%s153 + $0x50] sm:$0xff] %v174
                %v176 = vld [vmem:[%s152 + $0x98] sm:$0xff]
                %177 = vst [vmem:[%s153 + $0x58] sm:$0xff] %v176
                %v178 = vld [vmem:[%s152 + $0xc0] sm:$0xff]
                %179 = vst [vmem:[%s153 + $0x60] sm:$0xff] %v178
                %v180 = vld [vmem:[%s152 + $0xc8] sm:$0xff]
                %181 = vst [vmem:[%s153 + $0x68] sm:$0xff] %v180
                %v182 = vld [vmem:[%s152 + $0xd0] sm:$0xff]
                %183 = vst [vmem:[%s153 + $0x70] sm:$0xff] %v182
                %v184 = vld [vmem:[%s152 + $0xd8] sm:$0xff]
                %185 = vst [vmem:[%s153 + $0x78] sm:$0xff] %v184
              $region45: #{forward.4} parent=39 // loop_footer
                %s151 = sadd.s32 1, %s147
              $region46: #{forward.4} parent=39 // loop_footer_branch
                %146 = sbr.rel target = $region42
              $region47: #{forward.4} parent=39 // loop_exit
                _
            $region40: #{forward.4} parent=31 // pred_fallthru
              _
          $region32: #{forward.4} parent=27 // pred_fallthru
            _
          %230 = vnop
        $region28: #{forward.4} parent=23 // pred_fallthru
          _
      $region24: #{forward.4} parent=5 // pred_fallthru
        _
      %p231 = scmp.le.s32.totalorder 1, %s9
      %p232 = scmp.lt.s32.totalorder %s9, 3
      %p233 = pnand %p231, %p232
      %p234 = pneg %p233
      // Predicated region
      $region63: #{forward.4} parent=5 // pred_check
        _
      $region64: #{forward.4} parent=5 // pred_check_branch
        %236 = sbr.rel (%p233) target = $region66
      $region65: #{forward.4} parent=5 // pred_region
        %s237 = ssub.s32 %s9, 1
        %s238 = sand.u32 %s22, 1
        %s239 = sand.u32 %s22, 1
        %s240 = smul.addr %s239, 128
        %s241 = scalar_lea.vmem [#allocation2], %s240
        // Predicated region
        $region67: #{forward.4} parent=65 // pred_check
          %p242 = pneg %p35
        $region68: #{forward.4} parent=65 // pred_check_branch
          %244 = sbr.rel (%p242) target = $region70
        $region69: #{forward.4} parent=65 // pred_region
          _
        $region70: #{forward.4} parent=65 // pred_fallthru
          _
        %s245 = sand.u32 %s22, 1
        %s246 = sand.u32 %s22, 1
        %s247 = smul.addr %s246, 128
        %s248 = scalar_lea.vmem [#allocation2], %s247
        %p249 = pneg %p35
        %p250 = pneg %p32
        %p251 = pneg %p56
        %p252 = pneg %p53
        %p253 = pneg %p77
        %p254 = pneg %p74
        %p255 = pneg %p103
        %p256 = pneg %p100
        %s257 = smul.u32 4, %s14
        %p258 = scmp.lt.s32.totalorder %s257, 7
        %s259 = scalar_select %p258, %s257, 7
        %s260 = smul.addr %s259, 4
        %s261 = scalar_lea.vmem %s3, %s260
        %s262 = smul.u32 4, %s14
        %s263 = smul.u32 4, %s14
        %p264 = scmp.lt.s32.totalorder %s263, 7
        %s265 = scalar_select %p264, %s263, 7
        %s266 = smul.addr %s265, 4
        %s267 = scalar_lea.vmem %s3, %s266
        %s268 = smul.u32 4, %s14
        %v270 = vld [vmem:[%s241] sm:$0xff]
        %v271 = vld [vmem:[%s241 + $0x8] sm:$0xff]
        %v272 = vld [vmem:[%s241 + $0x10] sm:$0xff]
        %v273 = vld [vmem:[%s241 + $0x18] sm:$0xff]
        %v274 = vld [vmem:[%s241 + $0x20] sm:$0xff]
        %v275 = vld [vmem:[%s241 + $0x28] sm:$0xff]
        %v276 = vld [vmem:[%s241 + $0x30] sm:$0xff]
        %v277 = vld [vmem:[%s241 + $0x38] sm:$0xff]
        %v278 = vld [vmem:[%s241 + $0x40] sm:$0xff]
        %v279 = vld [vmem:[%s241 + $0x48] sm:$0xff]
        %v280 = vld [vmem:[%s241 + $0x50] sm:$0xff]
        %v281 = vld [vmem:[%s241 + $0x58] sm:$0xff]
        %v282 = vld [vmem:[%s241 + $0x60] sm:$0xff]
        %v283 = vld [vmem:[%s241 + $0x68] sm:$0xff]
        %v284 = vld [vmem:[%s241 + $0x70] sm:$0xff]
        %v285 = vld [vmem:[%s241 + $0x78] sm:$0xff]
        %v286 = vld [vmem:[%s1] sm:$0xf]
        %v287 = vld [vmem:[%s1 + $0x4] sm:$0xf]
        %v288 = vld [vmem:[%s1 + $0x8] sm:$0xf]
        %v289 = vld [vmem:[%s1 + $0xc] sm:$0xf]
        %v290 = vld [vmem:[%s1 + $0x10] sm:$0xf]
        %v291 = vld [vmem:[%s1 + $0x14] sm:$0xf]
        %v292 = vld [vmem:[%s1 + $0x18] sm:$0xf]
        %v293 = vld [vmem:[%s1 + $0x1c] sm:$0xf]
        %v294 = vld [vmem:[%s1 + $0x20] sm:$0xf]
        %v295 = vld [vmem:[%s1 + $0x24] sm:$0xf]
        %v296 = vld [vmem:[%s1 + $0x28] sm:$0xf]
        %v297 = vld [vmem:[%s1 + $0x2c] sm:$0xf]
        %v298 = vld [vmem:[%s1 + $0x30] sm:$0xf]
        %v299 = vld [vmem:[%s1 + $0x34] sm:$0xf]
        %v300 = vld [vmem:[%s1 + $0x38] sm:$0xf]
        %v301 = vld [vmem:[%s1 + $0x3c] sm:$0xf]
        %v302 = vld [vmem:[%s1 + $0x40] sm:$0xf]
        %v303 = vld [vmem:[%s1 + $0x44] sm:$0xf]
        %v304 = vld [vmem:[%s1 + $0x48] sm:$0x7]
        %v305 = vld [vmem:[%s2] sm:$0x1]
        %v307 = vlaneseq
        %v308 = vshrl.u32 %v307, 7
        %v309 = vsub.s32 0, %v308
        %v310 = vrot.slane %v305, %v309
        %v328 = vunpack.c.l.b16 %v270
        %v329 = vunpack.c.h.b16 %v270
        %v330 = vunpack.c.l.b16 %v271
        %v331 = vunpack.c.h.b16 %v271
        %v332 = vunpack.c.l.b16 %v272
        %v333 = vunpack.c.h.b16 %v272
        %v334 = vunpack.c.l.b16 %v273
        %v335 = vunpack.c.h.b16 %v273
        %v336 = vunpack.c.l.b16 %v274
        %v337 = vunpack.c.h.b16 %v274
        %v338 = vunpack.c.l.b16 %v275
        %v339 = vunpack.c.h.b16 %v275
        %v340 = vunpack.c.l.b16 %v276
        %v341 = vunpack.c.h.b16 %v276
        %v342 = vunpack.c.l.b16 %v277
        %v343 = vunpack.c.h.b16 %v277
        %v344 = vunpack.c.l.b16 %v278
        %v345 = vunpack.c.h.b16 %v278
        %v346 = vunpack.c.l.b16 %v279
        %v347 = vunpack.c.h.b16 %v279
        %v348 = vunpack.c.l.b16 %v280
        %v349 = vunpack.c.h.b16 %v280
        %v350 = vunpack.c.l.b16 %v281
        %v351 = vunpack.c.h.b16 %v281
        %v352 = vunpack.c.l.b16 %v282
        %v353 = vunpack.c.h.b16 %v282
        %v354 = vunpack.c.l.b16 %v283
        %v355 = vunpack.c.h.b16 %v283
        %v356 = vunpack.c.l.b16 %v284
        %v357 = vunpack.c.h.b16 %v284
        %v358 = vunpack.c.l.b16 %v285
        %v359 = vunpack.c.h.b16 %v285
        %v360 = vpack.c.b16 %v330, %v328
        %v361 = vpack.c.b16 %v331, %v329
        %v362 = vpack.c.b16 %v334, %v332
        %v363 = vpack.c.b16 %v335, %v333
        %v364 = vpack.c.b16 %v338, %v336
        %v365 = vpack.c.b16 %v339, %v337
        %v366 = vpack.c.b16 %v342, %v340
        %v367 = vpack.c.b16 %v343, %v341
        %v368 = vpack.c.b16 %v346, %v344
        %v369 = vpack.c.b16 %v347, %v345
        %v370 = vpack.c.b16 %v350, %v348
        %v371 = vpack.c.b16 %v351, %v349
        %v372 = vpack.c.b16 %v354, %v352
        %v373 = vpack.c.b16 %v355, %v353
        %v374 = vpack.c.b16 %v358, %v356
        %v375 = vpack.c.b16 %v359, %v357
        %v403 = vunpack.c.l.b16 %v286
        %v404 = vunpack.c.l.b16 %v287
        %v405 = vunpack.c.l.b16 %v288
        %v406 = vunpack.c.l.b16 %v289
        %v407 = vunpack.c.l.b16 %v290
        %v408 = vunpack.c.l.b16 %v291
        %v409 = vunpack.c.l.b16 %v292
        %v410 = vunpack.c.l.b16 %v293
        %v411 = vunpack.c.l.b16 %v294
        %v412 = vunpack.c.l.b16 %v295
        %v413 = vunpack.c.l.b16 %v296
        %v414 = vunpack.c.l.b16 %v297
        %v415 = vunpack.c.l.b16 %v298
        %v416 = vunpack.c.l.b16 %v299
        %v417 = vunpack.c.l.b16 %v300
        %v418 = vunpack.c.l.b16 %v301
        %v419 = vunpack.c.l.b16 %v302
        %v420 = vunpack.c.l.b16 %v303
        %v421 = vunpack.c.l.b16 %v304
        %v422 = vpack.c.b16 %v404, %v403
        %v423 = vpack.c.b16 %v406, %v405
        %v424 = vpack.c.b16 %v408, %v407
        %v425 = vpack.c.b16 %v410, %v409
        %v426 = vpack.c.b16 %v412, %v411
        %v427 = vpack.c.b16 %v414, %v413
        %v428 = vpack.c.b16 %v416, %v415
        %v429 = vpack.c.b16 %v418, %v417
        %v430 = vpack.c.b16 %v420, %v419
        %v431 = vpack.c.b16 %v421, %v421
        %vm441 = vcmask 179200
        %v443 = vsel %vm441, %v361, 0
        %v446 = vsel %vm441, %v363, 0
        %v449 = vsel %vm441, %v365, 0
        %v452 = vsel %vm441, %v367, 0
        %v455 = vsel %vm441, %v369, 0
        %v458 = vsel %vm441, %v371, 0
        %v461 = vsel %vm441, %v373, 0
        %v464 = vsel %vm441, %v375, 0
        %vm466 = vcmask 1042432
        %v468 = vsel %vm466, %v431, 0
        %470 = vmatprep.subr.bf16.mxu0 0
        %471 = vmatpush1.bf16.msra.mxu0 %v422
        %472 = vmatprep.subr.bf16.mxu0 0
        %473 = vmatpush1.bf16.msra.mxu0 %v423
        %474 = vmatprep.subr.bf16.mxu0 0
        %475 = vmatpush1.bf16.msra.mxu0 %v424
        %476 = vmatprep.subr.bf16.mxu0 0
        %477 = vmatpush1.bf16.msra.mxu0 %v425
        %478 = vmatprep.subr.bf16.mxu0 0
        %479 = vmatpush1.bf16.msra.mxu0 %v426
        %480 = vmatprep.subr.bf16.mxu0 0
        %481 = vmatpush1.bf16.msra.mxu0 %v427
        %482 = vmatprep.subr.bf16.mxu0 0
        %483 = vmatpush1.bf16.msra.mxu0 %v428
        %484 = vmatprep.subr.bf16.mxu0 0
        %485 = vmatpush1.bf16.msra.mxu0 %v429
        %486 = vmatprep.subr.bf16.mxu0 0
        %487 = vmatpush1.bf16.msra.mxu0 %v430
        %488 = vmatprep.subr.bf16.mxu0 0
        %489 = vmatpush1.bf16.msra.mxu0 %v468
        %490 = vmatprep.subr.bf16.mxu0 0
        %491 = vmatpush1.bf16.msra.mxu0 0
        %492 = vmatprep.subr.bf16.mxu0 0
        %493 = vmatpush1.bf16.msra.mxu0 0
        %494 = vmatprep.subr.bf16.mxu0 0
        %495 = vmatpush1.bf16.msra.mxu0 0
        %496 = vmatprep.subr.bf16.mxu0 0
        %497 = vmatpush1.bf16.msra.mxu0 0
        %498 = vmatprep.subr.bf16.mxu0 0
        %499 = vmatpush1.bf16.msra.mxu0 0
        %500 = vmatprep.subr.bf16.mxu0 0
        %501 = vmatpush1.bf16.msra.mxu0 0
        %502 = vmatprep.mubr.bf16.mxu0 %v443
        %503 = vmatmul.mubr.bf16.gmra.mrb[0].mxu0 %v360
        %v504 = vpop.f32.mrb[0].mxu0
        %v505 = vadd.f32 %v310, %v504
        %v506 = vpop.f32.mrb[0].mxu0
        %v507 = vpop.f32.mrb[0].mxu0
        %v508 = vadd.f32 %v310, %v507
        %v509 = vpop.f32.mrb[0].mxu0
        %510 = vmatprep.mubr.bf16.mxu0 %v446
        %511 = vmatmul.mubr.bf16.gmra.mrb[0].mxu0 %v362
        %v512 = vpop.f32.mrb[0].mxu0
        %v513 = vadd.f32 %v310, %v512
        %v514 = vpop.f32.mrb[0].mxu0
        %v515 = vpop.f32.mrb[0].mxu0
        %v516 = vadd.f32 %v310, %v515
        %v517 = vpop.f32.mrb[0].mxu0
        %518 = vmatprep.mubr.bf16.mxu0 %v449
        %519 = vmatmul.mubr.bf16.gmra.mrb[0].mxu0 %v364
        %v520 = vpop.f32.mrb[0].mxu0
        %v521 = vadd.f32 %v310, %v520
        %v522 = vpop.f32.mrb[0].mxu0
        %v523 = vpop.f32.mrb[0].mxu0
        %v524 = vadd.f32 %v310, %v523
        %v525 = vpop.f32.mrb[0].mxu0
        %526 = vmatprep.mubr.bf16.mxu0 %v452
        %527 = vmatmul.mubr.bf16.gmra.mrb[0].mxu0 %v366
        %v528 = vpop.f32.mrb[0].mxu0
        %v529 = vadd.f32 %v310, %v528
        %v530 = vpop.f32.mrb[0].mxu0
        %v531 = vpop.f32.mrb[0].mxu0
        %v532 = vadd.f32 %v310, %v531
        %v533 = vpop.f32.mrb[0].mxu0
        %534 = vmatprep.mubr.bf16.mxu0 %v455
        %535 = vmatmul.mubr.bf16.gmra.mrb[0].mxu0 %v368
        %v536 = vpop.f32.mrb[0].mxu0
        %v537 = vadd.f32 %v310, %v536
        %v538 = vpop.f32.mrb[0].mxu0
        %v539 = vpop.f32.mrb[0].mxu0
        %v540 = vadd.f32 %v310, %v539
        %v541 = vpop.f32.mrb[0].mxu0
        %542 = vmatprep.mubr.bf16.mxu0 %v458
        %543 = vmatmul.mubr.bf16.gmra.mrb[0].mxu0 %v370
        %v544 = vpop.f32.mrb[0].mxu0
        %v545 = vadd.f32 %v310, %v544
        %v546 = vpop.f32.mrb[0].mxu0
        %v547 = vpop.f32.mrb[0].mxu0
        %v548 = vadd.f32 %v310, %v547
        %v549 = vpop.f32.mrb[0].mxu0
        %550 = vmatprep.mubr.bf16.mxu0 %v461
        %551 = vmatmul.mubr.bf16.gmra.mrb[0].mxu0 %v372
        %v552 = vpop.f32.mrb[0].mxu0
        %v553 = vadd.f32 %v310, %v552
        %v554 = vpop.f32.mrb[0].mxu0
        %v555 = vpop.f32.mrb[0].mxu0
        %v556 = vadd.f32 %v310, %v555
        %v557 = vpop.f32.mrb[0].mxu0
        %558 = vmatprep.mubr.bf16.mxu0 %v464
        %559 = vmatmul.mubr.bf16.gmra.mrb[0].mxu0 %v374
        %v560 = vpop.f32.mrb[0].mxu0
        %v561 = vadd.f32 %v310, %v560
        %v562 = vpop.f32.mrb[0].mxu0
        %v563 = vpop.f32.mrb[0].mxu0
        %v564 = vadd.f32 %v310, %v563
        %v565 = vpop.f32.mrb[0].mxu0
        %566 = vdwg.mxu0
        %v567 = vmax.f32 %v505, 0.0
        %v568 = vmax.f32 %v508, 0.0
        %v569 = vmax.f32 %v513, 0.0
        %v570 = vmax.f32 %v516, 0.0
        %v571 = vmax.f32 %v521, 0.0
        %v572 = vmax.f32 %v524, 0.0
        %v573 = vmax.f32 %v529, 0.0
        %v574 = vmax.f32 %v532, 0.0
        %v575 = vmax.f32 %v537, 0.0
        %v576 = vmax.f32 %v540, 0.0
        %v577 = vmax.f32 %v545, 0.0
        %v578 = vmax.f32 %v548, 0.0
        %v579 = vmax.f32 %v553, 0.0
        %v580 = vmax.f32 %v556, 0.0
        %v581 = vmax.f32 %v561, 0.0
        %v582 = vmax.f32 %v564, 0.0
        %v583 = vadd.f32 %v567, %v571
        %v584 = vadd.f32 %v568, %v572
        %v585 = vadd.f32 %v569, %v573
        %v586 = vadd.f32 %v570, %v574
        %v587 = vadd.f32 %v583, %v575
        %v588 = vadd.f32 %v584, %v576
        %v589 = vadd.f32 %v585, %v577
        %v590 = vadd.f32 %v586, %v578
        %v591 = vadd.f32 %v587, %v579
        %v592 = vadd.f32 %v588, %v580
        %v593 = vadd.f32 %v589, %v581
        %v594 = vadd.f32 %v590, %v582
        %v595 = vmul.f32 %v591, 0.25
        %v596 = vmul.f32 %v592, 0.25
        %v597 = vmul.f32 %v593, 0.25
        %v598 = vmul.f32 %v594, 0.25
        %v599 = vpack.c.bf16 %v596, %v595
        %v600 = vpack.c.bf16 %v598, %v597
        %v603 = vunpack.c.l.b16 %v599
        %v604 = vunpack.c.h.b16 %v599
        %v605 = vunpack.c.l.b16 %v600
        %v606 = vunpack.c.h.b16 %v600
        %v607 = vpack.c.b16 %v603, %v603
        %v608 = vpack.c.b16 %v604, %v604
        %v609 = vpack.c.b16 %v605, %v605
        %v610 = vpack.c.b16 %v606, %v606
        %615 = vst [vmem:[%s267] sm:$0xf] %v607
        %616 = vst [vmem:[%s267 + $0x4] sm:$0xf] %v608
        %617 = vst [vmem:[%s267 + $0x8] sm:$0xf] %v609
        %618 = vst [vmem:[%s267 + $0xc] sm:$0xf] %v610
        %s619 = smul.u32 4, %s14
        %p620 = scmp.lt.s32.totalorder %s619, 7
        %s621 = scalar_select %p620, %s619, 7
        %s622 = smul.addr %s621, 4
        %s623 = scalar_lea.vmem %s3, %s622
        // Predicated region
        $region71: #{forward.4} parent=65 // pred_check
          %p624 = pneg %p100
        $region72: #{forward.4} parent=65 // pred_check_branch
          %626 = sbr.rel (%p624) target = $region74
        $region73: #{forward.4} parent=65 // pred_region
          %s627 = smul.u32 4, %s14
        $region74: #{forward.4} parent=65 // pred_fallthru
          _
      $region66: #{forward.4} parent=5 // pred_fallthru
        _
      %p628 = scmp.le.s32.totalorder 2, %s9
      // Predicated region
      $region75: #{forward.4} parent=5 // pred_check
        %p629 = pneg %p628
      $region76: #{forward.4} parent=5 // pred_check_branch
        %631 = sbr.rel (%p629) target = $region78
      $region77: #{forward.4} parent=5 // pred_region
        %s632 = ssub.s32 %s9, 2
        // Predicated region
        $region79: #{forward.4} parent=77 // pred_check
          %p633 = pneg %p106
        $region80: #{forward.4} parent=77 // pred_check_branch
          %635 = sbr.rel (%p633) target = $region82
        $region81: #{forward.4} parent=77 // pred_region
          %s636 = smul.u32 4, %s15
          %p637 = scmp.lt.s32.totalorder %s636, 7
          %s638 = scalar_select %p637, %s636, 7
          %s639 = smul.addr %s638, 4
          %s640 = scalar_lea.vmem %s3, %s639
        $region82: #{forward.4} parent=77 // pred_fallthru
          _
      $region78: #{forward.4} parent=5 // pred_fallthru
        _
    $region6: #{forward.4} parent=1 // loop_footer
      %s13 = sadd.s32 1, %s9
    $region7: #{forward.4} parent=1 // loop_footer_branch
      %8 = sbr.rel target = $region3
    $region8: #{forward.4} parent=1 // loop_exit
      _

// kernel: forward.5
$region0: #{forward.5}
  #allocation0 [shape = 'u32[]', space=smem, size = 0x4, offset = 0x4, fixed_abs, tag = 'smem constant byte address 0x4 - core index']
  #allocation1 [shape = 'u32[144,128]{1,0:T(1,128)}', space=vmem, size = 0x12000, scoped, tag = 'internal scratch']
  %s0 = inlined_call_operand.vmem [shape: bf16[16,400], index: 0, kind: input, shape index: {}]
  %s1 = inlined_call_operand.vmem [shape: bf16[400,128], index: 1, kind: input, shape index: {}]
  %s2 = inlined_call_operand.vmem [shape: f32[1,128], index: 2, kind: input, shape index: {}]
  %s3 = inlined_call_operand.vmem [shape: bf16[128,128], index: 3, kind: input, shape index: {}]
  %s4 = inlined_call_operand.vmem [shape: f32[1,128], index: 4, kind: input, shape index: {}]
  %s5 = inlined_call_operand.vmem [shape: bf16[128,128], index: 5, kind: input, shape index: {}]
  %s6 = inlined_call_operand.vmem [shape: f32[1,128], index: 6, kind: input, shape index: {}]
  %s7 = inlined_call_operand.vmem [shape: f32[16,128], index: 7, kind: output, shape index: {}]
  %s8 = sld [smem:[#allocation0]]
  $region38: #{forward.5} parent=0
    _
  %s10 = ssub.s32 1, %s8
  %s11 = scalar_select 0, %s10, %s8
  // Predicated region
  $region2: #{forward.5} parent=0 // pred_check
    _
  $region3: #{forward.5} parent=0 // pred_check_branch
    %13 = sbr.rel (0) target = $region5
  $region4: #{forward.5} parent=0 // pred_region
    _
  $region5: #{forward.5} parent=0 // pred_fallthru
    _
  // Predicated region
  $region6: #{forward.5} parent=0 // pred_check
    _
  $region7: #{forward.5} parent=0 // pred_check_branch
    %15 = sbr.rel (0) target = $region9
  $region8: #{forward.5} parent=0 // pred_region
    _
  $region9: #{forward.5} parent=0 // pred_fallthru
    _
  // Predicated region
  $region10: #{forward.5} parent=0 // pred_check
    _
  $region11: #{forward.5} parent=0 // pred_check_branch
    %17 = sbr.rel (0) target = $region13
  $region12: #{forward.5} parent=0 // pred_region
    _
  $region13: #{forward.5} parent=0 // pred_fallthru
    _
  // Predicated region
  $region14: #{forward.5} parent=0 // pred_check
    _
  $region15: #{forward.5} parent=0 // pred_check_branch
    %19 = sbr.rel (0) target = $region17
  $region16: #{forward.5} parent=0 // pred_region
    _
  $region17: #{forward.5} parent=0 // pred_fallthru
    _
  // Predicated region
  $region18: #{forward.5} parent=0 // pred_check
    _
  $region19: #{forward.5} parent=0 // pred_check_branch
    %21 = sbr.rel (0) target = $region21
  $region20: #{forward.5} parent=0 // pred_region
    _
  $region21: #{forward.5} parent=0 // pred_fallthru
    _
  // Predicated region
  $region22: #{forward.5} parent=0 // pred_check
    _
  $region23: #{forward.5} parent=0 // pred_check_branch
    %23 = sbr.rel (0) target = $region25
  $region24: #{forward.5} parent=0 // pred_region
    _
  $region25: #{forward.5} parent=0 // pred_fallthru
    _
  // Predicated region
  $region26: #{forward.5} parent=0 // pred_check
    _
  $region27: #{forward.5} parent=0 // pred_check_branch
    %25 = sbr.rel (0) target = $region29
  $region28: #{forward.5} parent=0 // pred_region
    _
  $region29: #{forward.5} parent=0 // pred_fallthru
    _
  %v27 = vld [vmem:[%s0] sm:$0xff]
  %v28 = vld [vmem:[%s0 + $0x8] sm:$0xff]
  %v29 = vld [vmem:[%s0 + $0x10] sm:$0xff]
  %v30 = vld [vmem:[%s0 + $0x18] sm:$0xff]
  %v31 = vld [vmem:[%s1] sm:$0xf]
  %v32 = vld [vmem:[%s1 + $0x4] sm:$0xf]
  %v33 = vld [vmem:[%s1 + $0x8] sm:$0xf]
  %v34 = vld [vmem:[%s1 + $0xc] sm:$0xf]
  %v35 = vld [vmem:[%s1 + $0x10] sm:$0xf]
  %v36 = vld [vmem:[%s1 + $0x14] sm:$0xf]
  %v37 = vld [vmem:[%s1 + $0x18] sm:$0xf]
  %v38 = vld [vmem:[%s1 + $0x1c] sm:$0xf]
  %v39 = vld [vmem:[%s1 + $0x20] sm:$0xf]
  %v40 = vld [vmem:[%s1 + $0x24] sm:$0xf]
  %v41 = vld [vmem:[%s1 + $0x28] sm:$0xf]
  %v42 = vld [vmem:[%s1 + $0x2c] sm:$0xf]
  %v43 = vld [vmem:[%s1 + $0x30] sm:$0xf]
  %v44 = vld [vmem:[%s1 + $0x34] sm:$0xf]
  %v45 = vld [vmem:[%s1 + $0x38] sm:$0xf]
  %v46 = vld [vmem:[%s1 + $0x3c] sm:$0xf]
  %v47 = vld [vmem:[%s1 + $0x40] sm:$0xf]
  %v48 = vld [vmem:[%s1 + $0x44] sm:$0xf]
  %v49 = vld [vmem:[%s1 + $0x48] sm:$0xf]
  %v50 = vld [vmem:[%s1 + $0x4c] sm:$0xf]
  %v51 = vld [vmem:[%s1 + $0x50] sm:$0xf]
  %v52 = vld [vmem:[%s1 + $0x54] sm:$0xf]
  %v53 = vld [vmem:[%s1 + $0x58] sm:$0xf]
  %v54 = vld [vmem:[%s1 + $0x5c] sm:$0xf]
  %v55 = vld [vmem:[%s1 + $0x60] sm:$0xf]
  %v56 = vld [vmem:[%s1 + $0x64] sm:$0xf]
  %v57 = vld [vmem:[%s1 + $0x68] sm:$0xf]
  %v58 = vld [vmem:[%s1 + $0x6c] sm:$0xf]
  %v59 = vld [vmem:[%s1 + $0x70] sm:$0xf]
  %v60 = vld [vmem:[%s1 + $0x74] sm:$0xf]
  %v61 = vld [vmem:[%s1 + $0x78] sm:$0xf]
  %v62 = vld [vmem:[%s1 + $0x7c] sm:$0xf]
  %v63 = vld [vmem:[%s1 + $0x80] sm:$0xf]
  %v64 = vld [vmem:[%s1 + $0x84] sm:$0xf]
  %v65 = vld [vmem:[%s1 + $0x88] sm:$0xf]
  %v66 = vld [vmem:[%s1 + $0x8c] sm:$0xf]
  %v67 = vld [vmem:[%s1 + $0x90] sm:$0xf]
  %v68 = vld [vmem:[%s1 + $0x94] sm:$0xf]
  %v69 = vld [vmem:[%s1 + $0x98] sm:$0xf]
  %v70 = vld [vmem:[%s1 + $0x9c] sm:$0xf]
  %v71 = vld [vmem:[%s1 + $0xa0] sm:$0xf]
  %v72 = vld [vmem:[%s1 + $0xa4] sm:$0xf]
  %v73 = vld [vmem:[%s1 + $0xa8] sm:$0xf]
  %v74 = vld [vmem:[%s1 + $0xac] sm:$0xf]
  %v75 = vld [vmem:[%s1 + $0xb0] sm:$0xf]
  %v76 = vld [vmem:[%s1 + $0xb4] sm:$0xf]
  %v77 = vld [vmem:[%s1 + $0xb8] sm:$0xf]
  %v78 = vld [vmem:[%s1 + $0xbc] sm:$0xf]
  %v79 = vld [vmem:[%s1 + $0xc0] sm:$0xf]
  %v80 = vld [vmem:[%s1 + $0xc4] sm:$0xf]
  %v81 = vld [vmem:[%s2] sm:$0x1]
  %v83 = vlaneseq
  %v84 = vshrl.u32 %v83, 7
  %v85 = vsub.s32 0, %v84
  %v86 = vrot.slane %v81, %v85
  %v92 = vunpack.c.l.b16 %v27
  %v93 = vunpack.c.h.b16 %v27
  %v94 = vunpack.c.l.b16 %v28
  %v95 = vunpack.c.h.b16 %v28
  %v96 = vunpack.c.l.b16 %v29
  %v97 = vunpack.c.h.b16 %v29
  %v98 = vunpack.c.l.b16 %v30
  %v99 = vunpack.c.h.b16 %v30
  %v100 = vpack.c.b16 %v96, %v92
  %v101 = vpack.c.b16 %v97, %v93
  %v102 = vpack.c.b16 %v98, %v94
  %v103 = vpack.c.b16 %v99, %v95
  %v157 = vunpack.c.l.b16 %v31
  %v158 = vunpack.c.l.b16 %v32
  %v159 = vunpack.c.l.b16 %v33
  %v160 = vunpack.c.l.b16 %v34
  %v161 = vunpack.c.l.b16 %v35
  %v162 = vunpack.c.l.b16 %v36
  %v163 = vunpack.c.l.b16 %v37
  %v164 = vunpack.c.l.b16 %v38
  %v165 = vunpack.c.l.b16 %v39
  %v166 = vunpack.c.l.b16 %v40
  %v167 = vunpack.c.l.b16 %v41
  %v168 = vunpack.c.l.b16 %v42
  %v169 = vunpack.c.l.b16 %v43
  %v170 = vunpack.c.l.b16 %v44
  %v171 = vunpack.c.l.b16 %v45
  %v172 = vunpack.c.l.b16 %v46
  %v173 = vunpack.c.l.b16 %v47
  %v174 = vunpack.c.l.b16 %v48
  %v175 = vunpack.c.l.b16 %v49
  %v176 = vunpack.c.l.b16 %v50
  %v177 = vunpack.c.l.b16 %v51
  %v178 = vunpack.c.l.b16 %v52
  %v179 = vunpack.c.l.b16 %v53
  %v180 = vunpack.c.l.b16 %v54
  %v181 = vunpack.c.l.b16 %v55
  %v182 = vunpack.c.l.b16 %v56
  %v183 = vunpack.c.l.b16 %v57
  %v184 = vunpack.c.l.b16 %v58
  %v185 = vunpack.c.l.b16 %v59
  %v186 = vunpack.c.l.b16 %v60
  %v187 = vunpack.c.l.b16 %v61
  %v188 = vunpack.c.l.b16 %v62
  %v189 = vunpack.c.l.b16 %v63
  %v190 = vunpack.c.l.b16 %v64
  %v191 = vunpack.c.l.b16 %v65
  %v192 = vunpack.c.l.b16 %v66
  %v193 = vunpack.c.l.b16 %v67
  %v194 = vunpack.c.l.b16 %v68
  %v195 = vunpack.c.l.b16 %v69
  %v196 = vunpack.c.l.b16 %v70
  %v197 = vunpack.c.l.b16 %v71
  %v198 = vunpack.c.l.b16 %v72
  %v199 = vunpack.c.l.b16 %v73
  %v200 = vunpack.c.l.b16 %v74
  %v201 = vunpack.c.l.b16 %v75
  %v202 = vunpack.c.l.b16 %v76
  %v203 = vunpack.c.l.b16 %v77
  %v204 = vunpack.c.l.b16 %v78
  %v205 = vunpack.c.l.b16 %v79
  %v206 = vunpack.c.l.b16 %v80
  %v207 = vpack.c.b16 %v158, %v157
  %v208 = vpack.c.b16 %v160, %v159
  %v209 = vpack.c.b16 %v162, %v161
  %v210 = vpack.c.b16 %v164, %v163
  %v211 = vpack.c.b16 %v166, %v165
  %v212 = vpack.c.b16 %v168, %v167
  %v213 = vpack.c.b16 %v170, %v169
  %v214 = vpack.c.b16 %v172, %v171
  %v215 = vpack.c.b16 %v174, %v173
  %v216 = vpack.c.b16 %v176, %v175
  %v217 = vpack.c.b16 %v178, %v177
  %v218 = vpack.c.b16 %v180, %v179
  %v219 = vpack.c.b16 %v182, %v181
  %v220 = vpack.c.b16 %v184, %v183
  %v221 = vpack.c.b16 %v186, %v185
  %v222 = vpack.c.b16 %v188, %v187
  %v223 = vpack.c.b16 %v190, %v189
  %v224 = vpack.c.b16 %v192, %v191
  %v225 = vpack.c.b16 %v194, %v193
  %v226 = vpack.c.b16 %v196, %v195
  %v227 = vpack.c.b16 %v198, %v197
  %v228 = vpack.c.b16 %v200, %v199
  %v229 = vpack.c.b16 %v202, %v201
  %v230 = vpack.c.b16 %v204, %v203
  %v231 = vpack.c.b16 %v206, %v205
  %vm257 = vcmask 130048
  %v259 = vsel %vm257, %v103, 0
  %261 = vmatprep.subr.bf16.mxu0 0
  %262 = vmatpush1.bf16.msra.mxu0 %v207
  %263 = vmatprep.subr.bf16.mxu0 0
  %264 = vmatpush1.bf16.msra.mxu0 %v208
  %265 = vmatprep.subr.bf16.mxu0 0
  %266 = vmatpush1.bf16.msra.mxu0 %v209
  %267 = vmatprep.subr.bf16.mxu0 0
  %268 = vmatpush1.bf16.msra.mxu0 %v210
  %269 = vmatprep.subr.bf16.mxu0 0
  %270 = vmatpush1.bf16.msra.mxu0 %v211
  %271 = vmatprep.subr.bf16.mxu0 0
  %272 = vmatpush1.bf16.msra.mxu0 %v212
  %273 = vmatprep.subr.bf16.mxu0 0
  %274 = vmatpush1.bf16.msra.mxu0 %v213
  %275 = vmatprep.subr.bf16.mxu0 0
  %276 = vmatpush1.bf16.msra.mxu0 %v214
  %277 = vmatprep.subr.bf16.mxu0 0
  %278 = vmatpush1.bf16.msra.mxu0 %v215
  %279 = vmatprep.subr.bf16.mxu0 0
  %280 = vmatpush1.bf16.msra.mxu0 %v216
  %281 = vmatprep.subr.bf16.mxu0 0
  %282 = vmatpush1.bf16.msra.mxu0 %v217
  %283 = vmatprep.subr.bf16.mxu0 0
  %284 = vmatpush1.bf16.msra.mxu0 %v218
  %285 = vmatprep.subr.bf16.mxu0 0
  %286 = vmatpush1.bf16.msra.mxu0 %v219
  %287 = vmatprep.subr.bf16.mxu0 0
  %288 = vmatpush1.bf16.msra.mxu0 %v220
  %289 = vmatprep.subr.bf16.mxu0 0
  %290 = vmatpush1.bf16.msra.mxu0 %v221
  %291 = vmatprep.subr.bf16.mxu0 0
  %292 = vmatpush1.bf16.msra.mxu0 %v222
  %293 = vmatprep.mubr.bf16.mxu0 %v101
  %294 = vmatmul.mubr.bf16.gmra.mrb[0].mxu0 %v100
  %v295 = vpop.f32.mrb[0].mxu0
  %v296 = vadd.f32 %v86, %v295
  %v297 = vpop.f32.mrb[0].mxu0
  %v298 = vpop.f32.mrb[0].mxu0
  %v299 = vadd.f32 %v86, %v298
  %v300 = vpop.f32.mrb[0].mxu0
  %301 = vdwg.mxu0
  %302 = vmatprep.subr.bf16.mxu0 0
  %303 = vmatpush1.bf16.msra.mxu0 %v223
  %304 = vmatprep.subr.bf16.mxu0 0
  %305 = vmatpush1.bf16.msra.mxu0 %v224
  %306 = vmatprep.subr.bf16.mxu0 0
  %307 = vmatpush1.bf16.msra.mxu0 %v225
  %308 = vmatprep.subr.bf16.mxu0 0
  %309 = vmatpush1.bf16.msra.mxu0 %v226
  %310 = vmatprep.subr.bf16.mxu0 0
  %311 = vmatpush1.bf16.msra.mxu0 %v227
  %312 = vmatprep.subr.bf16.mxu0 0
  %313 = vmatpush1.bf16.msra.mxu0 %v228
  %314 = vmatprep.subr.bf16.mxu0 0
  %315 = vmatpush1.bf16.msra.mxu0 %v229
  %316 = vmatprep.subr.bf16.mxu0 0
  %317 = vmatpush1.bf16.msra.mxu0 %v230
  %318 = vmatprep.subr.bf16.mxu0 0
  %319 = vmatpush1.bf16.msra.mxu0 %v231
  %320 = vmatprep.subr.bf16.mxu0 0
  %321 = vmatpush1.bf16.msra.mxu0 0
  %322 = vmatprep.subr.bf16.mxu0 0
  %323 = vmatpush1.bf16.msra.mxu0 0
  %324 = vmatprep.subr.bf16.mxu0 0
  %325 = vmatpush1.bf16.msra.mxu0 0
  %326 = vmatprep.subr.bf16.mxu0 0
  %327 = vmatpush1.bf16.msra.mxu0 0
  %328 = vmatprep.subr.bf16.mxu0 0
  %329 = vmatpush1.bf16.msra.mxu0 0
  %330 = vmatprep.subr.bf16.mxu0 0
  %331 = vmatpush1.bf16.msra.mxu0 0
  %332 = vmatprep.subr.bf16.mxu0 0
  %333 = vmatpush1.bf16.msra.mxu0 0
  %334 = vmatprep.mubr.bf16.mxu0 %v259
  %335 = vmatmul.mubr.bf16.gmra.mrb[0].mxu0 %v102
  %v336 = vpop.f32.mrb[0].mxu0
  %v337 = vadd.f32 %v296, %v336
  %v338 = vpop.f32.mrb[0].mxu0
  %v339 = vpop.f32.mrb[0].mxu0
  %v340 = vadd.f32 %v299, %v339
  %v341 = vpop.f32.mrb[0].mxu0
  %342 = vdwg.mxu0
  %v343 = vmax.f32 %v337, 0.0
  %v344 = vmax.f32 %v340, 0.0
  %v345 = vpack.c.bf16 %v344, %v343
  %v346 = vld [vmem:[%s3] sm:$0xf]
  %v347 = vld [vmem:[%s3 + $0x4] sm:$0xf]
  %v348 = vld [vmem:[%s3 + $0x8] sm:$0xf]
  %v349 = vld [vmem:[%s3 + $0xc] sm:$0xf]
  %v350 = vld [vmem:[%s3 + $0x10] sm:$0xf]
  %v351 = vld [vmem:[%s3 + $0x14] sm:$0xf]
  %v352 = vld [vmem:[%s3 + $0x18] sm:$0xf]
  %v353 = vld [vmem:[%s3 + $0x1c] sm:$0xf]
  %v354 = vld [vmem:[%s3 + $0x20] sm:$0xf]
  %v355 = vld [vmem:[%s3 + $0x24] sm:$0xf]
  %v356 = vld [vmem:[%s3 + $0x28] sm:$0xf]
  %v357 = vld [vmem:[%s3 + $0x2c] sm:$0xf]
  %v358 = vld [vmem:[%s3 + $0x30] sm:$0xf]
  %v359 = vld [vmem:[%s3 + $0x34] sm:$0xf]
  %v360 = vld [vmem:[%s3 + $0x38] sm:$0xf]
  %v361 = vld [vmem:[%s3 + $0x3c] sm:$0xf]
  %v362 = vld [vmem:[%s4] sm:$0x1]
  %v364 = vlaneseq
  %v365 = vshrl.u32 %v364, 7
  %v366 = vsub.s32 0, %v365
  %v367 = vrot.slane %v362, %v366
  %v385 = vunpack.c.l.b16 %v346
  %v386 = vunpack.c.l.b16 %v347
  %v387 = vunpack.c.l.b16 %v348
  %v388 = vunpack.c.l.b16 %v349
  %v389 = vunpack.c.l.b16 %v350
  %v390 = vunpack.c.l.b16 %v351
  %v391 = vunpack.c.l.b16 %v352
  %v392 = vunpack.c.l.b16 %v353
  %v393 = vunpack.c.l.b16 %v354
  %v394 = vunpack.c.l.b16 %v355
  %v395 = vunpack.c.l.b16 %v356
  %v396 = vunpack.c.l.b16 %v357
  %v397 = vunpack.c.l.b16 %v358
  %v398 = vunpack.c.l.b16 %v359
  %v399 = vunpack.c.l.b16 %v360
  %v400 = vunpack.c.l.b16 %v361
  %v401 = vpack.c.b16 %v386, %v385
  %v402 = vpack.c.b16 %v388, %v387
  %v403 = vpack.c.b16 %v390, %v389
  %v404 = vpack.c.b16 %v392, %v391
  %v405 = vpack.c.b16 %v394, %v393
  %v406 = vpack.c.b16 %v396, %v395
  %v407 = vpack.c.b16 %v398, %v397
  %v408 = vpack.c.b16 %v400, %v399
  %417 = vmatprep.subr.bf16.mxu0 0
  %418 = vmatpush1.bf16.msra.mxu0 %v401
  %419 = vmatprep.subr.bf16.mxu0 0
  %420 = vmatpush1.bf16.msra.mxu0 %v402
  %421 = vmatprep.subr.bf16.mxu0 0
  %422 = vmatpush1.bf16.msra.mxu0 %v403
  %423 = vmatprep.subr.bf16.mxu0 0
  %424 = vmatpush1.bf16.msra.mxu0 %v404
  %425 = vmatprep.subr.bf16.mxu0 0
  %426 = vmatpush1.bf16.msra.mxu0 %v405
  %427 = vmatprep.subr.bf16.mxu0 0
  %428 = vmatpush1.bf16.msra.mxu0 %v406
  %429 = vmatprep.subr.bf16.mxu0 0
  %430 = vmatpush1.bf16.msra.mxu0 %v407
  %431 = vmatprep.subr.bf16.mxu0 0
  %432 = vmatpush1.bf16.msra.mxu0 %v408
  %433 = vmatprep.subr.bf16.mxu0 0
  %434 = vmatpush1.bf16.msra.mxu0 0
  %435 = vmatprep.subr.bf16.mxu0 0
  %436 = vmatpush1.bf16.msra.mxu0 0
  %437 = vmatprep.subr.bf16.mxu0 0
  %438 = vmatpush1.bf16.msra.mxu0 0
  %439 = vmatprep.subr.bf16.mxu0 0
  %440 = vmatpush1.bf16.msra.mxu0 0
  %441 = vmatprep.subr.bf16.mxu0 0
  %442 = vmatpush1.bf16.msra.mxu0 0
  %443 = vmatprep.subr.bf16.mxu0 0
  %444 = vmatpush1.bf16.msra.mxu0 0
  %445 = vmatprep.subr.bf16.mxu0 0
  %446 = vmatpush1.bf16.msra.mxu0 0
  %447 = vmatprep.subr.bf16.mxu0 0
  %448 = vmatpush1.bf16.msra.mxu0 0
  %449 = vmatprep.mubr.bf16.mxu0 0
  %450 = vmatmul.mubr.bf16.gmra.mrb[0].mxu0 %v345
  %v451 = vpop.f32.mrb[0].mxu0
  %v452 = vadd.f32 %v367, %v451
  %v453 = vpop.f32.mrb[0].mxu0
  %v454 = vpop.f32.mrb[0].mxu0
  %v455 = vadd.f32 %v367, %v454
  %v456 = vpop.f32.mrb[0].mxu0
  %457 = vdwg.mxu0
  %v458 = vmax.f32 %v452, 0.0
  %v459 = vmax.f32 %v455, 0.0
  %v460 = vpack.c.bf16 %v459, %v458
  %v461 = vld [vmem:[%s5] sm:$0xf]
  %v462 = vld [vmem:[%s5 + $0x4] sm:$0xf]
  %v463 = vld [vmem:[%s5 + $0x8] sm:$0xf]
  %v464 = vld [vmem:[%s5 + $0xc] sm:$0xf]
  %v465 = vld [vmem:[%s5 + $0x10] sm:$0xf]
  %v466 = vld [vmem:[%s5 + $0x14] sm:$0xf]
  %v467 = vld [vmem:[%s5 + $0x18] sm:$0xf]
  %v468 = vld [vmem:[%s5 + $0x1c] sm:$0xf]
  %v469 = vld [vmem:[%s5 + $0x20] sm:$0xf]
  %v470 = vld [vmem:[%s5 + $0x24] sm:$0xf]
  %v471 = vld [vmem:[%s5 + $0x28] sm:$0xf]
  %v472 = vld [vmem:[%s5 + $0x2c] sm:$0xf]
  %v473 = vld [vmem:[%s5 + $0x30] sm:$0xf]
  %v474 = vld [vmem:[%s5 + $0x34] sm:$0xf]
  %v475 = vld [vmem:[%s5 + $0x38] sm:$0xf]
  %v476 = vld [vmem:[%s5 + $0x3c] sm:$0xf]
  %v477 = vld [vmem:[%s6] sm:$0x1]
  %v479 = vlaneseq
  %v480 = vshrl.u32 %v479, 7
  %v481 = vsub.s32 0, %v480
  %v482 = vrot.slane %v477, %v481
  %v500 = vunpack.c.l.b16 %v461
  %v501 = vunpack.c.l.b16 %v462
  %v502 = vunpack.c.l.b16 %v463
  %v503 = vunpack.c.l.b16 %v464
  %v504 = vunpack.c.l.b16 %v465
  %v505 = vunpack.c.l.b16 %v466
  %v506 = vunpack.c.l.b16 %v467
  %v507 = vunpack.c.l.b16 %v468
  %v508 = vunpack.c.l.b16 %v469
  %v509 = vunpack.c.l.b16 %v470
  %v510 = vunpack.c.l.b16 %v471
  %v511 = vunpack.c.l.b16 %v472
  %v512 = vunpack.c.l.b16 %v473
  %v513 = vunpack.c.l.b16 %v474
  %v514 = vunpack.c.l.b16 %v475
  %v515 = vunpack.c.l.b16 %v476
  %v516 = vpack.c.b16 %v501, %v500
  %v517 = vpack.c.b16 %v503, %v502
  %v518 = vpack.c.b16 %v505, %v504
  %v519 = vpack.c.b16 %v507, %v506
  %v520 = vpack.c.b16 %v509, %v508
  %v521 = vpack.c.b16 %v511, %v510
  %v522 = vpack.c.b16 %v513, %v512
  %v523 = vpack.c.b16 %v515, %v514
  %532 = vmatprep.subr.bf16.mxu0 0
  %533 = vmatpush1.bf16.msra.mxu0 %v516
  %534 = vmatprep.subr.bf16.mxu0 0
  %535 = vmatpush1.bf16.msra.mxu0 %v517
  %536 = vmatprep.subr.bf16.mxu0 0
  %537 = vmatpush1.bf16.msra.mxu0 %v518
  %538 = vmatprep.subr.bf16.mxu0 0
  %539 = vmatpush1.bf16.msra.mxu0 %v519
  %540 = vmatprep.subr.bf16.mxu0 0
  %541 = vmatpush1.bf16.msra.mxu0 %v520
  %542 = vmatprep.subr.bf16.mxu0 0
  %543 = vmatpush1.bf16.msra.mxu0 %v521
  %544 = vmatprep.subr.bf16.mxu0 0
  %545 = vmatpush1.bf16.msra.mxu0 %v522
  %546 = vmatprep.subr.bf16.mxu0 0
  %547 = vmatpush1.bf16.msra.mxu0 %v523
  %548 = vmatprep.subr.bf16.mxu0 0
  %549 = vmatpush1.bf16.msra.mxu0 0
  %550 = vmatprep.subr.bf16.mxu0 0
  %551 = vmatpush1.bf16.msra.mxu0 0
  %552 = vmatprep.subr.bf16.mxu0 0
  %553 = vmatpush1.bf16.msra.mxu0 0
  %554 = vmatprep.subr.bf16.mxu0 0
  %555 = vmatpush1.bf16.msra.mxu0 0
  %556 = vmatprep.subr.bf16.mxu0 0
  %557 = vmatpush1.bf16.msra.mxu0 0
  %558 = vmatprep.subr.bf16.mxu0 0
  %559 = vmatpush1.bf16.msra.mxu0 0
  %560 = vmatprep.subr.bf16.mxu0 0
  %561 = vmatpush1.bf16.msra.mxu0 0
  %562 = vmatprep.subr.bf16.mxu0 0
  %563 = vmatpush1.bf16.msra.mxu0 0
  %564 = vmatprep.mubr.bf16.mxu0 0
  %565 = vmatmul.mubr.bf16.gmra.mrb[0].mxu0 %v460
  %v566 = vpop.f32.mrb[0].mxu0
  %v567 = vadd.f32 %v482, %v566
  %v568 = vpop.f32.mrb[0].mxu0
  %v569 = vpop.f32.mrb[0].mxu0
  %v570 = vadd.f32 %v482, %v569
  %v571 = vpop.f32.mrb[0].mxu0
  %572 = vdwg.mxu0
  %573 = vst [vmem:[%s7] sm:$0xff] %v567
  %574 = vst [vmem:[%s7 + $0x8] sm:$0xff] %v570
  // Predicated region
  $region30: #{forward.5} parent=0 // pred_check
    _
  $region31: #{forward.5} parent=0 // pred_check_branch
    %576 = sbr.rel (0) target = $region33
  $region32: #{forward.5} parent=0 // pred_region
    _
  $region33: #{forward.5} parent=0 // pred_fallthru
    _
  // Predicated region
  $region34: #{forward.5} parent=0 // pred_check
    _
  $region35: #{forward.5} parent=0 // pred_check_branch
    %578 = sbr.rel (0) target = $region37
  $region36: #{forward.5} parent=0 // pred_region
    _
  $region37: #{forward.5} parent=0 // pred_fallthru
    _

</llo_original>
